<compile_context>
chip_gen: v6e
topology: v6e:2x2x1
jax: 0.10.0
libtpu: 0.0.40
codegen_flags: <defaults>
</compile_context>

<pallas_src>
import functools

import jax
import jax.numpy as jnp
from jax import lax
from jax.experimental import pallas as pl
from jax.experimental.pallas import tpu as pltpu

LANES = 128          # channel padding target (TPU lane width)
DEFAULT_TILE_H = 4   # output rows per grid step (small so the tiny test uses >1 tile)


def _round_up(x, m):
    return (x + m - 1) // m * m


def _pick_tile_h(h, target=DEFAULT_TILE_H):
    t = min(target, h)
    while h % t:
        t -= 1
    return t


def _leaky(x):
    return jnp.where(x >= 0.0, x, 0.1 * x)


# ----------------------------------------------------------------------------
# Head: ZeroPad2d([1,0,1,0]) + Conv2d(3x3, stride=2) + folded-BN bias + LeakyReLU
# ----------------------------------------------------------------------------
def _head_conv_kernel(xs_ref, w_ref, b_ref, o_ref):
    """Direct 3x3 / stride-2 conv on a space-to-depth input.

    xs_ref: (1, 4, Hh, Wh, Cin)  xs[0, 2*ph+pw, a, b, :] == x_padded[2a+ph, 2b+pw, :]
    w_ref : (3, 3, Cin, Cout)    BN scale already folded in
    b_ref : (1, Cout)
    o_ref : (1, TH, Wo, Cout)    output rows [t*TH, t*TH+TH)
    """
    TH, Wo, Cout = o_ref.shape[1], o_ref.shape[2], o_ref.shape[3]
    Cin = w_ref.shape[2]
    t = pl.program_id(1)
    r0 = pl.multiple_of(t * TH, TH)

    acc = jnp.zeros((TH * Wo, Cout), jnp.float32)
    for kh in range(3):
        ph, oh = kh % 2, kh // 2
        for kw in range(3):
            pw, ow = kw % 2, kw // 2
            tap = xs_ref[0, 2 * ph + pw, pl.ds(r0 + oh, TH), pl.ds(ow, Wo), :]
            acc = acc + jnp.dot(
                tap.reshape(TH * Wo, Cin).astype(jnp.float32),
                w_ref[kh, kw],
                preferred_element_type=jnp.float32,
            )
    y = _leaky(acc + b_ref[...])
    o_ref[...] = y.reshape(1, TH, Wo, Cout).astype(o_ref.dtype)


def head_conv(x, w, b, *, tile_h=DEFAULT_TILE_H):
    """x: (N,H,W,Cin) NHWC (lane-padded); w: (3,3,Cin,Cout); b: (1,Cout)."""
    N, H, W, Cin = x.shape
    Cout = w.shape[-1]
    Ho = (H + 1 - 3) // 2 + 1
    Wo = (W + 1 - 3) // 2 + 1
    Hh, Wh = Ho + 1, Wo + 1

    # Asymmetric ZeroPad2d (top=1, left=1) plus bottom/right zeros so the padded
    # extent is exactly (2*Hh, 2*Wh) for the space-to-depth reshape.  Done once,
    # on the (small) head input only.
    xp = jnp.pad(x, ((0, 0), (1, 2 * Hh - H - 1), (1, 2 * Wh - W - 1), (0, 0)))
    # Space-to-depth: xs[n, 2*ph+pw, a, b, :] = xp[n, 2a+ph, 2b+pw, :]
    xs = xp.reshape(N, Hh, 2, Wh, 2, Cin).transpose(0, 2, 4, 1, 3, 5)
    xs = xs.reshape(N, 4, Hh, Wh, Cin)

    th = _pick_tile_h(Ho, tile_h)
    grid = (N, Ho // th)

    flops = 2 * N * Ho * Wo * 9 * Cin * Cout
    bytes_accessed = 4 * (xs.size + w.size + b.size + N * Ho * Wo * Cout)

    return pl.pallas_call(
        _head_conv_kernel,
        out_shape=jax.ShapeDtypeStruct((N, Ho, Wo, Cout), x.dtype),
        grid=grid,
        in_specs=[
            pl.BlockSpec((1, 4, Hh, Wh, Cin), lambda n, t: (n, 0, 0, 0, 0)),
            pl.BlockSpec((3, 3, Cin, Cout), lambda n, t: (0, 0, 0, 0)),
            pl.BlockSpec((1, Cout), lambda n, t: (0, 0)),
        ],
        out_specs=pl.BlockSpec((1, th, Wo, Cout), lambda n, t: (n, t, 0, 0)),
        compiler_params=pltpu.CompilerParams(
            dimension_semantics=("parallel", "parallel")),
        cost_estimate=pl.CostEstimate(
            flops=flops, transcendentals=0, bytes_accessed=bytes_accessed),
    )(xs, w, b)


# ----------------------------------------------------------------------------
# Fused ResUnit: 1x1 conv+LReLU -> 3x3 conv(pad 1)+LReLU -> residual add
# ----------------------------------------------------------------------------
def _res_unit_kernel(x_ref, w1_ref, b1_ref, w2_ref, b2_ref, o_ref):
    """x_ref: (1,H,W,C) full image (re-used across row tiles);
    w1_ref: (C,Cmid); b1_ref: (1,Cmid); w2_ref: (3,3,Cmid,C); b2_ref: (1,C);
    o_ref: (1,TH,W,C) output rows [t*TH, t*TH+TH)."""
    H, W, C = x_ref.shape[1], x_ref.shape[2], x_ref.shape[3]
    Cmid = w1_ref.shape[1]
    TH = o_ref.shape[1]
    t = pl.program_id(1)
    r0 = pl.multiple_of(t * TH, TH)

    # ---- input slab with a one-row halo (clamped loads; masked below) ----
    body = x_ref[0, pl.ds(r0, TH)]                                 # (TH, W, C)
    top = x_ref[0, pl.ds(jnp.clip(r0 - 1, 0, H - 1), 1)]           # (1, W, C)
    bot = x_ref[0, pl.ds(jnp.clip(r0 + TH, 0, H - 1), 1)]          # (1, W, C)
    slab = jnp.concatenate([top, body, bot], axis=0)               # (TH+2, W, C)

    # ---- 1x1 conv + bias + LeakyReLU as one MXU matmul over all halo rows ----
    mid = jnp.dot(slab.reshape((TH + 2) * W, C).astype(jnp.float32),
                  w1_ref[...], preferred_element_type=jnp.float32)
    mid = _leaky(mid + b1_ref[...]).reshape(TH + 2, W, Cmid)

    # Halo rows outside the image must be *zero* (the 3x3 zero-pads its input,
    # not LeakyReLU(bias)), so mask by global row index.
    row_g = r0 - 1 + lax.broadcasted_iota(jnp.int32, (TH + 2, 1, 1), 0)
    mid = jnp.where(jnp.logical_and(row_g >= 0, row_g < H), mid, 0.0)

    # Zero-pad the W axis (left/right) for the 3x3 taps.
    zcol = jnp.zeros((TH + 2, 1, Cmid), jnp.float32)
    midp = jnp.concatenate([zcol, mid, zcol], axis=1)              # (TH+2, W+2, Cmid)

    # ---- 3x3 conv + bias + LeakyReLU + residual ----
    acc = jnp.zeros((TH * W, C), jnp.float32)
    for kh in range(3):
        for kw in range(3):
            patch = midp[kh:kh + TH, kw:kw + W, :]
            acc = acc + jnp.dot(patch.reshape(TH * W, Cmid), w2_ref[kh, kw],
                                preferred_element_type=jnp.float32)
    y = _leaky(acc + b2_ref[...]) + body.reshape(TH * W, C).astype(jnp.float32)
    o_ref[...] = y.reshape(1, TH, W, C).astype(o_ref.dtype)


def res_unit(x, w1, b1, w2, b2, *, tile_h=DEFAULT_TILE_H):
    N, H, W, C = x.shape
    Cmid = w1.shape[1]
    th = _pick_tile_h(H, tile_h)
    grid = (N, H // th)

    flops = 2 * N * H * W * C * Cmid + 2 * N * H * W * 9 * Cmid * C
    bytes_accessed = 4 * (2 * x.size + w1.size + w2.size + b1.size + b2.size)

    return pl.pallas_call(
        _res_unit_kernel,
        out_shape=jax.ShapeDtypeStruct((N, H, W, C), x.dtype),
        grid=grid,
        in_specs=[
            pl.BlockSpec((1, H, W, C), lambda n, t: (n, 0, 0, 0)),
            pl.BlockSpec((C, Cmid), lambda n, t: (0, 0)),
            pl.BlockSpec((1, Cmid), lambda n, t: (0, 0)),
            pl.BlockSpec((3, 3, Cmid, C), lambda n, t: (0, 0, 0, 0)),
            pl.BlockSpec((1, C), lambda n, t: (0, 0)),
        ],
        out_specs=pl.BlockSpec((1, th, W, C), lambda n, t: (n, t, 0, 0)),
        compiler_params=pltpu.CompilerParams(
            dimension_semantics=("parallel", "parallel")),
        cost_estimate=pl.CostEstimate(
            flops=flops, transcendentals=0, bytes_accessed=bytes_accessed),
    )(x, w1, b1, w2, b2)


# ----------------------------------------------------------------------------
# Parameters: deterministic init, eval-mode BN folded into weights, lane padding
# ----------------------------------------------------------------------------
def _fold_bn(w, conv_b, gamma, beta, mean, var, eps=1e-5):
    s = gamma / jnp.sqrt(var + eps)
    return w * s, beta + (conv_b - mean) * s


def _pad_io(w, b, cin_p, cout_p):
    _, _, cin, cout = w.shape
    w = jnp.pad(w, ((0, 0), (0, 0), (0, cin_p - cin), (0, cout_p - cout)))
    b = jnp.pad(b, ((0, cout_p - cout),)).reshape(1, cout_p)
    return w, b


def _init_dark_conv(key, cin, cout, k, cin_p, cout_p):
    kw_, kb_, kg_, kbe_, km_, kv_ = jax.random.split(key, 6)
    w = jax.random.normal(kw_, (k, k, cin, cout), jnp.float32) / jnp.sqrt(k * k * cin)
    b = 0.1 * jax.random.normal(kb_, (cout,), jnp.float32)
    gamma = 1.0 + 0.1 * jax.random.normal(kg_, (cout,), jnp.float32)
    beta = 0.1 * jax.random.normal(kbe_, (cout,), jnp.float32)
    mean = 0.1 * jax.random.normal(km_, (cout,), jnp.float32)
    var = jax.random.uniform(kv_, (cout,), jnp.float32, 0.5, 1.5)
    w, b = _fold_bn(w, b, gamma, beta, mean, var)
    return _pad_io(w, b, cin_p, cout_p)


def init_res_block_params(key, in_channels, out_channels, num_blocks):
    cin_p = _round_up(in_channels, LANES)
    cout_p = _round_up(out_channels, LANES)
    cmid_p = _round_up(out_channels // 2, LANES)

    keys = jax.random.split(key, 1 + 2 * num_blocks)
    head = _init_dark_conv(keys[0], in_channels, out_channels, 3, cin_p, cout_p)
    units = []
    for i in range(num_blocks):
        w1, b1 = _init_dark_conv(keys[1 + 2 * i], out_channels, out_channels // 2, 1,
                                 cout_p, cmid_p)
        w2, b2 = _init_dark_conv(keys[2 + 2 * i], out_channels // 2, out_channels, 3,
                                 cmid_p, cout_p)
        units.append((w1[0, 0], b1, w2, b2))   # 1x1 weight squeezed to (Cin, Cout)
    return {"head": head, "units": units,
            "cin_p": cin_p, "out_channels": out_channels}


# ----------------------------------------------------------------------------
# ResBlock forward (NCHW in / NCHW out, like the PyTorch module)
# ----------------------------------------------------------------------------
def res_block_forward(x_nchw, params):
    x = jnp.transpose(x_nchw, (0, 2, 3, 1))                       # NCHW -> NHWC
    x = jnp.pad(x, ((0, 0), (0, 0), (0, 0), (0, params["cin_p"] - x.shape[-1])))
    w0, b0 = params["head"]
    x = head_conv(x, w0, b0)
    for w1, b1, w2, b2 in params["units"]:
        x = res_unit(x, w1, b1, w2, b2)
    x = x[..., :params["out_channels"]]                            # drop lane padding
    return jnp.transpose(x, (0, 3, 1, 2))                          # back to NCHW


# ----------------------------------------------------------------------------
# Pure-XLA reference (same folded/padded params) for correctness checking
# ----------------------------------------------------------------------------
def _reference_forward(x_nchw, params):
    dn = ("NHWC", "HWIO", "NHWC")
    hi = lax.Precision.HIGHEST
    x = jnp.transpose(x_nchw, (0, 2, 3, 1))
    x = jnp.pad(x, ((0, 0), (0, 0), (0, 0), (0, params["cin_p"] - x.shape[-1])))
    w0, b0 = params["head"]
    xp = jnp.pad(x, ((0, 0), (1, 0), (1, 0), (0, 0)))
    y = lax.conv_general_dilated(xp, w0, (2, 2), "VALID",
                                 dimension_numbers=dn, precision=hi)
    y = _leaky(y + b0.reshape(1, 1, 1, -1))
    for w1, b1, w2, b2 in params["units"]:
        h = lax.conv_general_dilated(y, w1[None, None], (1, 1), "VALID",
                                     dimension_numbers=dn, precision=hi)
        h = _leaky(h + b1.reshape(1, 1, 1, -1))
        h = lax.conv_general_dilated(h, w2, (1, 1), ((1, 1), (1, 1)),
                                     dimension_numbers=dn, precision=hi)
        y = y + _leaky(h + b2.reshape(1, 1, 1, -1))
    y = y[..., :params["out_channels"]]
    return jnp.transpose(y, (0, 3, 1, 2))


if __name__ == "__main__":
    in_channels, out_channels, num_blocks = 4, 8, 2
    key = jax.random.PRNGKey(0)
    kx, kp = jax.random.split(key)

    # PyTorch-style NCHW input.
    x = jax.random.normal(kx, (2, in_channels, 16, 16), jnp.float32)
    params = init_res_block_params(kp, in_channels, out_channels, num_blocks)

    fwd = jax.jit(functools.partial(res_block_forward, params=params))
    out = jax.block_until_ready(fwd(x))

    assert out.shape == (2, out_channels, 8, 8), out.shape
    assert out.dtype == jnp.float32
    assert bool(jnp.all(jnp.isfinite(out)))

    ref = _reference_forward(x, params)
    max_err = float(jnp.max(jnp.abs(out - ref)))
    assert max_err < 1e-3, f"mismatch vs XLA reference: {max_err}"

    print("KERNEL_OK")
</pallas_src>

<mosaic_0001>
module attributes {stable_mosaic.version = 11 : i64} {
  func.func @_head_conv_kernel(%arg0: i32, %arg1: i32, %arg2: memref<1x4x9x9x128xf32, #tpu.memory_space<vmem>>, %arg3: memref<3x3x128x128xf32, #tpu.memory_space<vmem>>, %arg4: memref<1x128xf32, #tpu.memory_space<vmem>>, %arg5: memref<1x4x8x128xf32, #tpu.memory_space<vmem>>) attributes {dimension_semantics = [#tpu.dimension_semantics<parallel>, #tpu.dimension_semantics<parallel>], iteration_bounds = array<i64: 2, 2>, scalar_prefetch = 0 : i64, scratch_operands = 0 : i64, tpu.core_type = #tpu.core_type<tc>, window_params = [{transform_indices = @transform_0, window_bounds = array<i64: 1, 4, 9, 9, 128>}, {pipeline_mode = #tpu.pipeline_mode<synchronous>, transform_indices = @transform_1, window_bounds = array<i64: 3, 3, 128, 128>}, {pipeline_mode = #tpu.pipeline_mode<synchronous>, transform_indices = @transform_2, window_bounds = array<i64: 1, 128>}, {transform_indices = @transform_3, window_bounds = array<i64: 1, 4, 8, 128>}]} {
    %c4_i32 = arith.constant 4 : i32
    %0 = arith.muli %arg1, %c4_i32 : i32
    %1 = tpu.assume_multiple %0, 4 : i32
    %cst = arith.constant 0.000000e+00 : f32
    %2 = vector.broadcast %cst : f32 to vector<32x128xf32>
    %c0_i32 = arith.constant 0 : i32
    %3 = arith.addi %1, %c0_i32 : i32
    %c0 = arith.constant 0 : index
    %c0_0 = arith.constant 0 : index
    %4 = arith.index_cast %3 : i32 to index
    %c0_1 = arith.constant 0 : index
    %c0_2 = arith.constant 0 : index
    %5 = vector.load %arg2[%c0, %c0_0, %4, %c0_1, %c0_2] : memref<1x4x9x9x128xf32, #tpu.memory_space<vmem>>, vector<1x1x4x8x128xf32>
    %6 = vector.shape_cast %5 : vector<1x1x4x8x128xf32> to vector<4x8x128xf32>
    %7 = vector.shape_cast %6 : vector<4x8x128xf32> to vector<32x128xf32>
    %c0_3 = arith.constant 0 : index
    %c0_4 = arith.constant 0 : index
    %c0_5 = arith.constant 0 : index
    %c0_6 = arith.constant 0 : index
    %8 = vector.load %arg3[%c0_3, %c0_4, %c0_5, %c0_6] : memref<3x3x128x128xf32, #tpu.memory_space<vmem>>, vector<1x1x128x128xf32>
    %9 = vector.shape_cast %8 : vector<1x1x128x128xf32> to vector<128x128xf32>
    %cst_7 = arith.constant dense<0.000000e+00> : vector<32x128xf32>
    %10 = tpu.matmul %7, %9, %cst_7 {dimension_numbers = #tpu.dot_dimension_numbers<[1], [0], [0], [1], [0, 0, 1, 1], [], []>} : vector<32x128xf32>, vector<128x128xf32>, vector<32x128xf32> -> vector<32x128xf32>
    %11 = arith.addf %2, %10 : vector<32x128xf32>
    %c0_i32_8 = arith.constant 0 : i32
    %12 = arith.addi %1, %c0_i32_8 : i32
    %c0_9 = arith.constant 0 : index
    %c1 = arith.constant 1 : index
    %13 = arith.index_cast %12 : i32 to index
    %c0_10 = arith.constant 0 : index
    %c0_11 = arith.constant 0 : index
    %14 = vector.load %arg2[%c0_9, %c1, %13, %c0_10, %c0_11] : memref<1x4x9x9x128xf32, #tpu.memory_space<vmem>>, vector<1x1x4x8x128xf32>
    %15 = vector.shape_cast %14 : vector<1x1x4x8x128xf32> to vector<4x8x128xf32>
    %16 = vector.shape_cast %15 : vector<4x8x128xf32> to vector<32x128xf32>
    %c0_12 = arith.constant 0 : index
    %c1_13 = arith.constant 1 : index
    %c0_14 = arith.constant 0 : index
    %c0_15 = arith.constant 0 : index
    %17 = vector.load %arg3[%c0_12, %c1_13, %c0_14, %c0_15] : memref<3x3x128x128xf32, #tpu.memory_space<vmem>>, vector<1x1x128x128xf32>
    %18 = vector.shape_cast %17 : vector<1x1x128x128xf32> to vector<128x128xf32>
    %cst_16 = arith.constant dense<0.000000e+00> : vector<32x128xf32>
    %19 = tpu.matmul %16, %18, %cst_16 {dimension_numbers = #tpu.dot_dimension_numbers<[1], [0], [0], [1], [0, 0, 1, 1], [], []>} : vector<32x128xf32>, vector<128x128xf32>, vector<32x128xf32> -> vector<32x128xf32>
    %20 = arith.addf %11, %19 : vector<32x128xf32>
    %c0_i32_17 = arith.constant 0 : i32
    %21 = arith.addi %1, %c0_i32_17 : i32
    %c0_18 = arith.constant 0 : index
    %c0_19 = arith.constant 0 : index
    %22 = arith.index_cast %21 : i32 to index
    %c1_20 = arith.constant 1 : index
    %c0_21 = arith.constant 0 : index
    %23 = vector.load %arg2[%c0_18, %c0_19, %22, %c1_20, %c0_21] : memref<1x4x9x9x128xf32, #tpu.memory_space<vmem>>, vector<1x1x4x8x128xf32>
    %24 = vector.shape_cast %23 : vector<1x1x4x8x128xf32> to vector<4x8x128xf32>
    %25 = vector.shape_cast %24 : vector<4x8x128xf32> to vector<32x128xf32>
    %c0_22 = arith.constant 0 : index
    %c2 = arith.constant 2 : index
    %c0_23 = arith.constant 0 : index
    %c0_24 = arith.constant 0 : index
    %26 = vector.load %arg3[%c0_22, %c2, %c0_23, %c0_24] : memref<3x3x128x128xf32, #tpu.memory_space<vmem>>, vector<1x1x128x128xf32>
    %27 = vector.shape_cast %26 : vector<1x1x128x128xf32> to vector<128x128xf32>
    %cst_25 = arith.constant dense<0.000000e+00> : vector<32x128xf32>
    %28 = tpu.matmul %25, %27, %cst_25 {dimension_numbers = #tpu.dot_dimension_numbers<[1], [0], [0], [1], [0, 0, 1, 1], [], []>} : vector<32x128xf32>, vector<128x128xf32>, vector<32x128xf32> -> vector<32x128xf32>
    %29 = arith.addf %20, %28 : vector<32x128xf32>
    %c0_i32_26 = arith.constant 0 : i32
    %30 = arith.addi %1, %c0_i32_26 : i32
    %c0_27 = arith.constant 0 : index
    %c2_28 = arith.constant 2 : index
    %31 = arith.index_cast %30 : i32 to index
    %c0_29 = arith.constant 0 : index
    %c0_30 = arith.constant 0 : index
    %32 = vector.load %arg2[%c0_27, %c2_28, %31, %c0_29, %c0_30] : memref<1x4x9x9x128xf32, #tpu.memory_space<vmem>>, vector<1x1x4x8x128xf32>
    %33 = vector.shape_cast %32 : vector<1x1x4x8x128xf32> to vector<4x8x128xf32>
    %34 = vector.shape_cast %33 : vector<4x8x128xf32> to vector<32x128xf32>
    %c1_31 = arith.constant 1 : index
    %c0_32 = arith.constant 0 : index
    %c0_33 = arith.constant 0 : index
    %c0_34 = arith.constant 0 : index
    %35 = vector.load %arg3[%c1_31, %c0_32, %c0_33, %c0_34] : memref<3x3x128x128xf32, #tpu.memory_space<vmem>>, vector<1x1x128x128xf32>
    %36 = vector.shape_cast %35 : vector<1x1x128x128xf32> to vector<128x128xf32>
    %cst_35 = arith.constant dense<0.000000e+00> : vector<32x128xf32>
    %37 = tpu.matmul %34, %36, %cst_35 {dimension_numbers = #tpu.dot_dimension_numbers<[1], [0], [0], [1], [0, 0, 1, 1], [], []>} : vector<32x128xf32>, vector<128x128xf32>, vector<32x128xf32> -> vector<32x128xf32>
    %38 = arith.addf %29, %37 : vector<32x128xf32>
    %c0_i32_36 = arith.constant 0 : i32
    %39 = arith.addi %1, %c0_i32_36 : i32
    %c0_37 = arith.constant 0 : index
    %c3 = arith.constant 3 : index
    %40 = arith.index_cast %39 : i32 to index
    %c0_38 = arith.constant 0 : index
    %c0_39 = arith.constant 0 : index
    %41 = vector.load %arg2[%c0_37, %c3, %40, %c0_38, %c0_39] : memref<1x4x9x9x128xf32, #tpu.memory_space<vmem>>, vector<1x1x4x8x128xf32>
    %42 = vector.shape_cast %41 : vector<1x1x4x8x128xf32> to vector<4x8x128xf32>
    %43 = vector.shape_cast %42 : vector<4x8x128xf32> to vector<32x128xf32>
    %c1_40 = arith.constant 1 : index
    %c1_41 = arith.constant 1 : index
    %c0_42 = arith.constant 0 : index
    %c0_43 = arith.constant 0 : index
    %44 = vector.load %arg3[%c1_40, %c1_41, %c0_42, %c0_43] : memref<3x3x128x128xf32, #tpu.memory_space<vmem>>, vector<1x1x128x128xf32>
    %45 = vector.shape_cast %44 : vector<1x1x128x128xf32> to vector<128x128xf32>
    %cst_44 = arith.constant dense<0.000000e+00> : vector<32x128xf32>
    %46 = tpu.matmul %43, %45, %cst_44 {dimension_numbers = #tpu.dot_dimension_numbers<[1], [0], [0], [1], [0, 0, 1, 1], [], []>} : vector<32x128xf32>, vector<128x128xf32>, vector<32x128xf32> -> vector<32x128xf32>
    %47 = arith.addf %38, %46 : vector<32x128xf32>
    %c0_i32_45 = arith.constant 0 : i32
    %48 = arith.addi %1, %c0_i32_45 : i32
    %c0_46 = arith.constant 0 : index
    %c2_47 = arith.constant 2 : index
    %49 = arith.index_cast %48 : i32 to index
    %c1_48 = arith.constant 1 : index
    %c0_49 = arith.constant 0 : index
    %50 = vector.load %arg2[%c0_46, %c2_47, %49, %c1_48, %c0_49] : memref<1x4x9x9x128xf32, #tpu.memory_space<vmem>>, vector<1x1x4x8x128xf32>
    %51 = vector.shape_cast %50 : vector<1x1x4x8x128xf32> to vector<4x8x128xf32>
    %52 = vector.shape_cast %51 : vector<4x8x128xf32> to vector<32x128xf32>
    %c1_50 = arith.constant 1 : index
    %c2_51 = arith.constant 2 : index
    %c0_52 = arith.constant 0 : index
    %c0_53 = arith.constant 0 : index
    %53 = vector.load %arg3[%c1_50, %c2_51, %c0_52, %c0_53] : memref<3x3x128x128xf32, #tpu.memory_space<vmem>>, vector<1x1x128x128xf32>
    %54 = vector.shape_cast %53 : vector<1x1x128x128xf32> to vector<128x128xf32>
    %cst_54 = arith.constant dense<0.000000e+00> : vector<32x128xf32>
    %55 = tpu.matmul %52, %54, %cst_54 {dimension_numbers = #tpu.dot_dimension_numbers<[1], [0], [0], [1], [0, 0, 1, 1], [], []>} : vector<32x128xf32>, vector<128x128xf32>, vector<32x128xf32> -> vector<32x128xf32>
    %56 = arith.addf %47, %55 : vector<32x128xf32>
    %c1_i32 = arith.constant 1 : i32
    %57 = arith.addi %1, %c1_i32 : i32
    %c0_55 = arith.constant 0 : index
    %c0_56 = arith.constant 0 : index
    %58 = arith.index_cast %57 : i32 to index
    %c0_57 = arith.constant 0 : index
    %c0_58 = arith.constant 0 : index
    %59 = vector.load %arg2[%c0_55, %c0_56, %58, %c0_57, %c0_58] : memref<1x4x9x9x128xf32, #tpu.memory_space<vmem>>, vector<1x1x4x8x128xf32>
    %60 = vector.shape_cast %59 : vector<1x1x4x8x128xf32> to vector<4x8x128xf32>
    %61 = vector.shape_cast %60 : vector<4x8x128xf32> to vector<32x128xf32>
    %c2_59 = arith.constant 2 : index
    %c0_60 = arith.constant 0 : index
    %c0_61 = arith.constant 0 : index
    %c0_62 = arith.constant 0 : index
    %62 = vector.load %arg3[%c2_59, %c0_60, %c0_61, %c0_62] : memref<3x3x128x128xf32, #tpu.memory_space<vmem>>, vector<1x1x128x128xf32>
    %63 = vector.shape_cast %62 : vector<1x1x128x128xf32> to vector<128x128xf32>
    %cst_63 = arith.constant dense<0.000000e+00> : vector<32x128xf32>
    %64 = tpu.matmul %61, %63, %cst_63 {dimension_numbers = #tpu.dot_dimension_numbers<[1], [0], [0], [1], [0, 0, 1, 1], [], []>} : vector<32x128xf32>, vector<128x128xf32>, vector<32x128xf32> -> vector<32x128xf32>
    %65 = arith.addf %56, %64 : vector<32x128xf32>
    %c1_i32_64 = arith.constant 1 : i32
    %66 = arith.addi %1, %c1_i32_64 : i32
    %c0_65 = arith.constant 0 : index
    %c1_66 = arith.constant 1 : index
    %67 = arith.index_cast %66 : i32 to index
    %c0_67 = arith.constant 0 : index
    %c0_68 = arith.constant 0 : index
    %68 = vector.load %arg2[%c0_65, %c1_66, %67, %c0_67, %c0_68] : memref<1x4x9x9x128xf32, #tpu.memory_space<vmem>>, vector<1x1x4x8x128xf32>
    %69 = vector.shape_cast %68 : vector<1x1x4x8x128xf32> to vector<4x8x128xf32>
    %70 = vector.shape_cast %69 : vector<4x8x128xf32> to vector<32x128xf32>
    %c2_69 = arith.constant 2 : index
    %c1_70 = arith.constant 1 : index
    %c0_71 = arith.constant 0 : index
    %c0_72 = arith.constant 0 : index
    %71 = vector.load %arg3[%c2_69, %c1_70, %c0_71, %c0_72] : memref<3x3x128x128xf32, #tpu.memory_space<vmem>>, vector<1x1x128x128xf32>
    %72 = vector.shape_cast %71 : vector<1x1x128x128xf32> to vector<128x128xf32>
    %cst_73 = arith.constant dense<0.000000e+00> : vector<32x128xf32>
    %73 = tpu.matmul %70, %72, %cst_73 {dimension_numbers = #tpu.dot_dimension_numbers<[1], [0], [0], [1], [0, 0, 1, 1], [], []>} : vector<32x128xf32>, vector<128x128xf32>, vector<32x128xf32> -> vector<32x128xf32>
    %74 = arith.addf %65, %73 : vector<32x128xf32>
    %c1_i32_74 = arith.constant 1 : i32
    %75 = arith.addi %1, %c1_i32_74 : i32
    %c0_75 = arith.constant 0 : index
    %c0_76 = arith.constant 0 : index
    %76 = arith.index_cast %75 : i32 to index
    %c1_77 = arith.constant 1 : index
    %c0_78 = arith.constant 0 : index
    %77 = vector.load %arg2[%c0_75, %c0_76, %76, %c1_77, %c0_78] : memref<1x4x9x9x128xf32, #tpu.memory_space<vmem>>, vector<1x1x4x8x128xf32>
    %78 = vector.shape_cast %77 : vector<1x1x4x8x128xf32> to vector<4x8x128xf32>
    %79 = vector.shape_cast %78 : vector<4x8x128xf32> to vector<32x128xf32>
    %c2_79 = arith.constant 2 : index
    %c2_80 = arith.constant 2 : index
    %c0_81 = arith.constant 0 : index
    %c0_82 = arith.constant 0 : index
    %80 = vector.load %arg3[%c2_79, %c2_80, %c0_81, %c0_82] : memref<3x3x128x128xf32, #tpu.memory_space<vmem>>, vector<1x1x128x128xf32>
    %81 = vector.shape_cast %80 : vector<1x1x128x128xf32> to vector<128x128xf32>
    %cst_83 = arith.constant dense<0.000000e+00> : vector<32x128xf32>
    %82 = tpu.matmul %79, %81, %cst_83 {dimension_numbers = #tpu.dot_dimension_numbers<[1], [0], [0], [1], [0, 0, 1, 1], [], []>} : vector<32x128xf32>, vector<128x128xf32>, vector<32x128xf32> -> vector<32x128xf32>
    %83 = arith.addf %74, %82 : vector<32x128xf32>
    %c0_84 = arith.constant 0 : index
    %c0_85 = arith.constant 0 : index
    %84 = vector.load %arg4[%c0_84, %c0_85] : memref<1x128xf32, #tpu.memory_space<vmem>>, vector<1x128xf32>
    %85 = vector.broadcast %84 : vector<1x128xf32> to vector<32x128xf32>
    %86 = arith.addf %83, %85 : vector<32x128xf32>
    %cst_86 = arith.constant 0.000000e+00 : f32
    %87 = vector.broadcast %cst_86 : f32 to vector<32x128xf32>
    %88 = arith.cmpf oge, %86, %87 : vector<32x128xf32>
    %cst_87 = arith.constant 1.000000e-01 : f32
    %89 = vector.broadcast %cst_87 : f32 to vector<32x128xf32>
    %90 = arith.mulf %89, %86 : vector<32x128xf32>
    %91 = arith.select %88, %86, %90 : vector<32x128xi1>, vector<32x128xf32>
    %92 = vector.shape_cast %91 : vector<32x128xf32> to vector<1x4x8x128xf32>
    %c0_88 = arith.constant 0 : index
    %c0_89 = arith.constant 0 : index
    %c0_90 = arith.constant 0 : index
    %c0_91 = arith.constant 0 : index
    %93 = vector.load %arg5[%c0_88, %c0_89, %c0_90, %c0_91] : memref<1x4x8x128xf32, #tpu.memory_space<vmem>>, vector<1x4x8x128xf32>
    tpu.vector_store %arg5[%c0_88, %c0_89, %c0_90, %c0_91], %92 {strides = array<i32>} : memref<1x4x8x128xf32, #tpu.memory_space<vmem>>, vector<1x4x8x128xf32>,
    return
  }
  func.func @transform_0(%arg0: i32, %arg1: i32) -> (i32, i32, i32, i32, i32) {
    %c0_i32 = arith.constant 0 : i32
    %c0_i32_0 = arith.constant 0 : i32
    %c0_i32_1 = arith.constant 0 : i32
    %c0_i32_2 = arith.constant 0 : i32
    %c0_i32_3 = arith.constant 0 : i32
    return %arg0, %c0_i32, %c0_i32_0, %c0_i32_1, %c0_i32_2 : i32, i32, i32, i32, i32
  }
  func.func @transform_1(%arg0: i32, %arg1: i32) -> (i32, i32, i32, i32) {
    %c0_i32 = arith.constant 0 : i32
    %c0_i32_0 = arith.constant 0 : i32
    %c0_i32_1 = arith.constant 0 : i32
    %c0_i32_2 = arith.constant 0 : i32
    %c0_i32_3 = arith.constant 0 : i32
    return %c0_i32, %c0_i32_0, %c0_i32_1, %c0_i32_2 : i32, i32, i32, i32
  }
  func.func @transform_2(%arg0: i32, %arg1: i32) -> (i32, i32) {
    %c0_i32 = arith.constant 0 : i32
    %c0_i32_0 = arith.constant 0 : i32
    %c0_i32_1 = arith.constant 0 : i32
    return %c0_i32, %c0_i32_0 : i32, i32
  }
  func.func @transform_3(%arg0: i32, %arg1: i32) -> (i32, i32, i32, i32) {
    %c0_i32 = arith.constant 0 : i32
    %c0_i32_0 = arith.constant 0 : i32
    %c0_i32_1 = arith.constant 0 : i32
    return %arg0, %arg1, %c0_i32, %c0_i32_0 : i32, i32, i32, i32
  }
}

module attributes {stable_mosaic.version = 11 : i64} {
  func.func @_res_unit_kernel(%arg0: i32, %arg1: i32, %arg2: memref<1x8x8x128xf32, #tpu.memory_space<vmem>>, %arg3: memref<128x128xf32, #tpu.memory_space<vmem>>, %arg4: memref<1x128xf32, #tpu.memory_space<vmem>>, %arg5: memref<3x3x128x128xf32, #tpu.memory_space<vmem>>, %arg6: memref<1x128xf32, #tpu.memory_space<vmem>>, %arg7: memref<1x4x8x128xf32, #tpu.memory_space<vmem>>) attributes {dimension_semantics = [#tpu.dimension_semantics<parallel>, #tpu.dimension_semantics<parallel>], iteration_bounds = array<i64: 2, 2>, scalar_prefetch = 0 : i64, scratch_operands = 0 : i64, tpu.core_type = #tpu.core_type<tc>, window_params = [{transform_indices = @transform_0, window_bounds = array<i64: 1, 8, 8, 128>}, {pipeline_mode = #tpu.pipeline_mode<synchronous>, transform_indices = @transform_1, window_bounds = array<i64: 128, 128>}, {pipeline_mode = #tpu.pipeline_mode<synchronous>, transform_indices = @transform_2, window_bounds = array<i64: 1, 128>}, {pipeline_mode = #tpu.pipeline_mode<synchronous>, transform_indices = @transform_3, window_bounds = array<i64: 3, 3, 128, 128>}, {pipeline_mode = #tpu.pipeline_mode<synchronous>, transform_indices = @transform_4, window_bounds = array<i64: 1, 128>}, {transform_indices = @transform_5, window_bounds = array<i64: 1, 4, 8, 128>}]} {
    %c4_i32 = arith.constant 4 : i32
    %0 = arith.muli %arg1, %c4_i32 : i32
    %1 = tpu.assume_multiple %0, 4 : i32
    %c0 = arith.constant 0 : index
    %2 = arith.index_cast %1 : i32 to index
    %c0_0 = arith.constant 0 : index
    %c0_1 = arith.constant 0 : index
    %3 = vector.load %arg2[%c0, %2, %c0_0, %c0_1] : memref<1x8x8x128xf32, #tpu.memory_space<vmem>>, vector<1x4x8x128xf32>
    %4 = vector.shape_cast %3 : vector<1x4x8x128xf32> to vector<4x8x128xf32>
    %c1_i32 = arith.constant 1 : i32
    %5 = arith.subi %1, %c1_i32 : i32
    %c0_i32 = arith.constant 0 : i32
    %c7_i32 = arith.constant 7 : i32
    %6 = arith.maxsi %c0_i32, %5 : i32
    %7 = arith.minsi %c7_i32, %6 : i32
    %c0_2 = arith.constant 0 : index
    %8 = arith.index_cast %7 : i32 to index
    %c0_3 = arith.constant 0 : index
    %c0_4 = arith.constant 0 : index
    %9 = vector.load %arg2[%c0_2, %8, %c0_3, %c0_4] : memref<1x8x8x128xf32, #tpu.memory_space<vmem>>, vector<1x1x8x128xf32>
    %10 = vector.shape_cast %9 : vector<1x1x8x128xf32> to vector<1x8x128xf32>
    %c4_i32_5 = arith.constant 4 : i32
    %11 = arith.addi %1, %c4_i32_5 : i32
    %c0_i32_6 = arith.constant 0 : i32
    %c7_i32_7 = arith.constant 7 : i32
    %12 = arith.maxsi %c0_i32_6, %11 : i32
    %13 = arith.minsi %c7_i32_7, %12 : i32
    %c0_8 = arith.constant 0 : index
    %14 = arith.index_cast %13 : i32 to index
    %c0_9 = arith.constant 0 : index
    %c0_10 = arith.constant 0 : index
    %15 = vector.load %arg2[%c0_8, %14, %c0_9, %c0_10] : memref<1x8x8x128xf32, #tpu.memory_space<vmem>>, vector<1x1x8x128xf32>
    %16 = vector.shape_cast %15 : vector<1x1x8x128xf32> to vector<1x8x128xf32>
    %17 = tpu.concatenate %10, %4, %16 in 0 : vector<1x8x128xf32>, vector<4x8x128xf32>, vector<1x8x128xf32> -> vector<6x8x128xf32>
    %18 = vector.shape_cast %17 : vector<6x8x128xf32> to vector<48x128xf32>
    %c0_11 = arith.constant 0 : index
    %c0_12 = arith.constant 0 : index
    %19 = vector.load %arg3[%c0_11, %c0_12] : memref<128x128xf32, #tpu.memory_space<vmem>>, vector<128x128xf32>
    %cst = arith.constant dense<0.000000e+00> : vector<48x128xf32>
    %20 = tpu.matmul %18, %19, %cst {dimension_numbers = #tpu.dot_dimension_numbers<[1], [0], [0], [1], [0, 0, 1, 1], [], []>} : vector<48x128xf32>, vector<128x128xf32>, vector<48x128xf32> -> vector<48x128xf32>
    %c0_13 = arith.constant 0 : index
    %c0_14 = arith.constant 0 : index
    %21 = vector.load %arg4[%c0_13, %c0_14] : memref<1x128xf32, #tpu.memory_space<vmem>>, vector<1x128xf32>
    %22 = vector.broadcast %21 : vector<1x128xf32> to vector<48x128xf32>
    %23 = arith.addf %20, %22 : vector<48x128xf32>
    %cst_15 = arith.constant 0.000000e+00 : f32
    %24 = vector.broadcast %cst_15 : f32 to vector<48x128xf32>
    %25 = arith.cmpf oge, %23, %24 : vector<48x128xf32>
    %cst_16 = arith.constant 1.000000e-01 : f32
    %26 = vector.broadcast %cst_16 : f32 to vector<48x128xf32>
    %27 = arith.mulf %26, %23 : vector<48x128xf32>
    %28 = arith.select %25, %23, %27 : vector<48x128xi1>, vector<48x128xf32>
    %29 = vector.shape_cast %28 : vector<48x128xf32> to vector<6x8x128xf32>
    %c1_i32_17 = arith.constant 1 : i32
    %30 = arith.subi %1, %c1_i32_17 : i32
    %31 = tpu.iota {dimensions = array<i32: 0>} : vector<6x1x1xi32>
    %32 = vector.broadcast %30 : i32 to vector<6x1x1xi32>
    %33 = arith.addi %32, %31 : vector<6x1x1xi32>
    %c0_i32_18 = arith.constant 0 : i32
    %34 = vector.broadcast %c0_i32_18 : i32 to vector<6x1x1xi32>
    %35 = arith.cmpi sge, %33, %34 : vector<6x1x1xi32>
    %c8_i32 = arith.constant 8 : i32
    %36 = vector.broadcast %c8_i32 : i32 to vector<6x1x1xi32>
    %37 = arith.cmpi slt, %33, %36 : vector<6x1x1xi32>
    %38 = arith.andi %35, %37 : vector<6x1x1xi1>
    %cst_19 = arith.constant 0.000000e+00 : f32
    %39 = vector.shape_cast %38 : vector<6x1x1xi1> to vector<6x1x1xi1>
    %40 = vector.broadcast %39 : vector<6x1x1xi1> to vector<6x8x128xi1>
    %41 = vector.broadcast %cst_19 : f32 to vector<6x8x128xf32>
    %42 = arith.select %40, %29, %41 : vector<6x8x128xi1>, vector<6x8x128xf32>
    %cst_20 = arith.constant 0.000000e+00 : f32
    %43 = vector.broadcast %cst_20 : f32 to vector<6x1x128xf32>
    %44 = tpu.concatenate %43, %42, %43 in 1 : vector<6x1x128xf32>, vector<6x8x128xf32>, vector<6x1x128xf32> -> vector<6x10x128xf32>
    %cst_21 = arith.constant 0.000000e+00 : f32
    %45 = vector.broadcast %cst_21 : f32 to vector<32x128xf32>
    %46 = vector.extract_strided_slice %44 {offsets = [0, 0, 0], sizes = [4, 8, 128], strides = [1, 1, 1]} : vector<6x10x128xf32> to vector<4x8x128xf32>
    %47 = vector.shape_cast %46 : vector<4x8x128xf32> to vector<32x128xf32>
    %c0_22 = arith.constant 0 : index
    %c0_23 = arith.constant 0 : index
    %c0_24 = arith.constant 0 : index
    %c0_25 = arith.constant 0 : index
    %48 = vector.load %arg5[%c0_22, %c0_23, %c0_24, %c0_25] : memref<3x3x128x128xf32, #tpu.memory_space<vmem>>, vector<1x1x128x128xf32>
    %49 = vector.shape_cast %48 : vector<1x1x128x128xf32> to vector<128x128xf32>
    %cst_26 = arith.constant dense<0.000000e+00> : vector<32x128xf32>
    %50 = tpu.matmul %47, %49, %cst_26 {dimension_numbers = #tpu.dot_dimension_numbers<[1], [0], [0], [1], [0, 0, 1, 1], [], []>} : vector<32x128xf32>, vector<128x128xf32>, vector<32x128xf32> -> vector<32x128xf32>
    %51 = arith.addf %45, %50 : vector<32x128xf32>
    %52 = vector.extract_strided_slice %44 {offsets = [0, 1, 0], sizes = [4, 8, 128], strides = [1, 1, 1]} : vector<6x10x128xf32> to vector<4x8x128xf32>
    %53 = vector.shape_cast %52 : vector<4x8x128xf32> to vector<32x128xf32>
    %c0_27 = arith.constant 0 : index
    %c1 = arith.constant 1 : index
    %c0_28 = arith.constant 0 : index
    %c0_29 = arith.constant 0 : index
    %54 = vector.load %arg5[%c0_27, %c1, %c0_28, %c0_29] : memref<3x3x128x128xf32, #tpu.memory_space<vmem>>, vector<1x1x128x128xf32>
    %55 = vector.shape_cast %54 : vector<1x1x128x128xf32> to vector<128x128xf32>
    %cst_30 = arith.constant dense<0.000000e+00> : vector<32x128xf32>
    %56 = tpu.matmul %53, %55, %cst_30 {dimension_numbers = #tpu.dot_dimension_numbers<[1], [0], [0], [1], [0, 0, 1, 1], [], []>} : vector<32x128xf32>, vector<128x128xf32>, vector<32x128xf32> -> vector<32x128xf32>
    %57 = arith.addf %51, %56 : vector<32x128xf32>
    %58 = vector.extract_strided_slice %44 {offsets = [0, 2, 0], sizes = [4, 8, 128], strides = [1, 1, 1]} : vector<6x10x128xf32> to vector<4x8x128xf32>
    %59 = vector.shape_cast %58 : vector<4x8x128xf32> to vector<32x128xf32>
    %c0_31 = arith.constant 0 : index
    %c2 = arith.constant 2 : index
    %c0_32 = arith.constant 0 : index
    %c0_33 = arith.constant 0 : index
    %60 = vector.load %arg5[%c0_31, %c2, %c0_32, %c0_33] : memref<3x3x128x128xf32, #tpu.memory_space<vmem>>, vector<1x1x128x128xf32>
    %61 = vector.shape_cast %60 : vector<1x1x128x128xf32> to vector<128x128xf32>
    %cst_34 = arith.constant dense<0.000000e+00> : vector<32x128xf32>
    %62 = tpu.matmul %59, %61, %cst_34 {dimension_numbers = #tpu.dot_dimension_numbers<[1], [0], [0], [1], [0, 0, 1, 1], [], []>} : vector<32x128xf32>, vector<128x128xf32>, vector<32x128xf32> -> vector<32x128xf32>
    %63 = arith.addf %57, %62 : vector<32x128xf32>
    %64 = vector.extract_strided_slice %44 {offsets = [1, 0, 0], sizes = [4, 8, 128], strides = [1, 1, 1]} : vector<6x10x128xf32> to vector<4x8x128xf32>
    %65 = vector.shape_cast %64 : vector<4x8x128xf32> to vector<32x128xf32>
    %c1_35 = arith.constant 1 : index
    %c0_36 = arith.constant 0 : index
    %c0_37 = arith.constant 0 : index
    %c0_38 = arith.constant 0 : index
    %66 = vector.load %arg5[%c1_35, %c0_36, %c0_37, %c0_38] : memref<3x3x128x128xf32, #tpu.memory_space<vmem>>, vector<1x1x128x128xf32>
    %67 = vector.shape_cast %66 : vector<1x1x128x128xf32> to vector<128x128xf32>
    %cst_39 = arith.constant dense<0.000000e+00> : vector<32x128xf32>
    %68 = tpu.matmul %65, %67, %cst_39 {dimension_numbers = #tpu.dot_dimension_numbers<[1], [0], [0], [1], [0, 0, 1, 1], [], []>} : vector<32x128xf32>, vector<128x128xf32>, vector<32x128xf32> -> vector<32x128xf32>
    %69 = arith.addf %63, %68 : vector<32x128xf32>
    %70 = vector.extract_strided_slice %44 {offsets = [1, 1, 0], sizes = [4, 8, 128], strides = [1, 1, 1]} : vector<6x10x128xf32> to vector<4x8x128xf32>
    %71 = vector.shape_cast %70 : vector<4x8x128xf32> to vector<32x128xf32>
    %c1_40 = arith.constant 1 : index
    %c1_41 = arith.constant 1 : index
    %c0_42 = arith.constant 0 : index
    %c0_43 = arith.constant 0 : index
    %72 = vector.load %arg5[%c1_40, %c1_41, %c0_42, %c0_43] : memref<3x3x128x128xf32, #tpu.memory_space<vmem>>, vector<1x1x128x128xf32>
    %73 = vector.shape_cast %72 : vector<1x1x128x128xf32> to vector<128x128xf32>
    %cst_44 = arith.constant dense<0.000000e+00> : vector<32x128xf32>
    %74 = tpu.matmul %71, %73, %cst_44 {dimension_numbers = #tpu.dot_dimension_numbers<[1], [0], [0], [1], [0, 0, 1, 1], [], []>} : vector<32x128xf32>, vector<128x128xf32>, vector<32x128xf32> -> vector<32x128xf32>
    %75 = arith.addf %69, %74 : vector<32x128xf32>
    %76 = vector.extract_strided_slice %44 {offsets = [1, 2, 0], sizes = [4, 8, 128], strides = [1, 1, 1]} : vector<6x10x128xf32> to vector<4x8x128xf32>
    %77 = vector.shape_cast %76 : vector<4x8x128xf32> to vector<32x128xf32>
    %c1_45 = arith.constant 1 : index
    %c2_46 = arith.constant 2 : index
    %c0_47 = arith.constant 0 : index
    %c0_48 = arith.constant 0 : index
    %78 = vector.load %arg5[%c1_45, %c2_46, %c0_47, %c0_48] : memref<3x3x128x128xf32, #tpu.memory_space<vmem>>, vector<1x1x128x128xf32>
    %79 = vector.shape_cast %78 : vector<1x1x128x128xf32> to vector<128x128xf32>
    %cst_49 = arith.constant dense<0.000000e+00> : vector<32x128xf32>
    %80 = tpu.matmul %77, %79, %cst_49 {dimension_numbers = #tpu.dot_dimension_numbers<[1], [0], [0], [1], [0, 0, 1, 1], [], []>} : vector<32x128xf32>, vector<128x128xf32>, vector<32x128xf32> -> vector<32x128xf32>
    %81 = arith.addf %75, %80 : vector<32x128xf32>
    %82 = vector.extract_strided_slice %44 {offsets = [2, 0, 0], sizes = [4, 8, 128], strides = [1, 1, 1]} : vector<6x10x128xf32> to vector<4x8x128xf32>
    %83 = vector.shape_cast %82 : vector<4x8x128xf32> to vector<32x128xf32>
    %c2_50 = arith.constant 2 : index
    %c0_51 = arith.constant 0 : index
    %c0_52 = arith.constant 0 : index
    %c0_53 = arith.constant 0 : index
    %84 = vector.load %arg5[%c2_50, %c0_51, %c0_52, %c0_53] : memref<3x3x128x128xf32, #tpu.memory_space<vmem>>, vector<1x1x128x128xf32>
    %85 = vector.shape_cast %84 : vector<1x1x128x128xf32> to vector<128x128xf32>
    %cst_54 = arith.constant dense<0.000000e+00> : vector<32x128xf32>
    %86 = tpu.matmul %83, %85, %cst_54 {dimension_numbers = #tpu.dot_dimension_numbers<[1], [0], [0], [1], [0, 0, 1, 1], [], []>} : vector<32x128xf32>, vector<128x128xf32>, vector<32x128xf32> -> vector<32x128xf32>
    %87 = arith.addf %81, %86 : vector<32x128xf32>
    %88 = vector.extract_strided_slice %44 {offsets = [2, 1, 0], sizes = [4, 8, 128], strides = [1, 1, 1]} : vector<6x10x128xf32> to vector<4x8x128xf32>
    %89 = vector.shape_cast %88 : vector<4x8x128xf32> to vector<32x128xf32>
    %c2_55 = arith.constant 2 : index
    %c1_56 = arith.constant 1 : index
    %c0_57 = arith.constant 0 : index
    %c0_58 = arith.constant 0 : index
    %90 = vector.load %arg5[%c2_55, %c1_56, %c0_57, %c0_58] : memref<3x3x128x128xf32, #tpu.memory_space<vmem>>, vector<1x1x128x128xf32>
    %91 = vector.shape_cast %90 : vector<1x1x128x128xf32> to vector<128x128xf32>
    %cst_59 = arith.constant dense<0.000000e+00> : vector<32x128xf32>
    %92 = tpu.matmul %89, %91, %cst_59 {dimension_numbers = #tpu.dot_dimension_numbers<[1], [0], [0], [1], [0, 0, 1, 1], [], []>} : vector<32x128xf32>, vector<128x128xf32>, vector<32x128xf32> -> vector<32x128xf32>
    %93 = arith.addf %87, %92 : vector<32x128xf32>
    %94 = vector.extract_strided_slice %44 {offsets = [2, 2, 0], sizes = [4, 8, 128], strides = [1, 1, 1]} : vector<6x10x128xf32> to vector<4x8x128xf32>
    %95 = vector.shape_cast %94 : vector<4x8x128xf32> to vector<32x128xf32>
    %c2_60 = arith.constant 2 : index
    %c2_61 = arith.constant 2 : index
    %c0_62 = arith.constant 0 : index
    %c0_63 = arith.constant 0 : index
    %96 = vector.load %arg5[%c2_60, %c2_61, %c0_62, %c0_63] : memref<3x3x128x128xf32, #tpu.memory_space<vmem>>, vector<1x1x128x128xf32>
    %97 = vector.shape_cast %96 : vector<1x1x128x128xf32> to vector<128x128xf32>
    %cst_64 = arith.constant dense<0.000000e+00> : vector<32x128xf32>
    %98 = tpu.matmul %95, %97, %cst_64 {dimension_numbers = #tpu.dot_dimension_numbers<[1], [0], [0], [1], [0, 0, 1, 1], [], []>} : vector<32x128xf32>, vector<128x128xf32>, vector<32x128xf32> -> vector<32x128xf32>
    %99 = arith.addf %93, %98 : vector<32x128xf32>
    %c0_65 = arith.constant 0 : index
    %c0_66 = arith.constant 0 : index
    %100 = vector.load %arg6[%c0_65, %c0_66] : memref<1x128xf32, #tpu.memory_space<vmem>>, vector<1x128xf32>
    %101 = vector.broadcast %100 : vector<1x128xf32> to vector<32x128xf32>
    %102 = arith.addf %99, %101 : vector<32x128xf32>
    %cst_67 = arith.constant 0.000000e+00 : f32
    %103 = vector.broadcast %cst_67 : f32 to vector<32x128xf32>
    %104 = arith.cmpf oge, %102, %103 : vector<32x128xf32>
    %cst_68 = arith.constant 1.000000e-01 : f32
    %105 = vector.broadcast %cst_68 : f32 to vector<32x128xf32>
    %106 = arith.mulf %105, %102 : vector<32x128xf32>
    %107 = arith.select %104, %102, %106 : vector<32x128xi1>, vector<32x128xf32>
    %108 = vector.shape_cast %4 : vector<4x8x128xf32> to vector<32x128xf32>
    %109 = arith.addf %107, %108 : vector<32x128xf32>
    %110 = vector.shape_cast %109 : vector<32x128xf32> to vector<1x4x8x128xf32>
    %c0_69 = arith.constant 0 : index
    %c0_70 = arith.constant 0 : index
    %c0_71 = arith.constant 0 : index
    %c0_72 = arith.constant 0 : index
    %111 = vector.load %arg7[%c0_69, %c0_70, %c0_71, %c0_72] : memref<1x4x8x128xf32, #tpu.memory_space<vmem>>, vector<1x4x8x128xf32>
    tpu.vector_store %arg7[%c0_69, %c0_70, %c0_71, %c0_72], %110 {strides = array<i32>} : memref<1x4x8x128xf32, #tpu.memory_space<vmem>>, vector<1x4x8x128xf32>,
    return
  }
  func.func @transform_0(%arg0: i32, %arg1: i32) -> (i32, i32, i32, i32) {
    %c0_i32 = arith.constant 0 : i32
    %c0_i32_0 = arith.constant 0 : i32
    %c0_i32_1 = arith.constant 0 : i32
    %c0_i32_2 = arith.constant 0 : i32
    return %arg0, %c0_i32, %c0_i32_0, %c0_i32_1 : i32, i32, i32, i32
  }
  func.func @transform_1(%arg0: i32, %arg1: i32) -> (i32, i32) {
    %c0_i32 = arith.constant 0 : i32
    %c0_i32_0 = arith.constant 0 : i32
    %c0_i32_1 = arith.constant 0 : i32
    return %c0_i32, %c0_i32_0 : i32, i32
  }
  func.func @transform_2(%arg0: i32, %arg1: i32) -> (i32, i32) {
    %c0_i32 = arith.constant 0 : i32
    %c0_i32_0 = arith.constant 0 : i32
    %c0_i32_1 = arith.constant 0 : i32
    return %c0_i32, %c0_i32_0 : i32, i32
  }
  func.func @transform_3(%arg0: i32, %arg1: i32) -> (i32, i32, i32, i32) {
    %c0_i32 = arith.constant 0 : i32
    %c0_i32_0 = arith.constant 0 : i32
    %c0_i32_1 = arith.constant 0 : i32
    %c0_i32_2 = arith.constant 0 : i32
    %c0_i32_3 = arith.constant 0 : i32
    return %c0_i32, %c0_i32_0, %c0_i32_1, %c0_i32_2 : i32, i32, i32, i32
  }
  func.func @transform_4(%arg0: i32, %arg1: i32) -> (i32, i32) {
    %c0_i32 = arith.constant 0 : i32
    %c0_i32_0 = arith.constant 0 : i32
    %c0_i32_1 = arith.constant 0 : i32
    return %c0_i32, %c0_i32_0 : i32, i32
  }
  func.func @transform_5(%arg0: i32, %arg1: i32) -> (i32, i32, i32, i32) {
    %c0_i32 = arith.constant 0 : i32
    %c0_i32_0 = arith.constant 0 : i32
    %c0_i32_1 = arith.constant 0 : i32
    return %arg0, %arg1, %c0_i32, %c0_i32_0 : i32, i32, i32, i32
  }
}

</mosaic_0001>

<llo_original>
// kernel: res_block_forward.3
$region0: #{res_block_forward.3}
  #allocation0 [shape = 'u32[]', space=smem, size = 0x4, offset = 0x4, fixed_abs, tag = 'smem constant byte address 0x4 - core index']
  #allocation1 [shape = 'u32[144,128]{1,0:T(1,128)}', space=vmem, size = 0x12000, scoped, tag = 'internal scratch']
  %s0 = inlined_call_operand.vmem [shape: f32[2,4,9,9,128], index: 0, kind: input, shape index: {}]
  %s1 = inlined_call_operand.vmem [shape: f32[3,3,128,128], index: 1, kind: input, shape index: {}]
  %s2 = inlined_call_operand.vmem [shape: f32[1,128], index: 2, kind: input, shape index: {}]
  %s3 = inlined_call_operand.vmem [shape: f32[2,8,8,128], index: 3, kind: output, shape index: {}]
  %s4 = sld [smem:[#allocation0]]
  $region45: #{res_block_forward.3} parent=0
    _
  %s6 = ssub.s32 1, %s4
  %s7 = scalar_select 0, %s6, %s4
  loop: start=0, step=1, limit=6
  $region2: #{res_block_forward.3} parent=0 // loop_pre_header
    _
  $region3: #{res_block_forward.3} parent=0 // loop_header
    %s9 = sphi 0, %s13
    %p10 = scmp.ge.s32.totalorder %s9, 6
    %s16 = sphi 0, %s28
    %s17 = sphi 0, %s24
    %s18 = sphi 0, %s16
    %s19 = sphi 0, %s17
    %s20 = sphi 0, %s18
    %s21 = sphi 0, %s19
    %s31 = sphi 0, %s33
    %s34 = sphi 0, %s31
    %s35 = sphi 0, %s34
    %s51 = sphi 0, %s35
    %s55 = sphi 0, %s55
    %s57 = sphi 0, %s55
    %s58 = sphi 0, %s57
    %s72 = sphi 0, %s58
    %s76 = sphi 0, %s76
    %s78 = sphi 0, %s76
    %s79 = sphi 0, %s78
    %s93 = sphi 0, %s79
    %s101 = sphi 0, %s103
    %s104 = sphi 0, %s101
    %s105 = sphi 0, %s104
    %s121 = sphi 0, %s105
  $region4: #{res_block_forward.3} parent=0 // loop_header_branch
    %12 = sbr.rel (%p10) target = $region8
  $region5: #{res_block_forward.3} parent=0 // loop_body
    %s14 = ssub.s32 %s9, 1
    %s15 = ssub.s32 %s9, 2
    %s22 = sadd.s32 1, %s17
    %p23 = scmp.ge.s32.totalorder %s22, 2
    %s24 = scalar_select %p23, 0, %s22
    %s25 = sadd.s32 1, %s16
    %s26 = scalar_select %p23, %s25, %s16
    %p27 = scmp.ge.s32.totalorder %s26, 2
    %s28 = scalar_select %p27, 0, %s26
    %s29 = ssub.s32 %s16, %s28
    %p30 = scmp.eq.s32.totalorder %s29, 0
    %s32 = sadd.s32 %s31, 1
    %s33 = scalar_select %p30, %s31, %s32
    %p36 = pneg %p30
    %p37 = scmp.eq.s32.totalorder %s9, 3
    %p38 = por %p36, %p37
    %p39 = scmp.ne.s32.totalorder %s31, %s34
    %p40 = scmp.eq.s32.totalorder %s9, 0
    %p41 = por %p39, %p40
    %p42 = scmp.ne.s32.totalorder %s31, %s34
    %p43 = scmp.eq.s32.totalorder %s14, 3
    %p44 = por %p42, %p43
    %p45 = scmp.ne.s32.totalorder %s34, %s35
    %p46 = scmp.eq.s32.totalorder %s14, 0
    %p47 = por %p45, %p46
    %p48 = scmp.ne.s32.totalorder %s34, %s35
    %p49 = scmp.eq.s32.totalorder %s15, 3
    %p50 = por %p48, %p49
    %p52 = scmp.ne.s32.totalorder %s35, %s51
    %p53 = scmp.eq.s32.totalorder %s15, 0
    %p54 = por %p52, %p53
    %s56 = sadd.s32 %s55, 1
    %p59 = scmp.eq.s32.totalorder %s9, 3
    %p60 = scmp.ne.s32.totalorder %s55, %s57
    %p61 = scmp.eq.s32.totalorder %s9, 0
    %p62 = por %p60, %p61
    %p63 = scmp.ne.s32.totalorder %s55, %s57
    %p64 = scmp.eq.s32.totalorder %s14, 3
    %p65 = por %p63, %p64
    %p66 = scmp.ne.s32.totalorder %s57, %s58
    %p67 = scmp.eq.s32.totalorder %s14, 0
    %p68 = por %p66, %p67
    %p69 = scmp.ne.s32.totalorder %s57, %s58
    %p70 = scmp.eq.s32.totalorder %s15, 3
    %p71 = por %p69, %p70
    %p73 = scmp.ne.s32.totalorder %s58, %s72
    %p74 = scmp.eq.s32.totalorder %s15, 0
    %p75 = por %p73, %p74
    %s77 = sadd.s32 %s76, 1
    %p80 = scmp.eq.s32.totalorder %s9, 3
    %p81 = scmp.ne.s32.totalorder %s76, %s78
    %p82 = scmp.eq.s32.totalorder %s9, 0
    %p83 = por %p81, %p82
    %p84 = scmp.ne.s32.totalorder %s76, %s78
    %p85 = scmp.eq.s32.totalorder %s14, 3
    %p86 = por %p84, %p85
    %p87 = scmp.ne.s32.totalorder %s78, %s79
    %p88 = scmp.eq.s32.totalorder %s14, 0
    %p89 = por %p87, %p88
    %p90 = scmp.ne.s32.totalorder %s78, %s79
    %p91 = scmp.eq.s32.totalorder %s15, 3
    %p92 = por %p90, %p91
    %p94 = scmp.ne.s32.totalorder %s79, %s93
    %p95 = scmp.eq.s32.totalorder %s15, 0
    %p96 = por %p94, %p95
    %s97 = ssub.s32 %s16, %s28
    %s98 = ssub.s32 %s17, %s24
    %s99 = sor.u32 %s97, %s98
    %p100 = scmp.eq.s32.totalorder %s99, 0
    %s102 = sadd.s32 %s101, 1
    %s103 = scalar_select %p100, %s101, %s102
    %p106 = pneg %p100
    %p107 = scmp.eq.s32.totalorder %s9, 3
    %p108 = por %p106, %p107
    %p109 = scmp.ne.s32.totalorder %s101, %s104
    %p110 = scmp.eq.s32.totalorder %s9, 0
    %p111 = por %p109, %p110
    %p112 = scmp.ne.s32.totalorder %s101, %s104
    %p113 = scmp.eq.s32.totalorder %s14, 3
    %p114 = por %p112, %p113
    %p115 = scmp.ne.s32.totalorder %s104, %s105
    %p116 = scmp.eq.s32.totalorder %s14, 0
    %p117 = por %p115, %p116
    %p118 = scmp.ne.s32.totalorder %s104, %s105
    %p119 = scmp.eq.s32.totalorder %s15, 3
    %p120 = por %p118, %p119
    %p122 = scmp.ne.s32.totalorder %s105, %s121
    %p123 = scmp.eq.s32.totalorder %s15, 0
    %p124 = por %p122, %p123
    %p125 = scmp.le.s32.totalorder 1, %s9
    %p126 = scmp.lt.s32.totalorder %s9, 5
    %p127 = pnand %p125, %p126
    %p128 = pneg %p127
    // Predicated region
    $region9: #{res_block_forward.3} parent=5 // pred_check
      _
    $region10: #{res_block_forward.3} parent=5 // pred_check_branch
      %130 = sbr.rel (%p127) target = $region12
    $region11: #{res_block_forward.3} parent=5 // pred_region
      %s131 = ssub.s32 %s9, 1
      // Predicated region
      $region13: #{res_block_forward.3} parent=11 // pred_check
        %p132 = pneg %p68
      $region14: #{res_block_forward.3} parent=11 // pred_check_branch
        %134 = sbr.rel (%p132) target = $region16
      $region15: #{res_block_forward.3} parent=11 // pred_region
        _
      $region16: #{res_block_forward.3} parent=11 // pred_fallthru
        _
      // Predicated region
      $region17: #{res_block_forward.3} parent=11 // pred_check
        %p135 = pneg %p89
      $region18: #{res_block_forward.3} parent=11 // pred_check_branch
        %137 = sbr.rel (%p135) target = $region20
      $region19: #{res_block_forward.3} parent=11 // pred_region
        _
      $region20: #{res_block_forward.3} parent=11 // pred_fallthru
        _
    $region12: #{res_block_forward.3} parent=5 // pred_fallthru
      _
    %p138 = scmp.lt.s32.totalorder %s9, 4
    // Predicated region
    $region21: #{res_block_forward.3} parent=5 // pred_check
      %p139 = pneg %p138
    $region22: #{res_block_forward.3} parent=5 // pred_check_branch
      %141 = sbr.rel (%p139) target = $region24
    $region23: #{res_block_forward.3} parent=5 // pred_region
      // Predicated region
      $region25: #{res_block_forward.3} parent=23 // pred_check
        %p142 = pneg %p41
      $region26: #{res_block_forward.3} parent=23 // pred_check_branch
        %144 = sbr.rel (%p142) target = $region28
      $region27: #{res_block_forward.3} parent=23 // pred_region
        %p145 = scmp.lt.s32.totalorder %s16, 1
        %s146 = scalar_select %p145, %s16, 1
        %s147 = smul.addr %s146, 72
        %s148 = smul.addr %s147, 8
        %s149 = scalar_lea.vmem %s0, %s148
      $region28: #{res_block_forward.3} parent=23 // pred_fallthru
        _
    $region24: #{res_block_forward.3} parent=5 // pred_fallthru
      _
    %p150 = scmp.le.s32.totalorder 1, %s9
    %p151 = scmp.lt.s32.totalorder %s9, 5
    %p152 = pnand %p150, %p151
    %p153 = pneg %p152
    // Predicated region
    $region29: #{res_block_forward.3} parent=5 // pred_check
      _
    $region30: #{res_block_forward.3} parent=5 // pred_check_branch
      %155 = sbr.rel (%p152) target = $region32
    $region31: #{res_block_forward.3} parent=5 // pred_region
      %s156 = ssub.s32 %s9, 1
      %p157 = scmp.lt.s32.totalorder %s18, 1
      %s158 = scalar_select %p157, %s18, 1
      %s159 = smul.addr %s158, 72
      %s160 = smul.addr %s159, 8
      %s161 = scalar_lea.vmem %s0, %s160
      %p162 = pneg %p47
      %p163 = pneg %p44
      %p164 = pneg %p68
      %p165 = pneg %p65
      %p166 = pneg %p89
      %p167 = pneg %p86
      %p168 = pneg %p117
      %p169 = pneg %p114
      %s170 = smul.u32 4, %s19
      %p171 = scmp.lt.s32.totalorder %s18, 1
      %s172 = scalar_select %p171, %s18, 1
      %p173 = scmp.lt.s32.totalorder %s170, 7
      %s174 = scalar_select %p173, %s170, 7
      %s175 = smul.addr %s172, 8
      %s176 = sadd.s32 %s174, %s175
      %s177 = smul.addr %s176, 8
      %s178 = scalar_lea.vmem %s3, %s177
      %p179 = scmp.lt.s32.totalorder %s18, 1
      %s180 = scalar_select %p179, %s18, 1
      %s181 = smul.addr %s180, 72
      %s182 = smul.addr %s181, 8
      %s183 = scalar_lea.vmem %s0, %s182
      %s184 = smul.u32 4, %s19
      %p185 = scmp.lt.s32.totalorder %s18, 1
      %s186 = scalar_select %p185, %s18, 1
      %p187 = scmp.lt.s32.totalorder %s184, 7
      %s188 = scalar_select %p187, %s184, 7
      %s189 = smul.addr %s186, 8
      %s190 = sadd.s32 %s188, %s189
      %s191 = smul.addr %s190, 8
      %s192 = scalar_lea.vmem %s3, %s191
      %s193 = smul.u32 4, %s19
      %s194 = smul.u32 %s19, 4
      %s195 = smul.u32 %s194, 16
      %s196 = scalar_lea.vmem %s183, %s195
      %v197 = vld [vmem:[%s196] sm:$0xff]
      %v198 = vld [vmem:[%s196 + $0x10] sm:$0xff]
      %v199 = vld [vmem:[%s196 + $0x20] sm:$0xff]
      %v200 = vld [vmem:[%s196 + $0x30] sm:$0xff]
      %v201 = vld [vmem:[%s1] sm:$0xff]
      %v202 = vld [vmem:[%s1 + $0x8] sm:$0xff]
      %v203 = vld [vmem:[%s1 + $0x10] sm:$0xff]
      %v204 = vld [vmem:[%s1 + $0x18] sm:$0xff]
      %v205 = vld [vmem:[%s1 + $0x20] sm:$0xff]
      %v206 = vld [vmem:[%s1 + $0x28] sm:$0xff]
      %v207 = vld [vmem:[%s1 + $0x30] sm:$0xff]
      %v208 = vld [vmem:[%s1 + $0x38] sm:$0xff]
      %v209 = vld [vmem:[%s1 + $0x40] sm:$0xff]
      %v210 = vld [vmem:[%s1 + $0x48] sm:$0xff]
      %v211 = vld [vmem:[%s1 + $0x50] sm:$0xff]
      %v212 = vld [vmem:[%s1 + $0x58] sm:$0xff]
      %v213 = vld [vmem:[%s1 + $0x60] sm:$0xff]
      %v214 = vld [vmem:[%s1 + $0x68] sm:$0xff]
      %v215 = vld [vmem:[%s1 + $0x70] sm:$0xff]
      %v216 = vld [vmem:[%s1 + $0x78] sm:$0xff]
      %s217 = sadd.s32 %s195, 144
      %s218 = scalar_lea.vmem %s183, %s217
      %v219 = vld [vmem:[%s218] sm:$0xff]
      %v220 = vld [vmem:[%s218 + $0x10] sm:$0xff]
      %v221 = vld [vmem:[%s218 + $0x20] sm:$0xff]
      %v222 = vld [vmem:[%s218 + $0x30] sm:$0xff]
      %s223 = scalar_lea.vmem %s1, 128
      %v224 = vld [vmem:[%s223] sm:$0xff]
      %v225 = vld [vmem:[%s223 + $0x8] sm:$0xff]
      %v226 = vld [vmem:[%s223 + $0x10] sm:$0xff]
      %v227 = vld [vmem:[%s223 + $0x18] sm:$0xff]
      %v228 = vld [vmem:[%s223 + $0x20] sm:$0xff]
      %v229 = vld [vmem:[%s223 + $0x28] sm:$0xff]
      %v230 = vld [vmem:[%s223 + $0x30] sm:$0xff]
      %v231 = vld [vmem:[%s223 + $0x38] sm:$0xff]
      %v232 = vld [vmem:[%s223 + $0x40] sm:$0xff]
      %v233 = vld [vmem:[%s223 + $0x48] sm:$0xff]
      %v234 = vld [vmem:[%s223 + $0x50] sm:$0xff]
      %v235 = vld [vmem:[%s223 + $0x58] sm:$0xff]
      %v236 = vld [vmem:[%s223 + $0x60] sm:$0xff]
      %v237 = vld [vmem:[%s223 + $0x68] sm:$0xff]
      %v238 = vld [vmem:[%s223 + $0x70] sm:$0xff]
      %v239 = vld [vmem:[%s223 + $0x78] sm:$0xff]
      %240 = vmatprep.subr.mxu0 0.0
      %241 = vmatpush1.msra.mxu0 %v239
      %242 = vmatprep.subr.mxu0 0.0
      %243 = vmatpush1.msra.mxu0 %v238
      %244 = vmatprep.subr.mxu0 0.0
      %245 = vmatpush1.msra.mxu0 %v237
      %246 = vmatprep.subr.mxu0 0.0
      %247 = vmatpush1.msra.mxu0 %v236
      %248 = vmatprep.subr.mxu0 0.0
      %249 = vmatpush1.msra.mxu0 %v235
      %250 = vmatprep.subr.mxu0 0.0
      %251 = vmatpush1.msra.mxu0 %v234
      %252 = vmatprep.subr.mxu0 0.0
      %253 = vmatpush1.msra.mxu0 %v233
      %254 = vmatprep.subr.mxu0 0.0
      %255 = vmatpush1.msra.mxu0 %v232
      %256 = vmatprep.subr.mxu0 0.0
      %257 = vmatpush1.msra.mxu0 %v231
      %258 = vmatprep.subr.mxu0 0.0
      %259 = vmatpush1.msra.mxu0 %v230
      %260 = vmatprep.subr.mxu0 0.0
      %261 = vmatpush1.msra.mxu0 %v229
      %262 = vmatprep.subr.mxu0 0.0
      %263 = vmatpush1.msra.mxu0 %v228
      %264 = vmatprep.subr.mxu0 0.0
      %265 = vmatpush1.msra.mxu0 %v227
      %266 = vmatprep.subr.mxu0 0.0
      %267 = vmatpush1.msra.mxu0 %v226
      %268 = vmatprep.subr.mxu0 0.0
      %269 = vmatpush1.msra.mxu0 %v225
      %270 = vmatprep.subr.mxu0 0.0
      %271 = vmatpush1.msra.mxu0 %v224
      %272 = vmatprep.subr.mxu0 0.0
      %273 = vmatpush2.msra.mxu0 0.0
      %274 = vmatprep.subr.mxu0 0.0
      %275 = vmatpush2.msra.mxu0 0.0
      %276 = vmatprep.subr.mxu0 0.0
      %277 = vmatpush2.msra.mxu0 0.0
      %278 = vmatprep.subr.mxu0 0.0
      %279 = vmatpush2.msra.mxu0 0.0
      %280 = vmatprep.subr.mxu0 0.0
      %281 = vmatpush2.msra.mxu0 0.0
      %282 = vmatprep.subr.mxu0 0.0
      %283 = vmatpush2.msra.mxu0 0.0
      %284 = vmatprep.subr.mxu0 0.0
      %285 = vmatpush2.msra.mxu0 0.0
      %286 = vmatprep.subr.mxu0 0.0
      %287 = vmatpush2.msra.mxu0 0.0
      %288 = vmatprep.subr.mxu0 0.0
      %289 = vmatpush2.msra.mxu0 0.0
      %290 = vmatprep.subr.mxu0 0.0
      %291 = vmatpush2.msra.mxu0 0.0
      %292 = vmatprep.subr.mxu0 0.0
      %293 = vmatpush2.msra.mxu0 0.0
      %294 = vmatprep.subr.mxu0 0.0
      %295 = vmatpush2.msra.mxu0 0.0
      %296 = vmatprep.subr.mxu0 0.0
      %297 = vmatpush2.msra.mxu0 0.0
      %298 = vmatprep.subr.mxu0 0.0
      %299 = vmatpush2.msra.mxu0 0.0
      %300 = vmatprep.subr.mxu0 0.0
      %301 = vmatpush2.msra.mxu0 0.0
      %302 = vmatprep.subr.mxu0 0.0
      %303 = vmatpush2.msra.mxu0 0.0
      %304 = vmatprep.mubr.f32.mxu0 0.0
      %305 = vmatmul.mubr.f32.gmra.mxu0 %v219
      %v306 = vpop.f32.mrf.mxu0
      %v307 = vadd.f32 0.0, %v306
      %v308 = vpop.f32.mrf.mxu0
      %309 = vmatprep.mubr.f32.mxu0 0.0
      %310 = vmatmul.mubr.f32.gmra.mxu0 %v220
      %v311 = vpop.f32.mrf.mxu0
      %v312 = vadd.f32 0.0, %v311
      %v313 = vpop.f32.mrf.mxu0
      %314 = vmatprep.mubr.f32.mxu0 0.0
      %315 = vmatmul.mubr.f32.gmra.mxu0 %v221
      %v316 = vpop.f32.mrf.mxu0
      %v317 = vadd.f32 0.0, %v316
      %v318 = vpop.f32.mrf.mxu0
      %319 = vmatprep.mubr.f32.mxu0 0.0
      %320 = vmatmul.mubr.f32.gmra.mxu0 %v222
      %v321 = vpop.f32.mrf.mxu0
      %v322 = vadd.f32 0.0, %v321
      %v323 = vpop.f32.mrf.mxu0
      %324 = vdwg.mxu0
      %325 = vmatprep.subr.mxu0 0.0
      %326 = vmatpush1.msra.mxu0 %v216
      %327 = vmatprep.subr.mxu0 0.0
      %328 = vmatpush1.msra.mxu0 %v215
      %329 = vmatprep.subr.mxu0 0.0
      %330 = vmatpush1.msra.mxu0 %v214
      %331 = vmatprep.subr.mxu0 0.0
      %332 = vmatpush1.msra.mxu0 %v213
      %333 = vmatprep.subr.mxu0 0.0
      %334 = vmatpush1.msra.mxu0 %v212
      %335 = vmatprep.subr.mxu0 0.0
      %336 = vmatpush1.msra.mxu0 %v211
      %337 = vmatprep.subr.mxu0 0.0
      %338 = vmatpush1.msra.mxu0 %v210
      %339 = vmatprep.subr.mxu0 0.0
      %340 = vmatpush1.msra.mxu0 %v209
      %341 = vmatprep.subr.mxu0 0.0
      %342 = vmatpush1.msra.mxu0 %v208
      %343 = vmatprep.subr.mxu0 0.0
      %344 = vmatpush1.msra.mxu0 %v207
      %345 = vmatprep.subr.mxu0 0.0
      %346 = vmatpush1.msra.mxu0 %v206
      %347 = vmatprep.subr.mxu0 0.0
      %348 = vmatpush1.msra.mxu0 %v205
      %349 = vmatprep.subr.mxu0 0.0
      %350 = vmatpush1.msra.mxu0 %v204
      %351 = vmatprep.subr.mxu0 0.0
      %352 = vmatpush1.msra.mxu0 %v203
      %353 = vmatprep.subr.mxu0 0.0
      %354 = vmatpush1.msra.mxu0 %v202
      %355 = vmatprep.subr.mxu0 0.0
      %356 = vmatpush1.msra.mxu0 %v201
      %357 = vmatprep.subr.mxu0 0.0
      %358 = vmatpush2.msra.mxu0 0.0
      %359 = vmatprep.subr.mxu0 0.0
      %360 = vmatpush2.msra.mxu0 0.0
      %361 = vmatprep.subr.mxu0 0.0
      %362 = vmatpush2.msra.mxu0 0.0
      %363 = vmatprep.subr.mxu0 0.0
      %364 = vmatpush2.msra.mxu0 0.0
      %365 = vmatprep.subr.mxu0 0.0
      %366 = vmatpush2.msra.mxu0 0.0
      %367 = vmatprep.subr.mxu0 0.0
      %368 = vmatpush2.msra.mxu0 0.0
      %369 = vmatprep.subr.mxu0 0.0
      %370 = vmatpush2.msra.mxu0 0.0
      %371 = vmatprep.subr.mxu0 0.0
      %372 = vmatpush2.msra.mxu0 0.0
      %373 = vmatprep.subr.mxu0 0.0
      %374 = vmatpush2.msra.mxu0 0.0
      %375 = vmatprep.subr.mxu0 0.0
      %376 = vmatpush2.msra.mxu0 0.0
      %377 = vmatprep.subr.mxu0 0.0
      %378 = vmatpush2.msra.mxu0 0.0
      %379 = vmatprep.subr.mxu0 0.0
      %380 = vmatpush2.msra.mxu0 0.0
      %381 = vmatprep.subr.mxu0 0.0
      %382 = vmatpush2.msra.mxu0 0.0
      %383 = vmatprep.subr.mxu0 0.0
      %384 = vmatpush2.msra.mxu0 0.0
      %385 = vmatprep.subr.mxu0 0.0
      %386 = vmatpush2.msra.mxu0 0.0
      %387 = vmatprep.subr.mxu0 0.0
      %388 = vmatpush2.msra.mxu0 0.0
      %389 = vmatprep.mubr.f32.mxu0 0.0
      %390 = vmatmul.mubr.f32.gmra.mxu0 %v197
      %v391 = vpop.f32.mrf.mxu0
      %v392 = vadd.f32 %v307, %v391
      %v393 = vpop.f32.mrf.mxu0
      %394 = vmatprep.mubr.f32.mxu0 0.0
      %395 = vmatmul.mubr.f32.gmra.mxu0 %v198
      %v396 = vpop.f32.mrf.mxu0
      %v397 = vadd.f32 %v312, %v396
      %v398 = vpop.f32.mrf.mxu0
      %399 = vmatprep.mubr.f32.mxu0 0.0
      %400 = vmatmul.mubr.f32.gmra.mxu0 %v199
      %v401 = vpop.f32.mrf.mxu0
      %v402 = vadd.f32 %v317, %v401
      %v403 = vpop.f32.mrf.mxu0
      %404 = vmatprep.mubr.f32.mxu0 0.0
      %405 = vmatmul.mubr.f32.gmra.mxu0 %v200
      %v406 = vpop.f32.mrf.mxu0
      %v407 = vadd.f32 %v322, %v406
      %v408 = vpop.f32.mrf.mxu0
      %409 = vdwg.mxu0
      %v410 = vld [vmem:[%s196 + $0x1] sm:$0xff]
      %v411 = vld [vmem:[%s196 + $0x11] sm:$0xff]
      %v412 = vld [vmem:[%s196 + $0x21] sm:$0xff]
      %v413 = vld [vmem:[%s196 + $0x31] sm:$0xff]
      %s414 = scalar_lea.vmem %s1, 256
      %v415 = vld [vmem:[%s414] sm:$0xff]
      %v416 = vld [vmem:[%s414 + $0x8] sm:$0xff]
      %v417 = vld [vmem:[%s414 + $0x10] sm:$0xff]
      %v418 = vld [vmem:[%s414 + $0x18] sm:$0xff]
      %v419 = vld [vmem:[%s414 + $0x20] sm:$0xff]
      %v420 = vld [vmem:[%s414 + $0x28] sm:$0xff]
      %v421 = vld [vmem:[%s414 + $0x30] sm:$0xff]
      %v422 = vld [vmem:[%s414 + $0x38] sm:$0xff]
      %v423 = vld [vmem:[%s414 + $0x40] sm:$0xff]
      %v424 = vld [vmem:[%s414 + $0x48] sm:$0xff]
      %v425 = vld [vmem:[%s414 + $0x50] sm:$0xff]
      %v426 = vld [vmem:[%s414 + $0x58] sm:$0xff]
      %v427 = vld [vmem:[%s414 + $0x60] sm:$0xff]
      %v428 = vld [vmem:[%s414 + $0x68] sm:$0xff]
      %v429 = vld [vmem:[%s414 + $0x70] sm:$0xff]
      %v430 = vld [vmem:[%s414 + $0x78] sm:$0xff]
      %431 = vmatprep.subr.mxu0 0.0
      %432 = vmatpush1.msra.mxu0 %v430
      %433 = vmatprep.subr.mxu0 0.0
      %434 = vmatpush1.msra.mxu0 %v429
      %435 = vmatprep.subr.mxu0 0.0
      %436 = vmatpush1.msra.mxu0 %v428
      %437 = vmatprep.subr.mxu0 0.0
      %438 = vmatpush1.msra.mxu0 %v427
      %439 = vmatprep.subr.mxu0 0.0
      %440 = vmatpush1.msra.mxu0 %v426
      %441 = vmatprep.subr.mxu0 0.0
      %442 = vmatpush1.msra.mxu0 %v425
      %443 = vmatprep.subr.mxu0 0.0
      %444 = vmatpush1.msra.mxu0 %v424
      %445 = vmatprep.subr.mxu0 0.0
      %446 = vmatpush1.msra.mxu0 %v423
      %447 = vmatprep.subr.mxu0 0.0
      %448 = vmatpush1.msra.mxu0 %v422
      %449 = vmatprep.subr.mxu0 0.0
      %450 = vmatpush1.msra.mxu0 %v421
      %451 = vmatprep.subr.mxu0 0.0
      %452 = vmatpush1.msra.mxu0 %v420
      %453 = vmatprep.subr.mxu0 0.0
      %454 = vmatpush1.msra.mxu0 %v419
      %455 = vmatprep.subr.mxu0 0.0
      %456 = vmatpush1.msra.mxu0 %v418
      %457 = vmatprep.subr.mxu0 0.0
      %458 = vmatpush1.msra.mxu0 %v417
      %459 = vmatprep.subr.mxu0 0.0
      %460 = vmatpush1.msra.mxu0 %v416
      %461 = vmatprep.subr.mxu0 0.0
      %462 = vmatpush1.msra.mxu0 %v415
      %463 = vmatprep.subr.mxu0 0.0
      %464 = vmatpush2.msra.mxu0 0.0
      %465 = vmatprep.subr.mxu0 0.0
      %466 = vmatpush2.msra.mxu0 0.0
      %467 = vmatprep.subr.mxu0 0.0
      %468 = vmatpush2.msra.mxu0 0.0
      %469 = vmatprep.subr.mxu0 0.0
      %470 = vmatpush2.msra.mxu0 0.0
      %471 = vmatprep.subr.mxu0 0.0
      %472 = vmatpush2.msra.mxu0 0.0
      %473 = vmatprep.subr.mxu0 0.0
      %474 = vmatpush2.msra.mxu0 0.0
      %475 = vmatprep.subr.mxu0 0.0
      %476 = vmatpush2.msra.mxu0 0.0
      %477 = vmatprep.subr.mxu0 0.0
      %478 = vmatpush2.msra.mxu0 0.0
      %479 = vmatprep.subr.mxu0 0.0
      %480 = vmatpush2.msra.mxu0 0.0
      %481 = vmatprep.subr.mxu0 0.0
      %482 = vmatpush2.msra.mxu0 0.0
      %483 = vmatprep.subr.mxu0 0.0
      %484 = vmatpush2.msra.mxu0 0.0
      %485 = vmatprep.subr.mxu0 0.0
      %486 = vmatpush2.msra.mxu0 0.0
      %487 = vmatprep.subr.mxu0 0.0
      %488 = vmatpush2.msra.mxu0 0.0
      %489 = vmatprep.subr.mxu0 0.0
      %490 = vmatpush2.msra.mxu0 0.0
      %491 = vmatprep.subr.mxu0 0.0
      %492 = vmatpush2.msra.mxu0 0.0
      %493 = vmatprep.subr.mxu0 0.0
      %494 = vmatpush2.msra.mxu0 0.0
      %495 = vmatprep.mubr.f32.mxu0 0.0
      %496 = vmatmul.mubr.f32.gmra.mxu0 %v410
      %v497 = vpop.f32.mrf.mxu0
      %v498 = vadd.f32 0.0, %v497
      %v499 = vpop.f32.mrf.mxu0
      %500 = vmatprep.mubr.f32.mxu0 0.0
      %501 = vmatmul.mubr.f32.gmra.mxu0 %v411
      %v502 = vpop.f32.mrf.mxu0
      %v503 = vadd.f32 0.0, %v502
      %v504 = vpop.f32.mrf.mxu0
      %505 = vmatprep.mubr.f32.mxu0 0.0
      %506 = vmatmul.mubr.f32.gmra.mxu0 %v412
      %v507 = vpop.f32.mrf.mxu0
      %v508 = vadd.f32 0.0, %v507
      %v509 = vpop.f32.mrf.mxu0
      %510 = vmatprep.mubr.f32.mxu0 0.0
      %511 = vmatmul.mubr.f32.gmra.mxu0 %v413
      %v512 = vpop.f32.mrf.mxu0
      %v513 = vadd.f32 0.0, %v512
      %v514 = vpop.f32.mrf.mxu0
      %515 = vdwg.mxu0
      %v516 = vadd.f32 %v392, %v498
      %v517 = vadd.f32 %v397, %v503
      %v518 = vadd.f32 %v402, %v508
      %v519 = vadd.f32 %v407, %v513
      %s520 = sadd.s32 %s195, 288
      %s521 = scalar_lea.vmem %s183, %s520
      %v522 = vld [vmem:[%s521] sm:$0xff]
      %v523 = vld [vmem:[%s521 + $0x10] sm:$0xff]
      %v524 = vld [vmem:[%s521 + $0x20] sm:$0xff]
      %v525 = vld [vmem:[%s521 + $0x30] sm:$0xff]
      %s526 = scalar_lea.vmem %s1, 384
      %v527 = vld [vmem:[%s526] sm:$0xff]
      %v528 = vld [vmem:[%s526 + $0x8] sm:$0xff]
      %v529 = vld [vmem:[%s526 + $0x10] sm:$0xff]
      %v530 = vld [vmem:[%s526 + $0x18] sm:$0xff]
      %v531 = vld [vmem:[%s526 + $0x20] sm:$0xff]
      %v532 = vld [vmem:[%s526 + $0x28] sm:$0xff]
      %v533 = vld [vmem:[%s526 + $0x30] sm:$0xff]
      %v534 = vld [vmem:[%s526 + $0x38] sm:$0xff]
      %v535 = vld [vmem:[%s526 + $0x40] sm:$0xff]
      %v536 = vld [vmem:[%s526 + $0x48] sm:$0xff]
      %v537 = vld [vmem:[%s526 + $0x50] sm:$0xff]
      %v538 = vld [vmem:[%s526 + $0x58] sm:$0xff]
      %v539 = vld [vmem:[%s526 + $0x60] sm:$0xff]
      %v540 = vld [vmem:[%s526 + $0x68] sm:$0xff]
      %v541 = vld [vmem:[%s526 + $0x70] sm:$0xff]
      %v542 = vld [vmem:[%s526 + $0x78] sm:$0xff]
      %543 = vmatprep.subr.mxu0 0.0
      %544 = vmatpush1.msra.mxu0 %v542
      %545 = vmatprep.subr.mxu0 0.0
      %546 = vmatpush1.msra.mxu0 %v541
      %547 = vmatprep.subr.mxu0 0.0
      %548 = vmatpush1.msra.mxu0 %v540
      %549 = vmatprep.subr.mxu0 0.0
      %550 = vmatpush1.msra.mxu0 %v539
      %551 = vmatprep.subr.mxu0 0.0
      %552 = vmatpush1.msra.mxu0 %v538
      %553 = vmatprep.subr.mxu0 0.0
      %554 = vmatpush1.msra.mxu0 %v537
      %555 = vmatprep.subr.mxu0 0.0
      %556 = vmatpush1.msra.mxu0 %v536
      %557 = vmatprep.subr.mxu0 0.0
      %558 = vmatpush1.msra.mxu0 %v535
      %559 = vmatprep.subr.mxu0 0.0
      %560 = vmatpush1.msra.mxu0 %v534
      %561 = vmatprep.subr.mxu0 0.0
      %562 = vmatpush1.msra.mxu0 %v533
      %563 = vmatprep.subr.mxu0 0.0
      %564 = vmatpush1.msra.mxu0 %v532
      %565 = vmatprep.subr.mxu0 0.0
      %566 = vmatpush1.msra.mxu0 %v531
      %567 = vmatprep.subr.mxu0 0.0
      %568 = vmatpush1.msra.mxu0 %v530
      %569 = vmatprep.subr.mxu0 0.0
      %570 = vmatpush1.msra.mxu0 %v529
      %571 = vmatprep.subr.mxu0 0.0
      %572 = vmatpush1.msra.mxu0 %v528
      %573 = vmatprep.subr.mxu0 0.0
      %574 = vmatpush1.msra.mxu0 %v527
      %575 = vmatprep.subr.mxu0 0.0
      %576 = vmatpush2.msra.mxu0 0.0
      %577 = vmatprep.subr.mxu0 0.0
      %578 = vmatpush2.msra.mxu0 0.0
      %579 = vmatprep.subr.mxu0 0.0
      %580 = vmatpush2.msra.mxu0 0.0
      %581 = vmatprep.subr.mxu0 0.0
      %582 = vmatpush2.msra.mxu0 0.0
      %583 = vmatprep.subr.mxu0 0.0
      %584 = vmatpush2.msra.mxu0 0.0
      %585 = vmatprep.subr.mxu0 0.0
      %586 = vmatpush2.msra.mxu0 0.0
      %587 = vmatprep.subr.mxu0 0.0
      %588 = vmatpush2.msra.mxu0 0.0
      %589 = vmatprep.subr.mxu0 0.0
      %590 = vmatpush2.msra.mxu0 0.0
      %591 = vmatprep.subr.mxu0 0.0
      %592 = vmatpush2.msra.mxu0 0.0
      %593 = vmatprep.subr.mxu0 0.0
      %594 = vmatpush2.msra.mxu0 0.0
      %595 = vmatprep.subr.mxu0 0.0
      %596 = vmatpush2.msra.mxu0 0.0
      %597 = vmatprep.subr.mxu0 0.0
      %598 = vmatpush2.msra.mxu0 0.0
      %599 = vmatprep.subr.mxu0 0.0
      %600 = vmatpush2.msra.mxu0 0.0
      %601 = vmatprep.subr.mxu0 0.0
      %602 = vmatpush2.msra.mxu0 0.0
      %603 = vmatprep.subr.mxu0 0.0
      %604 = vmatpush2.msra.mxu0 0.0
      %605 = vmatprep.subr.mxu0 0.0
      %606 = vmatpush2.msra.mxu0 0.0
      %607 = vmatprep.mubr.f32.mxu0 0.0
      %608 = vmatmul.mubr.f32.gmra.mxu0 %v522
      %v609 = vpop.f32.mrf.mxu0
      %v610 = vadd.f32 0.0, %v609
      %v611 = vpop.f32.mrf.mxu0
      %612 = vmatprep.mubr.f32.mxu0 0.0
      %613 = vmatmul.mubr.f32.gmra.mxu0 %v523
      %v614 = vpop.f32.mrf.mxu0
      %v615 = vadd.f32 0.0, %v614
      %v616 = vpop.f32.mrf.mxu0
      %617 = vmatprep.mubr.f32.mxu0 0.0
      %618 = vmatmul.mubr.f32.gmra.mxu0 %v524
      %v619 = vpop.f32.mrf.mxu0
      %v620 = vadd.f32 0.0, %v619
      %v621 = vpop.f32.mrf.mxu0
      %622 = vmatprep.mubr.f32.mxu0 0.0
      %623 = vmatmul.mubr.f32.gmra.mxu0 %v525
      %v624 = vpop.f32.mrf.mxu0
      %v625 = vadd.f32 0.0, %v624
      %v626 = vpop.f32.mrf.mxu0
      %627 = vdwg.mxu0
      %v628 = vadd.f32 %v516, %v610
      %v629 = vadd.f32 %v517, %v615
      %v630 = vadd.f32 %v518, %v620
      %v631 = vadd.f32 %v519, %v625
      %s632 = sadd.s32 %s195, 432
      %s633 = scalar_lea.vmem %s183, %s632
      %v634 = vld [vmem:[%s633] sm:$0xff]
      %v635 = vld [vmem:[%s633 + $0x10] sm:$0xff]
      %v636 = vld [vmem:[%s633 + $0x20] sm:$0xff]
      %v637 = vld [vmem:[%s633 + $0x30] sm:$0xff]
      %s638 = scalar_lea.vmem %s1, 512
      %v639 = vld [vmem:[%s638] sm:$0xff]
      %v640 = vld [vmem:[%s638 + $0x8] sm:$0xff]
      %v641 = vld [vmem:[%s638 + $0x10] sm:$0xff]
      %v642 = vld [vmem:[%s638 + $0x18] sm:$0xff]
      %v643 = vld [vmem:[%s638 + $0x20] sm:$0xff]
      %v644 = vld [vmem:[%s638 + $0x28] sm:$0xff]
      %v645 = vld [vmem:[%s638 + $0x30] sm:$0xff]
      %v646 = vld [vmem:[%s638 + $0x38] sm:$0xff]
      %v647 = vld [vmem:[%s638 + $0x40] sm:$0xff]
      %v648 = vld [vmem:[%s638 + $0x48] sm:$0xff]
      %v649 = vld [vmem:[%s638 + $0x50] sm:$0xff]
      %v650 = vld [vmem:[%s638 + $0x58] sm:$0xff]
      %v651 = vld [vmem:[%s638 + $0x60] sm:$0xff]
      %v652 = vld [vmem:[%s638 + $0x68] sm:$0xff]
      %v653 = vld [vmem:[%s638 + $0x70] sm:$0xff]
      %v654 = vld [vmem:[%s638 + $0x78] sm:$0xff]
      %655 = vmatprep.subr.mxu0 0.0
      %656 = vmatpush1.msra.mxu0 %v654
      %657 = vmatprep.subr.mxu0 0.0
      %658 = vmatpush1.msra.mxu0 %v653
      %659 = vmatprep.subr.mxu0 0.0
      %660 = vmatpush1.msra.mxu0 %v652
      %661 = vmatprep.subr.mxu0 0.0
      %662 = vmatpush1.msra.mxu0 %v651
      %663 = vmatprep.subr.mxu0 0.0
      %664 = vmatpush1.msra.mxu0 %v650
      %665 = vmatprep.subr.mxu0 0.0
      %666 = vmatpush1.msra.mxu0 %v649
      %667 = vmatprep.subr.mxu0 0.0
      %668 = vmatpush1.msra.mxu0 %v648
      %669 = vmatprep.subr.mxu0 0.0
      %670 = vmatpush1.msra.mxu0 %v647
      %671 = vmatprep.subr.mxu0 0.0
      %672 = vmatpush1.msra.mxu0 %v646
      %673 = vmatprep.subr.mxu0 0.0
      %674 = vmatpush1.msra.mxu0 %v645
      %675 = vmatprep.subr.mxu0 0.0
      %676 = vmatpush1.msra.mxu0 %v644
      %677 = vmatprep.subr.mxu0 0.0
      %678 = vmatpush1.msra.mxu0 %v643
      %679 = vmatprep.subr.mxu0 0.0
      %680 = vmatpush1.msra.mxu0 %v642
      %681 = vmatprep.subr.mxu0 0.0
      %682 = vmatpush1.msra.mxu0 %v641
      %683 = vmatprep.subr.mxu0 0.0
      %684 = vmatpush1.msra.mxu0 %v640
      %685 = vmatprep.subr.mxu0 0.0
      %686 = vmatpush1.msra.mxu0 %v639
      %687 = vmatprep.subr.mxu0 0.0
      %688 = vmatpush2.msra.mxu0 0.0
      %689 = vmatprep.subr.mxu0 0.0
      %690 = vmatpush2.msra.mxu0 0.0
      %691 = vmatprep.subr.mxu0 0.0
      %692 = vmatpush2.msra.mxu0 0.0
      %693 = vmatprep.subr.mxu0 0.0
      %694 = vmatpush2.msra.mxu0 0.0
      %695 = vmatprep.subr.mxu0 0.0
      %696 = vmatpush2.msra.mxu0 0.0
      %697 = vmatprep.subr.mxu0 0.0
      %698 = vmatpush2.msra.mxu0 0.0
      %699 = vmatprep.subr.mxu0 0.0
      %700 = vmatpush2.msra.mxu0 0.0
      %701 = vmatprep.subr.mxu0 0.0
      %702 = vmatpush2.msra.mxu0 0.0
      %703 = vmatprep.subr.mxu0 0.0
      %704 = vmatpush2.msra.mxu0 0.0
      %705 = vmatprep.subr.mxu0 0.0
      %706 = vmatpush2.msra.mxu0 0.0
      %707 = vmatprep.subr.mxu0 0.0
      %708 = vmatpush2.msra.mxu0 0.0
      %709 = vmatprep.subr.mxu0 0.0
      %710 = vmatpush2.msra.mxu0 0.0
      %711 = vmatprep.subr.mxu0 0.0
      %712 = vmatpush2.msra.mxu0 0.0
      %713 = vmatprep.subr.mxu0 0.0
      %714 = vmatpush2.msra.mxu0 0.0
      %715 = vmatprep.subr.mxu0 0.0
      %716 = vmatpush2.msra.mxu0 0.0
      %717 = vmatprep.subr.mxu0 0.0
      %718 = vmatpush2.msra.mxu0 0.0
      %719 = vmatprep.mubr.f32.mxu0 0.0
      %720 = vmatmul.mubr.f32.gmra.mxu0 %v634
      %v721 = vpop.f32.mrf.mxu0
      %v722 = vadd.f32 0.0, %v721
      %v723 = vpop.f32.mrf.mxu0
      %724 = vmatprep.mubr.f32.mxu0 0.0
      %725 = vmatmul.mubr.f32.gmra.mxu0 %v635
      %v726 = vpop.f32.mrf.mxu0
      %v727 = vadd.f32 0.0, %v726
      %v728 = vpop.f32.mrf.mxu0
      %729 = vmatprep.mubr.f32.mxu0 0.0
      %730 = vmatmul.mubr.f32.gmra.mxu0 %v636
      %v731 = vpop.f32.mrf.mxu0
      %v732 = vadd.f32 0.0, %v731
      %v733 = vpop.f32.mrf.mxu0
      %734 = vmatprep.mubr.f32.mxu0 0.0
      %735 = vmatmul.mubr.f32.gmra.mxu0 %v637
      %v736 = vpop.f32.mrf.mxu0
      %v737 = vadd.f32 0.0, %v736
      %v738 = vpop.f32.mrf.mxu0
      %739 = vdwg.mxu0
      %v740 = vadd.f32 %v628, %v722
      %v741 = vadd.f32 %v629, %v727
      %v742 = vadd.f32 %v630, %v732
      %v743 = vadd.f32 %v631, %v737
      %v744 = vld [vmem:[%s521 + $0x1] sm:$0xff]
      %v745 = vld [vmem:[%s521 + $0x11] sm:$0xff]
      %v746 = vld [vmem:[%s521 + $0x21] sm:$0xff]
      %v747 = vld [vmem:[%s521 + $0x31] sm:$0xff]
      %s748 = scalar_lea.vmem %s1, 640
      %v749 = vld [vmem:[%s748] sm:$0xff]
      %v750 = vld [vmem:[%s748 + $0x8] sm:$0xff]
      %v751 = vld [vmem:[%s748 + $0x10] sm:$0xff]
      %v752 = vld [vmem:[%s748 + $0x18] sm:$0xff]
      %v753 = vld [vmem:[%s748 + $0x20] sm:$0xff]
      %v754 = vld [vmem:[%s748 + $0x28] sm:$0xff]
      %v755 = vld [vmem:[%s748 + $0x30] sm:$0xff]
      %v756 = vld [vmem:[%s748 + $0x38] sm:$0xff]
      %v757 = vld [vmem:[%s748 + $0x40] sm:$0xff]
      %v758 = vld [vmem:[%s748 + $0x48] sm:$0xff]
      %v759 = vld [vmem:[%s748 + $0x50] sm:$0xff]
      %v760 = vld [vmem:[%s748 + $0x58] sm:$0xff]
      %v761 = vld [vmem:[%s748 + $0x60] sm:$0xff]
      %v762 = vld [vmem:[%s748 + $0x68] sm:$0xff]
      %v763 = vld [vmem:[%s748 + $0x70] sm:$0xff]
      %v764 = vld [vmem:[%s748 + $0x78] sm:$0xff]
      %765 = vmatprep.subr.mxu0 0.0
      %766 = vmatpush1.msra.mxu0 %v764
      %767 = vmatprep.subr.mxu0 0.0
      %768 = vmatpush1.msra.mxu0 %v763
      %769 = vmatprep.subr.mxu0 0.0
      %770 = vmatpush1.msra.mxu0 %v762
      %771 = vmatprep.subr.mxu0 0.0
      %772 = vmatpush1.msra.mxu0 %v761
      %773 = vmatprep.subr.mxu0 0.0
      %774 = vmatpush1.msra.mxu0 %v760
      %775 = vmatprep.subr.mxu0 0.0
      %776 = vmatpush1.msra.mxu0 %v759
      %777 = vmatprep.subr.mxu0 0.0
      %778 = vmatpush1.msra.mxu0 %v758
      %779 = vmatprep.subr.mxu0 0.0
      %780 = vmatpush1.msra.mxu0 %v757
      %781 = vmatprep.subr.mxu0 0.0
      %782 = vmatpush1.msra.mxu0 %v756
      %783 = vmatprep.subr.mxu0 0.0
      %784 = vmatpush1.msra.mxu0 %v755
      %785 = vmatprep.subr.mxu0 0.0
      %786 = vmatpush1.msra.mxu0 %v754
      %787 = vmatprep.subr.mxu0 0.0
      %788 = vmatpush1.msra.mxu0 %v753
      %789 = vmatprep.subr.mxu0 0.0
      %790 = vmatpush1.msra.mxu0 %v752
      %791 = vmatprep.subr.mxu0 0.0
      %792 = vmatpush1.msra.mxu0 %v751
      %793 = vmatprep.subr.mxu0 0.0
      %794 = vmatpush1.msra.mxu0 %v750
      %795 = vmatprep.subr.mxu0 0.0
      %796 = vmatpush1.msra.mxu0 %v749
      %797 = vmatprep.subr.mxu0 0.0
      %798 = vmatpush2.msra.mxu0 0.0
      %799 = vmatprep.subr.mxu0 0.0
      %800 = vmatpush2.msra.mxu0 0.0
      %801 = vmatprep.subr.mxu0 0.0
      %802 = vmatpush2.msra.mxu0 0.0
      %803 = vmatprep.subr.mxu0 0.0
      %804 = vmatpush2.msra.mxu0 0.0
      %805 = vmatprep.subr.mxu0 0.0
      %806 = vmatpush2.msra.mxu0 0.0
      %807 = vmatprep.subr.mxu0 0.0
      %808 = vmatpush2.msra.mxu0 0.0
      %809 = vmatprep.subr.mxu0 0.0
      %810 = vmatpush2.msra.mxu0 0.0
      %811 = vmatprep.subr.mxu0 0.0
      %812 = vmatpush2.msra.mxu0 0.0
      %813 = vmatprep.subr.mxu0 0.0
      %814 = vmatpush2.msra.mxu0 0.0
      %815 = vmatprep.subr.mxu0 0.0
      %816 = vmatpush2.msra.mxu0 0.0
      %817 = vmatprep.subr.mxu0 0.0
      %818 = vmatpush2.msra.mxu0 0.0
      %819 = vmatprep.subr.mxu0 0.0
      %820 = vmatpush2.msra.mxu0 0.0
      %821 = vmatprep.subr.mxu0 0.0
      %822 = vmatpush2.msra.mxu0 0.0
      %823 = vmatprep.subr.mxu0 0.0
      %824 = vmatpush2.msra.mxu0 0.0
      %825 = vmatprep.subr.mxu0 0.0
      %826 = vmatpush2.msra.mxu0 0.0
      %827 = vmatprep.subr.mxu0 0.0
      %828 = vmatpush2.msra.mxu0 0.0
      %829 = vmatprep.mubr.f32.mxu0 0.0
      %830 = vmatmul.mubr.f32.gmra.mxu0 %v744
      %v831 = vpop.f32.mrf.mxu0
      %v832 = vadd.f32 0.0, %v831
      %v833 = vpop.f32.mrf.mxu0
      %834 = vmatprep.mubr.f32.mxu0 0.0
      %835 = vmatmul.mubr.f32.gmra.mxu0 %v745
      %v836 = vpop.f32.mrf.mxu0
      %v837 = vadd.f32 0.0, %v836
      %v838 = vpop.f32.mrf.mxu0
      %839 = vmatprep.mubr.f32.mxu0 0.0
      %840 = vmatmul.mubr.f32.gmra.mxu0 %v746
      %v841 = vpop.f32.mrf.mxu0
      %v842 = vadd.f32 0.0, %v841
      %v843 = vpop.f32.mrf.mxu0
      %844 = vmatprep.mubr.f32.mxu0 0.0
      %845 = vmatmul.mubr.f32.gmra.mxu0 %v747
      %v846 = vpop.f32.mrf.mxu0
      %v847 = vadd.f32 0.0, %v846
      %v848 = vpop.f32.mrf.mxu0
      %849 = vdwg.mxu0
      %v850 = vadd.f32 %v740, %v832
      %v851 = vadd.f32 %v741, %v837
      %v852 = vadd.f32 %v742, %v842
      %v853 = vadd.f32 %v743, %v847
      %s854 = sadd.s32 %s194, 1
      %s855 = smul.u32 %s854, 16
      %s856 = scalar_lea.vmem %s183, %s855
      %v857 = vld [vmem:[%s856] sm:$0xff]
      %v858 = vld [vmem:[%s856 + $0x10] sm:$0xff]
      %v859 = vld [vmem:[%s856 + $0x20] sm:$0xff]
      %v860 = vld [vmem:[%s856 + $0x30] sm:$0xff]
      %s861 = scalar_lea.vmem %s1, 768
      %v862 = vld [vmem:[%s861] sm:$0xff]
      %v863 = vld [vmem:[%s861 + $0x8] sm:$0xff]
      %v864 = vld [vmem:[%s861 + $0x10] sm:$0xff]
      %v865 = vld [vmem:[%s861 + $0x18] sm:$0xff]
      %v866 = vld [vmem:[%s861 + $0x20] sm:$0xff]
      %v867 = vld [vmem:[%s861 + $0x28] sm:$0xff]
      %v868 = vld [vmem:[%s861 + $0x30] sm:$0xff]
      %v869 = vld [vmem:[%s861 + $0x38] sm:$0xff]
      %v870 = vld [vmem:[%s861 + $0x40] sm:$0xff]
      %v871 = vld [vmem:[%s861 + $0x48] sm:$0xff]
      %v872 = vld [vmem:[%s861 + $0x50] sm:$0xff]
      %v873 = vld [vmem:[%s861 + $0x58] sm:$0xff]
      %v874 = vld [vmem:[%s861 + $0x60] sm:$0xff]
      %v875 = vld [vmem:[%s861 + $0x68] sm:$0xff]
      %v876 = vld [vmem:[%s861 + $0x70] sm:$0xff]
      %v877 = vld [vmem:[%s861 + $0x78] sm:$0xff]
      %878 = vmatprep.subr.mxu0 0.0
      %879 = vmatpush1.msra.mxu0 %v877
      %880 = vmatprep.subr.mxu0 0.0
      %881 = vmatpush1.msra.mxu0 %v876
      %882 = vmatprep.subr.mxu0 0.0
      %883 = vmatpush1.msra.mxu0 %v875
      %884 = vmatprep.subr.mxu0 0.0
      %885 = vmatpush1.msra.mxu0 %v874
      %886 = vmatprep.subr.mxu0 0.0
      %887 = vmatpush1.msra.mxu0 %v873
      %888 = vmatprep.subr.mxu0 0.0
      %889 = vmatpush1.msra.mxu0 %v872
      %890 = vmatprep.subr.mxu0 0.0
      %891 = vmatpush1.msra.mxu0 %v871
      %892 = vmatprep.subr.mxu0 0.0
      %893 = vmatpush1.msra.mxu0 %v870
      %894 = vmatprep.subr.mxu0 0.0
      %895 = vmatpush1.msra.mxu0 %v869
      %896 = vmatprep.subr.mxu0 0.0
      %897 = vmatpush1.msra.mxu0 %v868
      %898 = vmatprep.subr.mxu0 0.0
      %899 = vmatpush1.msra.mxu0 %v867
      %900 = vmatprep.subr.mxu0 0.0
      %901 = vmatpush1.msra.mxu0 %v866
      %902 = vmatprep.subr.mxu0 0.0
      %903 = vmatpush1.msra.mxu0 %v865
      %904 = vmatprep.subr.mxu0 0.0
      %905 = vmatpush1.msra.mxu0 %v864
      %906 = vmatprep.subr.mxu0 0.0
      %907 = vmatpush1.msra.mxu0 %v863
      %908 = vmatprep.subr.mxu0 0.0
      %909 = vmatpush1.msra.mxu0 %v862
      %910 = vmatprep.subr.mxu0 0.0
      %911 = vmatpush2.msra.mxu0 0.0
      %912 = vmatprep.subr.mxu0 0.0
      %913 = vmatpush2.msra.mxu0 0.0
      %914 = vmatprep.subr.mxu0 0.0
      %915 = vmatpush2.msra.mxu0 0.0
      %916 = vmatprep.subr.mxu0 0.0
      %917 = vmatpush2.msra.mxu0 0.0
      %918 = vmatprep.subr.mxu0 0.0
      %919 = vmatpush2.msra.mxu0 0.0
      %920 = vmatprep.subr.mxu0 0.0
      %921 = vmatpush2.msra.mxu0 0.0
      %922 = vmatprep.subr.mxu0 0.0
      %923 = vmatpush2.msra.mxu0 0.0
      %924 = vmatprep.subr.mxu0 0.0
      %925 = vmatpush2.msra.mxu0 0.0
      %926 = vmatprep.subr.mxu0 0.0
      %927 = vmatpush2.msra.mxu0 0.0
      %928 = vmatprep.subr.mxu0 0.0
      %929 = vmatpush2.msra.mxu0 0.0
      %930 = vmatprep.subr.mxu0 0.0
      %931 = vmatpush2.msra.mxu0 0.0
      %932 = vmatprep.subr.mxu0 0.0
      %933 = vmatpush2.msra.mxu0 0.0
      %934 = vmatprep.subr.mxu0 0.0
      %935 = vmatpush2.msra.mxu0 0.0
      %936 = vmatprep.subr.mxu0 0.0
      %937 = vmatpush2.msra.mxu0 0.0
      %938 = vmatprep.subr.mxu0 0.0
      %939 = vmatpush2.msra.mxu0 0.0
      %940 = vmatprep.subr.mxu0 0.0
      %941 = vmatpush2.msra.mxu0 0.0
      %942 = vmatprep.mubr.f32.mxu0 0.0
      %943 = vmatmul.mubr.f32.gmra.mxu0 %v857
      %v944 = vpop.f32.mrf.mxu0
      %v945 = vadd.f32 0.0, %v944
      %v946 = vpop.f32.mrf.mxu0
      %947 = vmatprep.mubr.f32.mxu0 0.0
      %948 = vmatmul.mubr.f32.gmra.mxu0 %v858
      %v949 = vpop.f32.mrf.mxu0
      %v950 = vadd.f32 0.0, %v949
      %v951 = vpop.f32.mrf.mxu0
      %952 = vmatprep.mubr.f32.mxu0 0.0
      %953 = vmatmul.mubr.f32.gmra.mxu0 %v859
      %v954 = vpop.f32.mrf.mxu0
      %v955 = vadd.f32 0.0, %v954
      %v956 = vpop.f32.mrf.mxu0
      %957 = vmatprep.mubr.f32.mxu0 0.0
      %958 = vmatmul.mubr.f32.gmra.mxu0 %v860
      %v959 = vpop.f32.mrf.mxu0
      %v960 = vadd.f32 0.0, %v959
      %v961 = vpop.f32.mrf.mxu0
      %962 = vdwg.mxu0
      %v963 = vadd.f32 %v850, %v945
      %v964 = vadd.f32 %v851, %v950
      %v965 = vadd.f32 %v852, %v955
      %v966 = vadd.f32 %v853, %v960
      %s967 = sadd.s32 %s855, 144
      %s968 = scalar_lea.vmem %s183, %s967
      %v969 = vld [vmem:[%s968] sm:$0xff]
      %v970 = vld [vmem:[%s968 + $0x10] sm:$0xff]
      %v971 = vld [vmem:[%s968 + $0x20] sm:$0xff]
      %v972 = vld [vmem:[%s968 + $0x30] sm:$0xff]
      %s973 = scalar_lea.vmem %s1, 896
      %v974 = vld [vmem:[%s973] sm:$0xff]
      %v975 = vld [vmem:[%s973 + $0x8] sm:$0xff]
      %v976 = vld [vmem:[%s973 + $0x10] sm:$0xff]
      %v977 = vld [vmem:[%s973 + $0x18] sm:$0xff]
      %v978 = vld [vmem:[%s973 + $0x20] sm:$0xff]
      %v979 = vld [vmem:[%s973 + $0x28] sm:$0xff]
      %v980 = vld [vmem:[%s973 + $0x30] sm:$0xff]
      %v981 = vld [vmem:[%s973 + $0x38] sm:$0xff]
      %v982 = vld [vmem:[%s973 + $0x40] sm:$0xff]
      %v983 = vld [vmem:[%s973 + $0x48] sm:$0xff]
      %v984 = vld [vmem:[%s973 + $0x50] sm:$0xff]
      %v985 = vld [vmem:[%s973 + $0x58] sm:$0xff]
      %v986 = vld [vmem:[%s973 + $0x60] sm:$0xff]
      %v987 = vld [vmem:[%s973 + $0x68] sm:$0xff]
      %v988 = vld [vmem:[%s973 + $0x70] sm:$0xff]
      %v989 = vld [vmem:[%s973 + $0x78] sm:$0xff]
      %990 = vmatprep.subr.mxu0 0.0
      %991 = vmatpush1.msra.mxu0 %v989
      %992 = vmatprep.subr.mxu0 0.0
      %993 = vmatpush1.msra.mxu0 %v988
      %994 = vmatprep.subr.mxu0 0.0
      %995 = vmatpush1.msra.mxu0 %v987
      %996 = vmatprep.subr.mxu0 0.0
      %997 = vmatpush1.msra.mxu0 %v986
      %998 = vmatprep.subr.mxu0 0.0
      %999 = vmatpush1.msra.mxu0 %v985
      %1000 = vmatprep.subr.mxu0 0.0
      %1001 = vmatpush1.msra.mxu0 %v984
      %1002 = vmatprep.subr.mxu0 0.0
      %1003 = vmatpush1.msra.mxu0 %v983
      %1004 = vmatprep.subr.mxu0 0.0
      %1005 = vmatpush1.msra.mxu0 %v982
      %1006 = vmatprep.subr.mxu0 0.0
      %1007 = vmatpush1.msra.mxu0 %v981
      %1008 = vmatprep.subr.mxu0 0.0
      %1009 = vmatpush1.msra.mxu0 %v980
      %1010 = vmatprep.subr.mxu0 0.0
      %1011 = vmatpush1.msra.mxu0 %v979
      %1012 = vmatprep.subr.mxu0 0.0
      %1013 = vmatpush1.msra.mxu0 %v978
      %1014 = vmatprep.subr.mxu0 0.0
      %1015 = vmatpush1.msra.mxu0 %v977
      %1016 = vmatprep.subr.mxu0 0.0
      %1017 = vmatpush1.msra.mxu0 %v976
      %1018 = vmatprep.subr.mxu0 0.0
      %1019 = vmatpush1.msra.mxu0 %v975
      %1020 = vmatprep.subr.mxu0 0.0
      %1021 = vmatpush1.msra.mxu0 %v974
      %1022 = vmatprep.subr.mxu0 0.0
      %1023 = vmatpush2.msra.mxu0 0.0
      %1024 = vmatprep.subr.mxu0 0.0
      %1025 = vmatpush2.msra.mxu0 0.0
      %1026 = vmatprep.subr.mxu0 0.0
      %1027 = vmatpush2.msra.mxu0 0.0
      %1028 = vmatprep.subr.mxu0 0.0
      %1029 = vmatpush2.msra.mxu0 0.0
      %1030 = vmatprep.subr.mxu0 0.0
      %1031 = vmatpush2.msra.mxu0 0.0
      %1032 = vmatprep.subr.mxu0 0.0
      %1033 = vmatpush2.msra.mxu0 0.0
      %1034 = vmatprep.subr.mxu0 0.0
      %1035 = vmatpush2.msra.mxu0 0.0
      %1036 = vmatprep.subr.mxu0 0.0
      %1037 = vmatpush2.msra.mxu0 0.0
      %1038 = vmatprep.subr.mxu0 0.0
      %1039 = vmatpush2.msra.mxu0 0.0
      %1040 = vmatprep.subr.mxu0 0.0
      %1041 = vmatpush2.msra.mxu0 0.0
      %1042 = vmatprep.subr.mxu0 0.0
      %1043 = vmatpush2.msra.mxu0 0.0
      %1044 = vmatprep.subr.mxu0 0.0
      %1045 = vmatpush2.msra.mxu0 0.0
      %1046 = vmatprep.subr.mxu0 0.0
      %1047 = vmatpush2.msra.mxu0 0.0
      %1048 = vmatprep.subr.mxu0 0.0
      %1049 = vmatpush2.msra.mxu0 0.0
      %1050 = vmatprep.subr.mxu0 0.0
      %1051 = vmatpush2.msra.mxu0 0.0
      %1052 = vmatprep.subr.mxu0 0.0
      %1053 = vmatpush2.msra.mxu0 0.0
      %1054 = vmatprep.mubr.f32.mxu0 0.0
      %1055 = vmatmul.mubr.f32.gmra.mxu0 %v969
      %v1056 = vpop.f32.mrf.mxu0
      %v1057 = vadd.f32 0.0, %v1056
      %v1058 = vpop.f32.mrf.mxu0
      %1059 = vmatprep.mubr.f32.mxu0 0.0
      %1060 = vmatmul.mubr.f32.gmra.mxu0 %v970
      %v1061 = vpop.f32.mrf.mxu0
      %v1062 = vadd.f32 0.0, %v1061
      %v1063 = vpop.f32.mrf.mxu0
      %1064 = vmatprep.mubr.f32.mxu0 0.0
      %1065 = vmatmul.mubr.f32.gmra.mxu0 %v971
      %v1066 = vpop.f32.mrf.mxu0
      %v1067 = vadd.f32 0.0, %v1066
      %v1068 = vpop.f32.mrf.mxu0
      %1069 = vmatprep.mubr.f32.mxu0 0.0
      %1070 = vmatmul.mubr.f32.gmra.mxu0 %v972
      %v1071 = vpop.f32.mrf.mxu0
      %v1072 = vadd.f32 0.0, %v1071
      %v1073 = vpop.f32.mrf.mxu0
      %1074 = vdwg.mxu0
      %v1075 = vadd.f32 %v963, %v1057
      %v1076 = vadd.f32 %v964, %v1062
      %v1077 = vadd.f32 %v965, %v1067
      %v1078 = vadd.f32 %v966, %v1072
      %v1079 = vld [vmem:[%s856 + $0x1] sm:$0xff]
      %v1080 = vld [vmem:[%s856 + $0x11] sm:$0xff]
      %v1081 = vld [vmem:[%s856 + $0x21] sm:$0xff]
      %v1082 = vld [vmem:[%s856 + $0x31] sm:$0xff]
      %s1083 = scalar_lea.vmem %s1, 1024
      %v1084 = vld [vmem:[%s1083] sm:$0xff]
      %v1085 = vld [vmem:[%s1083 + $0x8] sm:$0xff]
      %v1086 = vld [vmem:[%s1083 + $0x10] sm:$0xff]
      %v1087 = vld [vmem:[%s1083 + $0x18] sm:$0xff]
      %v1088 = vld [vmem:[%s1083 + $0x20] sm:$0xff]
      %v1089 = vld [vmem:[%s1083 + $0x28] sm:$0xff]
      %v1090 = vld [vmem:[%s1083 + $0x30] sm:$0xff]
      %v1091 = vld [vmem:[%s1083 + $0x38] sm:$0xff]
      %v1092 = vld [vmem:[%s1083 + $0x40] sm:$0xff]
      %v1093 = vld [vmem:[%s1083 + $0x48] sm:$0xff]
      %v1094 = vld [vmem:[%s1083 + $0x50] sm:$0xff]
      %v1095 = vld [vmem:[%s1083 + $0x58] sm:$0xff]
      %v1096 = vld [vmem:[%s1083 + $0x60] sm:$0xff]
      %v1097 = vld [vmem:[%s1083 + $0x68] sm:$0xff]
      %v1098 = vld [vmem:[%s1083 + $0x70] sm:$0xff]
      %v1099 = vld [vmem:[%s1083 + $0x78] sm:$0xff]
      %1100 = vmatprep.subr.mxu0 0.0
      %1101 = vmatpush1.msra.mxu0 %v1099
      %1102 = vmatprep.subr.mxu0 0.0
      %1103 = vmatpush1.msra.mxu0 %v1098
      %1104 = vmatprep.subr.mxu0 0.0
      %1105 = vmatpush1.msra.mxu0 %v1097
      %1106 = vmatprep.subr.mxu0 0.0
      %1107 = vmatpush1.msra.mxu0 %v1096
      %1108 = vmatprep.subr.mxu0 0.0
      %1109 = vmatpush1.msra.mxu0 %v1095
      %1110 = vmatprep.subr.mxu0 0.0
      %1111 = vmatpush1.msra.mxu0 %v1094
      %1112 = vmatprep.subr.mxu0 0.0
      %1113 = vmatpush1.msra.mxu0 %v1093
      %1114 = vmatprep.subr.mxu0 0.0
      %1115 = vmatpush1.msra.mxu0 %v1092
      %1116 = vmatprep.subr.mxu0 0.0
      %1117 = vmatpush1.msra.mxu0 %v1091
      %1118 = vmatprep.subr.mxu0 0.0
      %1119 = vmatpush1.msra.mxu0 %v1090
      %1120 = vmatprep.subr.mxu0 0.0
      %1121 = vmatpush1.msra.mxu0 %v1089
      %1122 = vmatprep.subr.mxu0 0.0
      %1123 = vmatpush1.msra.mxu0 %v1088
      %1124 = vmatprep.subr.mxu0 0.0
      %1125 = vmatpush1.msra.mxu0 %v1087
      %1126 = vmatprep.subr.mxu0 0.0
      %1127 = vmatpush1.msra.mxu0 %v1086
      %1128 = vmatprep.subr.mxu0 0.0
      %1129 = vmatpush1.msra.mxu0 %v1085
      %1130 = vmatprep.subr.mxu0 0.0
      %1131 = vmatpush1.msra.mxu0 %v1084
      %1132 = vmatprep.subr.mxu0 0.0
      %1133 = vmatpush2.msra.mxu0 0.0
      %1134 = vmatprep.subr.mxu0 0.0
      %1135 = vmatpush2.msra.mxu0 0.0
      %1136 = vmatprep.subr.mxu0 0.0
      %1137 = vmatpush2.msra.mxu0 0.0
      %1138 = vmatprep.subr.mxu0 0.0
      %1139 = vmatpush2.msra.mxu0 0.0
      %1140 = vmatprep.subr.mxu0 0.0
      %1141 = vmatpush2.msra.mxu0 0.0
      %1142 = vmatprep.subr.mxu0 0.0
      %1143 = vmatpush2.msra.mxu0 0.0
      %1144 = vmatprep.subr.mxu0 0.0
      %1145 = vmatpush2.msra.mxu0 0.0
      %1146 = vmatprep.subr.mxu0 0.0
      %1147 = vmatpush2.msra.mxu0 0.0
      %1148 = vmatprep.subr.mxu0 0.0
      %1149 = vmatpush2.msra.mxu0 0.0
      %1150 = vmatprep.subr.mxu0 0.0
      %1151 = vmatpush2.msra.mxu0 0.0
      %1152 = vmatprep.subr.mxu0 0.0
      %1153 = vmatpush2.msra.mxu0 0.0
      %1154 = vmatprep.subr.mxu0 0.0
      %1155 = vmatpush2.msra.mxu0 0.0
      %1156 = vmatprep.subr.mxu0 0.0
      %1157 = vmatpush2.msra.mxu0 0.0
      %1158 = vmatprep.subr.mxu0 0.0
      %1159 = vmatpush2.msra.mxu0 0.0
      %1160 = vmatprep.subr.mxu0 0.0
      %1161 = vmatpush2.msra.mxu0 0.0
      %1162 = vmatprep.subr.mxu0 0.0
      %1163 = vmatpush2.msra.mxu0 0.0
      %1164 = vmatprep.mubr.f32.mxu0 0.0
      %1165 = vmatmul.mubr.f32.gmra.mxu0 %v1079
      %v1166 = vpop.f32.mrf.mxu0
      %v1167 = vadd.f32 0.0, %v1166
      %v1168 = vpop.f32.mrf.mxu0
      %1169 = vmatprep.mubr.f32.mxu0 0.0
      %1170 = vmatmul.mubr.f32.gmra.mxu0 %v1080
      %v1171 = vpop.f32.mrf.mxu0
      %v1172 = vadd.f32 0.0, %v1171
      %v1173 = vpop.f32.mrf.mxu0
      %1174 = vmatprep.mubr.f32.mxu0 0.0
      %1175 = vmatmul.mubr.f32.gmra.mxu0 %v1081
      %v1176 = vpop.f32.mrf.mxu0
      %v1177 = vadd.f32 0.0, %v1176
      %v1178 = vpop.f32.mrf.mxu0
      %1179 = vmatprep.mubr.f32.mxu0 0.0
      %1180 = vmatmul.mubr.f32.gmra.mxu0 %v1082
      %v1181 = vpop.f32.mrf.mxu0
      %v1182 = vadd.f32 0.0, %v1181
      %v1183 = vpop.f32.mrf.mxu0
      %1184 = vdwg.mxu0
      %v1185 = vadd.f32 %v1075, %v1167
      %v1186 = vadd.f32 %v1076, %v1172
      %v1187 = vadd.f32 %v1077, %v1177
      %v1188 = vadd.f32 %v1078, %v1182
      %v1189 = vld [vmem:[%s2] sm:$0x1]
      %v1191 = vlaneseq
      %v1192 = vshrl.u32 %v1191, 7
      %v1193 = vsub.s32 0, %v1192
      %v1194 = vrot.slane %v1189, %v1193
      %v1196 = vadd.f32 %v1185, %v1194
      %v1197 = vadd.f32 %v1186, %v1194
      %v1198 = vadd.f32 %v1187, %v1194
      %v1199 = vadd.f32 %v1188, %v1194
      %vm1200 = vcmp.ge.f32.partialorder %v1196, 0.0
      %vm1201 = vcmp.ge.f32.partialorder %v1197, 0.0
      %vm1202 = vcmp.ge.f32.partialorder %v1198, 0.0
      %vm1203 = vcmp.ge.f32.partialorder %v1199, 0.0
      %v1204 = vmul.f32 %v1196, 0.1
      %v1205 = vmul.f32 %v1197, 0.1
      %v1206 = vmul.f32 %v1198, 0.1
      %v1207 = vmul.f32 %v1199, 0.1
      %v1208 = vsel %vm1200, %v1196, %v1204
      %v1209 = vsel %vm1201, %v1197, %v1205
      %v1210 = vsel %vm1202, %v1198, %v1206
      %v1211 = vsel %vm1203, %v1199, %v1207
      %1212 = vst [vmem:[%s192] sm:$0xff] %v1208
      %1213 = vst [vmem:[%s192 + $0x8] sm:$0xff] %v1209
      %1214 = vst [vmem:[%s192 + $0x10] sm:$0xff] %v1210
      %1215 = vst [vmem:[%s192 + $0x18] sm:$0xff] %v1211
      %s1216 = smul.u32 4, %s19
      %p1217 = scmp.lt.s32.totalorder %s18, 1
      %s1218 = scalar_select %p1217, %s18, 1
      %p1219 = scmp.lt.s32.totalorder %s1216, 7
      %s1220 = scalar_select %p1219, %s1216, 7
      %s1221 = smul.addr %s1218, 8
      %s1222 = sadd.s32 %s1220, %s1221
      %s1223 = smul.addr %s1222, 8
      %s1224 = scalar_lea.vmem %s3, %s1223
      // Predicated region
      $region33: #{res_block_forward.3} parent=31 // pred_check
        %p1225 = pneg %p114
      $region34: #{res_block_forward.3} parent=31 // pred_check_branch
        %1227 = sbr.rel (%p1225) target = $region36
      $region35: #{res_block_forward.3} parent=31 // pred_region
        %s1228 = smul.u32 4, %s19
      $region36: #{res_block_forward.3} parent=31 // pred_fallthru
        _
    $region32: #{res_block_forward.3} parent=5 // pred_fallthru
      _
    %p1229 = scmp.le.s32.totalorder 2, %s9
    // Predicated region
    $region37: #{res_block_forward.3} parent=5 // pred_check
      %p1230 = pneg %p1229
    $region38: #{res_block_forward.3} parent=5 // pred_check_branch
      %1232 = sbr.rel (%p1230) target = $region40
    $region39: #{res_block_forward.3} parent=5 // pred_region
      %s1233 = ssub.s32 %s9, 2
      // Predicated region
      $region41: #{res_block_forward.3} parent=39 // pred_check
        %p1234 = pneg %p120
      $region42: #{res_block_forward.3} parent=39 // pred_check_branch
        %1236 = sbr.rel (%p1234) target = $region44
      $region43: #{res_block_forward.3} parent=39 // pred_region
        %s1237 = smul.u32 4, %s21
        %p1238 = scmp.lt.s32.totalorder %s20, 1
        %s1239 = scalar_select %p1238, %s20, 1
        %p1240 = scmp.lt.s32.totalorder %s1237, 7
        %s1241 = scalar_select %p1240, %s1237, 7
        %s1242 = smul.addr %s1239, 8
        %s1243 = sadd.s32 %s1241, %s1242
        %s1244 = smul.addr %s1243, 8
        %s1245 = scalar_lea.vmem %s3, %s1244
      $region44: #{res_block_forward.3} parent=39 // pred_fallthru
        _
    $region40: #{res_block_forward.3} parent=5 // pred_fallthru
      _
  $region6: #{res_block_forward.3} parent=0 // loop_footer
    %s13 = sadd.s32 1, %s9
  $region7: #{res_block_forward.3} parent=0 // loop_footer_branch
    %8 = sbr.rel target = $region3
  $region8: #{res_block_forward.3} parent=0 // loop_exit
    _

// kernel: res_block_forward.4
$region0: #{res_block_forward.4}
  #allocation0 [shape = 'u32[]', space=smem, size = 0x4, offset = 0x4, fixed_abs, tag = 'smem constant byte address 0x4 - core index']
  #allocation1 [shape = 'u32[144,128]{1,0:T(1,128)}', space=vmem, size = 0x12000, scoped, tag = 'internal scratch']
  %s0 = inlined_call_operand.vmem [shape: f32[2,8,8,128], index: 0, kind: input, shape index: {}]
  %s1 = inlined_call_operand.vmem [shape: f32[128,128], index: 1, kind: input, shape index: {}]
  %s2 = inlined_call_operand.vmem [shape: f32[1,128], index: 2, kind: input, shape index: {}]
  %s3 = inlined_call_operand.vmem [shape: f32[3,3,128,128], index: 3, kind: input, shape index: {}]
  %s4 = inlined_call_operand.vmem [shape: f32[1,128], index: 4, kind: input, shape index: {}]
  %s5 = inlined_call_operand.vmem [shape: f32[2,8,8,128], index: 5, kind: output, shape index: {}]
  %s6 = sld [smem:[#allocation0]]
  $region53: #{res_block_forward.4} parent=0
    _
  %s8 = ssub.s32 1, %s6
  %s9 = scalar_select 0, %s8, %s6
  loop: start=0, step=1, limit=6
  $region2: #{res_block_forward.4} parent=0 // loop_pre_header
    _
  $region3: #{res_block_forward.4} parent=0 // loop_header
    %s11 = sphi 0, %s15
    %p12 = scmp.ge.s32.totalorder %s11, 6
    %s18 = sphi 0, %s30
    %s19 = sphi 0, %s26
    %s20 = sphi 0, %s18
    %s21 = sphi 0, %s19
    %s22 = sphi 0, %s20
    %s23 = sphi 0, %s21
    %s33 = sphi 0, %s35
    %s36 = sphi 0, %s33
    %s37 = sphi 0, %s36
    %s53 = sphi 0, %s37
    %s57 = sphi 0, %s57
    %s59 = sphi 0, %s57
    %s60 = sphi 0, %s59
    %s74 = sphi 0, %s60
    %s78 = sphi 0, %s78
    %s80 = sphi 0, %s78
    %s81 = sphi 0, %s80
    %s95 = sphi 0, %s81
    %s99 = sphi 0, %s99
    %s101 = sphi 0, %s99
    %s102 = sphi 0, %s101
    %s116 = sphi 0, %s102
    %s120 = sphi 0, %s120
    %s122 = sphi 0, %s120
    %s123 = sphi 0, %s122
    %s137 = sphi 0, %s123
    %s145 = sphi 0, %s147
    %s148 = sphi 0, %s145
    %s149 = sphi 0, %s148
    %s165 = sphi 0, %s149
  $region4: #{res_block_forward.4} parent=0 // loop_header_branch
    %14 = sbr.rel (%p12) target = $region8
  $region5: #{res_block_forward.4} parent=0 // loop_body
    %s16 = ssub.s32 %s11, 1
    %s17 = ssub.s32 %s11, 2
    %s24 = sadd.s32 1, %s19
    %p25 = scmp.ge.s32.totalorder %s24, 2
    %s26 = scalar_select %p25, 0, %s24
    %s27 = sadd.s32 1, %s18
    %s28 = scalar_select %p25, %s27, %s18
    %p29 = scmp.ge.s32.totalorder %s28, 2
    %s30 = scalar_select %p29, 0, %s28
    %s31 = ssub.s32 %s18, %s30
    %p32 = scmp.eq.s32.totalorder %s31, 0
    %s34 = sadd.s32 %s33, 1
    %s35 = scalar_select %p32, %s33, %s34
    %p38 = pneg %p32
    %p39 = scmp.eq.s32.totalorder %s11, 3
    %p40 = por %p38, %p39
    %p41 = scmp.ne.s32.totalorder %s33, %s36
    %p42 = scmp.eq.s32.totalorder %s11, 0
    %p43 = por %p41, %p42
    %p44 = scmp.ne.s32.totalorder %s33, %s36
    %p45 = scmp.eq.s32.totalorder %s16, 3
    %p46 = por %p44, %p45
    %p47 = scmp.ne.s32.totalorder %s36, %s37
    %p48 = scmp.eq.s32.totalorder %s16, 0
    %p49 = por %p47, %p48
    %p50 = scmp.ne.s32.totalorder %s36, %s37
    %p51 = scmp.eq.s32.totalorder %s17, 3
    %p52 = por %p50, %p51
    %p54 = scmp.ne.s32.totalorder %s37, %s53
    %p55 = scmp.eq.s32.totalorder %s17, 0
    %p56 = por %p54, %p55
    %s58 = sadd.s32 %s57, 1
    %p61 = scmp.eq.s32.totalorder %s11, 3
    %p62 = scmp.ne.s32.totalorder %s57, %s59
    %p63 = scmp.eq.s32.totalorder %s11, 0
    %p64 = por %p62, %p63
    %p65 = scmp.ne.s32.totalorder %s57, %s59
    %p66 = scmp.eq.s32.totalorder %s16, 3
    %p67 = por %p65, %p66
    %p68 = scmp.ne.s32.totalorder %s59, %s60
    %p69 = scmp.eq.s32.totalorder %s16, 0
    %p70 = por %p68, %p69
    %p71 = scmp.ne.s32.totalorder %s59, %s60
    %p72 = scmp.eq.s32.totalorder %s17, 3
    %p73 = por %p71, %p72
    %p75 = scmp.ne.s32.totalorder %s60, %s74
    %p76 = scmp.eq.s32.totalorder %s17, 0
    %p77 = por %p75, %p76
    %s79 = sadd.s32 %s78, 1
    %p82 = scmp.eq.s32.totalorder %s11, 3
    %p83 = scmp.ne.s32.totalorder %s78, %s80
    %p84 = scmp.eq.s32.totalorder %s11, 0
    %p85 = por %p83, %p84
    %p86 = scmp.ne.s32.totalorder %s78, %s80
    %p87 = scmp.eq.s32.totalorder %s16, 3
    %p88 = por %p86, %p87
    %p89 = scmp.ne.s32.totalorder %s80, %s81
    %p90 = scmp.eq.s32.totalorder %s16, 0
    %p91 = por %p89, %p90
    %p92 = scmp.ne.s32.totalorder %s80, %s81
    %p93 = scmp.eq.s32.totalorder %s17, 3
    %p94 = por %p92, %p93
    %p96 = scmp.ne.s32.totalorder %s81, %s95
    %p97 = scmp.eq.s32.totalorder %s17, 0
    %p98 = por %p96, %p97
    %s100 = sadd.s32 %s99, 1
    %p103 = scmp.eq.s32.totalorder %s11, 3
    %p104 = scmp.ne.s32.totalorder %s99, %s101
    %p105 = scmp.eq.s32.totalorder %s11, 0
    %p106 = por %p104, %p105
    %p107 = scmp.ne.s32.totalorder %s99, %s101
    %p108 = scmp.eq.s32.totalorder %s16, 3
    %p109 = por %p107, %p108
    %p110 = scmp.ne.s32.totalorder %s101, %s102
    %p111 = scmp.eq.s32.totalorder %s16, 0
    %p112 = por %p110, %p111
    %p113 = scmp.ne.s32.totalorder %s101, %s102
    %p114 = scmp.eq.s32.totalorder %s17, 3
    %p115 = por %p113, %p114
    %p117 = scmp.ne.s32.totalorder %s102, %s116
    %p118 = scmp.eq.s32.totalorder %s17, 0
    %p119 = por %p117, %p118
    %s121 = sadd.s32 %s120, 1
    %p124 = scmp.eq.s32.totalorder %s11, 3
    %p125 = scmp.ne.s32.totalorder %s120, %s122
    %p126 = scmp.eq.s32.totalorder %s11, 0
    %p127 = por %p125, %p126
    %p128 = scmp.ne.s32.totalorder %s120, %s122
    %p129 = scmp.eq.s32.totalorder %s16, 3
    %p130 = por %p128, %p129
    %p131 = scmp.ne.s32.totalorder %s122, %s123
    %p132 = scmp.eq.s32.totalorder %s16, 0
    %p133 = por %p131, %p132
    %p134 = scmp.ne.s32.totalorder %s122, %s123
    %p135 = scmp.eq.s32.totalorder %s17, 3
    %p136 = por %p134, %p135
    %p138 = scmp.ne.s32.totalorder %s123, %s137
    %p139 = scmp.eq.s32.totalorder %s17, 0
    %p140 = por %p138, %p139
    %s141 = ssub.s32 %s18, %s30
    %s142 = ssub.s32 %s19, %s26
    %s143 = sor.u32 %s141, %s142
    %p144 = scmp.eq.s32.totalorder %s143, 0
    %s146 = sadd.s32 %s145, 1
    %s147 = scalar_select %p144, %s145, %s146
    %p150 = pneg %p144
    %p151 = scmp.eq.s32.totalorder %s11, 3
    %p152 = por %p150, %p151
    %p153 = scmp.ne.s32.totalorder %s145, %s148
    %p154 = scmp.eq.s32.totalorder %s11, 0
    %p155 = por %p153, %p154
    %p156 = scmp.ne.s32.totalorder %s145, %s148
    %p157 = scmp.eq.s32.totalorder %s16, 3
    %p158 = por %p156, %p157
    %p159 = scmp.ne.s32.totalorder %s148, %s149
    %p160 = scmp.eq.s32.totalorder %s16, 0
    %p161 = por %p159, %p160
    %p162 = scmp.ne.s32.totalorder %s148, %s149
    %p163 = scmp.eq.s32.totalorder %s17, 3
    %p164 = por %p162, %p163
    %p166 = scmp.ne.s32.totalorder %s149, %s165
    %p167 = scmp.eq.s32.totalorder %s17, 0
    %p168 = por %p166, %p167
    %p169 = scmp.le.s32.totalorder 1, %s11
    %p170 = scmp.lt.s32.totalorder %s11, 5
    %p171 = pnand %p169, %p170
    %p172 = pneg %p171
    // Predicated region
    $region9: #{res_block_forward.4} parent=5 // pred_check
      _
    $region10: #{res_block_forward.4} parent=5 // pred_check_branch
      %174 = sbr.rel (%p171) target = $region12
    $region11: #{res_block_forward.4} parent=5 // pred_region
      %s175 = ssub.s32 %s11, 1
      // Predicated region
      $region13: #{res_block_forward.4} parent=11 // pred_check
        %p176 = pneg %p70
      $region14: #{res_block_forward.4} parent=11 // pred_check_branch
        %178 = sbr.rel (%p176) target = $region16
      $region15: #{res_block_forward.4} parent=11 // pred_region
        _
      $region16: #{res_block_forward.4} parent=11 // pred_fallthru
        _
      // Predicated region
      $region17: #{res_block_forward.4} parent=11 // pred_check
        %p179 = pneg %p91
      $region18: #{res_block_forward.4} parent=11 // pred_check_branch
        %181 = sbr.rel (%p179) target = $region20
      $region19: #{res_block_forward.4} parent=11 // pred_region
        _
      $region20: #{res_block_forward.4} parent=11 // pred_fallthru
        _
      // Predicated region
      $region21: #{res_block_forward.4} parent=11 // pred_check
        %p182 = pneg %p112
      $region22: #{res_block_forward.4} parent=11 // pred_check_branch
        %184 = sbr.rel (%p182) target = $region24
      $region23: #{res_block_forward.4} parent=11 // pred_region
        _
      $region24: #{res_block_forward.4} parent=11 // pred_fallthru
        _
      // Predicated region
      $region25: #{res_block_forward.4} parent=11 // pred_check
        %p185 = pneg %p133
      $region26: #{res_block_forward.4} parent=11 // pred_check_branch
        %187 = sbr.rel (%p185) target = $region28
      $region27: #{res_block_forward.4} parent=11 // pred_region
        _
      $region28: #{res_block_forward.4} parent=11 // pred_fallthru
        _
    $region12: #{res_block_forward.4} parent=5 // pred_fallthru
      _
    %p188 = scmp.lt.s32.totalorder %s11, 4
    // Predicated region
    $region29: #{res_block_forward.4} parent=5 // pred_check
      %p189 = pneg %p188
    $region30: #{res_block_forward.4} parent=5 // pred_check_branch
      %191 = sbr.rel (%p189) target = $region32
    $region31: #{res_block_forward.4} parent=5 // pred_region
      // Predicated region
      $region33: #{res_block_forward.4} parent=31 // pred_check
        %p192 = pneg %p43
      $region34: #{res_block_forward.4} parent=31 // pred_check_branch
        %194 = sbr.rel (%p192) target = $region36
      $region35: #{res_block_forward.4} parent=31 // pred_region
        %p195 = scmp.lt.s32.totalorder %s18, 1
        %s196 = scalar_select %p195, %s18, 1
        %s197 = smul.addr %s196, 8
        %s198 = smul.addr %s197, 8
        %s199 = scalar_lea.vmem %s0, %s198
      $region36: #{res_block_forward.4} parent=31 // pred_fallthru
        _
    $region32: #{res_block_forward.4} parent=5 // pred_fallthru
      _
    %p200 = scmp.le.s32.totalorder 1, %s11
    %p201 = scmp.lt.s32.totalorder %s11, 5
    %p202 = pnand %p200, %p201
    %p203 = pneg %p202
    // Predicated region
    $region37: #{res_block_forward.4} parent=5 // pred_check
      _
    $region38: #{res_block_forward.4} parent=5 // pred_check_branch
      %205 = sbr.rel (%p202) target = $region40
    $region39: #{res_block_forward.4} parent=5 // pred_region
      %s206 = ssub.s32 %s11, 1
      %p207 = scmp.lt.s32.totalorder %s20, 1
      %s208 = scalar_select %p207, %s20, 1
      %s209 = smul.addr %s208, 8
      %s210 = smul.addr %s209, 8
      %s211 = scalar_lea.vmem %s0, %s210
      %p212 = pneg %p49
      %p213 = pneg %p46
      %p214 = pneg %p70
      %p215 = pneg %p67
      %p216 = pneg %p91
      %p217 = pneg %p88
      %p218 = pneg %p112
      %p219 = pneg %p109
      %p220 = pneg %p133
      %p221 = pneg %p130
      %p222 = pneg %p161
      %p223 = pneg %p158
      %s224 = smul.u32 4, %s21
      %p225 = scmp.lt.s32.totalorder %s20, 1
      %s226 = scalar_select %p225, %s20, 1
      %p227 = scmp.lt.s32.totalorder %s224, 7
      %s228 = scalar_select %p227, %s224, 7
      %s229 = smul.addr %s226, 8
      %s230 = sadd.s32 %s228, %s229
      %s231 = smul.addr %s230, 8
      %s232 = scalar_lea.vmem %s5, %s231
      %p233 = scmp.lt.s32.totalorder %s20, 1
      %s234 = scalar_select %p233, %s20, 1
      %s235 = smul.addr %s234, 8
      %s236 = smul.addr %s235, 8
      %s237 = scalar_lea.vmem %s0, %s236
      %s238 = smul.u32 4, %s21
      %p239 = scmp.lt.s32.totalorder %s20, 1
      %s240 = scalar_select %p239, %s20, 1
      %p241 = scmp.lt.s32.totalorder %s238, 7
      %s242 = scalar_select %p241, %s238, 7
      %s243 = smul.addr %s240, 8
      %s244 = sadd.s32 %s242, %s243
      %s245 = smul.addr %s244, 8
      %s246 = scalar_lea.vmem %s5, %s245
      %s247 = smul.u32 4, %s21
      %s248 = smul.u32 %s21, 4
      %s249 = smul.u32 %s248, 8
      %s250 = scalar_lea.vmem %s237, %s249
      %v251 = vld [vmem:[%s250] sm:$0xff]
      %v252 = vld [vmem:[%s250 + $0x8] sm:$0xff]
      %v253 = vld [vmem:[%s250 + $0x10] sm:$0xff]
      %v254 = vld [vmem:[%s250 + $0x18] sm:$0xff]
      %s255 = ssub.s32 %s248, 1
      %p256 = scmp.gt.s32.totalorder %s255, 0
      %s257 = scalar_select %p256, %s255, 0
      %p258 = scmp.lt.s32.totalorder %s257, 7
      %s259 = scalar_select %p258, %s257, 7
      %s260 = smul.u32 %s259, 8
      %s261 = scalar_lea.vmem %s237, %s260
      %v262 = vld [vmem:[%s261] sm:$0xff]
      %s263 = sadd.s32 %s248, 4
      %p264 = scmp.gt.s32.totalorder %s263, 0
      %s265 = scalar_select %p264, %s263, 0
      %p266 = scmp.lt.s32.totalorder %s265, 7
      %s267 = scalar_select %p266, %s265, 7
      %s268 = smul.u32 %s267, 8
      %s269 = scalar_lea.vmem %s237, %s268
      %v270 = vld [vmem:[%s269] sm:$0xff]
      %v271 = vld [vmem:[%s1] sm:$0xff]
      %v272 = vld [vmem:[%s1 + $0x8] sm:$0xff]
      %v273 = vld [vmem:[%s1 + $0x10] sm:$0xff]
      %v274 = vld [vmem:[%s1 + $0x18] sm:$0xff]
      %v275 = vld [vmem:[%s1 + $0x20] sm:$0xff]
      %v276 = vld [vmem:[%s1 + $0x28] sm:$0xff]
      %v277 = vld [vmem:[%s1 + $0x30] sm:$0xff]
      %v278 = vld [vmem:[%s1 + $0x38] sm:$0xff]
      %v279 = vld [vmem:[%s1 + $0x40] sm:$0xff]
      %v280 = vld [vmem:[%s1 + $0x48] sm:$0xff]
      %v281 = vld [vmem:[%s1 + $0x50] sm:$0xff]
      %v282 = vld [vmem:[%s1 + $0x58] sm:$0xff]
      %v283 = vld [vmem:[%s1 + $0x60] sm:$0xff]
      %v284 = vld [vmem:[%s1 + $0x68] sm:$0xff]
      %v285 = vld [vmem:[%s1 + $0x70] sm:$0xff]
      %v286 = vld [vmem:[%s1 + $0x78] sm:$0xff]
      %v287 = vld [vmem:[%s2] sm:$0x1]
      %v289 = vlaneseq
      %v290 = vshrl.u32 %v289, 7
      %v291 = vsub.s32 0, %v290
      %v292 = vrot.slane %v287, %v291
      %294 = vmatprep.subr.mxu0 0.0
      %295 = vmatpush1.msra.mxu0 %v286
      %296 = vmatprep.subr.mxu0 0.0
      %297 = vmatpush1.msra.mxu0 %v285
      %298 = vmatprep.subr.mxu0 0.0
      %299 = vmatpush1.msra.mxu0 %v284
      %300 = vmatprep.subr.mxu0 0.0
      %301 = vmatpush1.msra.mxu0 %v283
      %302 = vmatprep.subr.mxu0 0.0
      %303 = vmatpush1.msra.mxu0 %v282
      %304 = vmatprep.subr.mxu0 0.0
      %305 = vmatpush1.msra.mxu0 %v281
      %306 = vmatprep.subr.mxu0 0.0
      %307 = vmatpush1.msra.mxu0 %v280
      %308 = vmatprep.subr.mxu0 0.0
      %309 = vmatpush1.msra.mxu0 %v279
      %310 = vmatprep.subr.mxu0 0.0
      %311 = vmatpush1.msra.mxu0 %v278
      %312 = vmatprep.subr.mxu0 0.0
      %313 = vmatpush1.msra.mxu0 %v277
      %314 = vmatprep.subr.mxu0 0.0
      %315 = vmatpush1.msra.mxu0 %v276
      %316 = vmatprep.subr.mxu0 0.0
      %317 = vmatpush1.msra.mxu0 %v275
      %318 = vmatprep.subr.mxu0 0.0
      %319 = vmatpush1.msra.mxu0 %v274
      %320 = vmatprep.subr.mxu0 0.0
      %321 = vmatpush1.msra.mxu0 %v273
      %322 = vmatprep.subr.mxu0 0.0
      %323 = vmatpush1.msra.mxu0 %v272
      %324 = vmatprep.subr.mxu0 0.0
      %325 = vmatpush1.msra.mxu0 %v271
      %326 = vmatprep.subr.mxu0 0.0
      %327 = vmatpush2.msra.mxu0 0.0
      %328 = vmatprep.subr.mxu0 0.0
      %329 = vmatpush2.msra.mxu0 0.0
      %330 = vmatprep.subr.mxu0 0.0
      %331 = vmatpush2.msra.mxu0 0.0
      %332 = vmatprep.subr.mxu0 0.0
      %333 = vmatpush2.msra.mxu0 0.0
      %334 = vmatprep.subr.mxu0 0.0
      %335 = vmatpush2.msra.mxu0 0.0
      %336 = vmatprep.subr.mxu0 0.0
      %337 = vmatpush2.msra.mxu0 0.0
      %338 = vmatprep.subr.mxu0 0.0
      %339 = vmatpush2.msra.mxu0 0.0
      %340 = vmatprep.subr.mxu0 0.0
      %341 = vmatpush2.msra.mxu0 0.0
      %342 = vmatprep.subr.mxu0 0.0
      %343 = vmatpush2.msra.mxu0 0.0
      %344 = vmatprep.subr.mxu0 0.0
      %345 = vmatpush2.msra.mxu0 0.0
      %346 = vmatprep.subr.mxu0 0.0
      %347 = vmatpush2.msra.mxu0 0.0
      %348 = vmatprep.subr.mxu0 0.0
      %349 = vmatpush2.msra.mxu0 0.0
      %350 = vmatprep.subr.mxu0 0.0
      %351 = vmatpush2.msra.mxu0 0.0
      %352 = vmatprep.subr.mxu0 0.0
      %353 = vmatpush2.msra.mxu0 0.0
      %354 = vmatprep.subr.mxu0 0.0
      %355 = vmatpush2.msra.mxu0 0.0
      %356 = vmatprep.subr.mxu0 0.0
      %357 = vmatpush2.msra.mxu0 0.0
      %358 = vmatprep.mubr.f32.mxu0 0.0
      %359 = vmatmul.mubr.f32.gmra.mxu0 %v262
      %v360 = vpop.f32.mrf.mxu0
      %v361 = vadd.f32 %v292, %v360
      %v362 = vpop.f32.mrf.mxu0
      %363 = vmatprep.mubr.f32.mxu0 0.0
      %364 = vmatmul.mubr.f32.gmra.mxu0 %v251
      %v365 = vpop.f32.mrf.mxu0
      %v366 = vadd.f32 %v292, %v365
      %v367 = vpop.f32.mrf.mxu0
      %368 = vmatprep.mubr.f32.mxu0 0.0
      %369 = vmatmul.mubr.f32.gmra.mxu0 %v252
      %v370 = vpop.f32.mrf.mxu0
      %v371 = vadd.f32 %v292, %v370
      %v372 = vpop.f32.mrf.mxu0
      %373 = vmatprep.mubr.f32.mxu0 0.0
      %374 = vmatmul.mubr.f32.gmra.mxu0 %v253
      %v375 = vpop.f32.mrf.mxu0
      %v376 = vadd.f32 %v292, %v375
      %v377 = vpop.f32.mrf.mxu0
      %378 = vmatprep.mubr.f32.mxu0 0.0
      %379 = vmatmul.mubr.f32.gmra.mxu0 %v254
      %v380 = vpop.f32.mrf.mxu0
      %v381 = vadd.f32 %v292, %v380
      %v382 = vpop.f32.mrf.mxu0
      %383 = vmatprep.mubr.f32.mxu0 0.0
      %384 = vmatmul.mubr.f32.gmra.mxu0 %v270
      %v385 = vpop.f32.mrf.mxu0
      %v386 = vadd.f32 %v292, %v385
      %v387 = vpop.f32.mrf.mxu0
      %388 = vdwg.mxu0
      %vm389 = vcmp.ge.f32.partialorder %v361, 0.0
      %vm390 = vcmp.ge.f32.partialorder %v366, 0.0
      %vm391 = vcmp.ge.f32.partialorder %v371, 0.0
      %vm392 = vcmp.ge.f32.partialorder %v376, 0.0
      %vm393 = vcmp.ge.f32.partialorder %v381, 0.0
      %vm394 = vcmp.ge.f32.partialorder %v386, 0.0
      %v395 = vmul.f32 %v361, 0.1
      %v396 = vmul.f32 %v366, 0.1
      %v397 = vmul.f32 %v371, 0.1
      %v398 = vmul.f32 %v376, 0.1
      %v399 = vmul.f32 %v381, 0.1
      %v400 = vmul.f32 %v386, 0.1
      %v401 = vsel %vm389, %v361, %v395
      %v402 = vsel %vm390, %v366, %v396
      %v403 = vsel %vm391, %v371, %v397
      %v404 = vsel %vm392, %v376, %v398
      %v405 = vsel %vm393, %v381, %v399
      %v406 = vsel %vm394, %v386, %v400
      %v407 = vstv %s255
      %v408 = vadd.s32 %v407, 1
      %v409 = vadd.s32 %v407, 2
      %v410 = vadd.s32 %v407, 3
      %v411 = vadd.s32 %v407, 4
      %v412 = vadd.s32 %v407, 5
      %vm413 = vcmp.ge.s32.totalorder %v407, 0
      %vm414 = vcmp.ge.s32.totalorder %v408, 0
      %vm415 = vcmp.ge.s32.totalorder %v409, 0
      %vm416 = vcmp.ge.s32.totalorder %v410, 0
      %vm417 = vcmp.ge.s32.totalorder %v411, 0
      %vm418 = vcmp.ge.s32.totalorder %v412, 0
      %vm419 = vcmp.lt.s32.totalorder %v407, 8
      %vm420 = vcmp.lt.s32.totalorder %v408, 8
      %vm421 = vcmp.lt.s32.totalorder %v409, 8
      %vm422 = vcmp.lt.s32.totalorder %v410, 8
      %vm423 = vcmp.lt.s32.totalorder %v411, 8
      %vm424 = vcmp.lt.s32.totalorder %v412, 8
      %vm425 = vmand %vm413, %vm419
      %vm426 = vmand %vm414, %vm420
      %vm427 = vmand %vm415, %vm421
      %vm428 = vmand %vm416, %vm422
      %vm429 = vmand %vm417, %vm423
      %vm430 = vmand %vm418, %vm424
      %v431 = vsel %vm425, 1, 0
      %v432 = vsel %vm426, 1, 0
      %v433 = vsel %vm427, 1, 0
      %v434 = vsel %vm428, 1, 0
      %v435 = vsel %vm429, 1, 0
      %v436 = vsel %vm430, 1, 0
      %vm437 = vcmp.eq.s32.totalorder %v431, 1
      %vm438 = vcmp.eq.s32.totalorder %v432, 1
      %vm439 = vcmp.eq.s32.totalorder %v433, 1
      %vm440 = vcmp.eq.s32.totalorder %v434, 1
      %vm441 = vcmp.eq.s32.totalorder %v435, 1
      %vm442 = vcmp.eq.s32.totalorder %v436, 1
      %v443 = vsel %vm437, %v401, 0.0
      %v444 = vsel %vm438, %v402, 0.0
      %v445 = vsel %vm439, %v403, 0.0
      %v446 = vsel %vm440, %v404, 0.0
      %v447 = vsel %vm441, %v405, 0.0
      %v448 = vsel %vm442, %v406, 0.0
      %v455 = vrot.slane %v443, 7
      %v456 = vrot.slane %v444, 7
      %v457 = vrot.slane %v445, 7
      %v458 = vrot.slane %v446, 7
      %v459 = vrot.slane %v447, 7
      %v460 = vrot.slane %v448, 7
      %vm467 = vcmask 1040384
      %v468 = vsel %vm467, 0.0, %v455
      %v469 = vsel %vm467, 0.0, %v456
      %v470 = vsel %vm467, 0.0, %v457
      %v471 = vsel %vm467, 0.0, %v458
      %v472 = vsel %vm467, 0.0, %v459
      %v473 = vsel %vm467, 0.0, %v460
      %v474 = vsel %vm467, %v455, 0.0
      %v475 = vsel %vm467, %v456, 0.0
      %v476 = vsel %vm467, %v457, 0.0
      %v477 = vsel %vm467, %v458, 0.0
      %v478 = vsel %vm467, %v459, 0.0
      %v479 = vsel %vm467, %v460, 0.0
      %v480 = vld [vmem:[%s3] sm:$0xff]
      %v481 = vld [vmem:[%s3 + $0x8] sm:$0xff]
      %v482 = vld [vmem:[%s3 + $0x10] sm:$0xff]
      %v483 = vld [vmem:[%s3 + $0x18] sm:$0xff]
      %v484 = vld [vmem:[%s3 + $0x20] sm:$0xff]
      %v485 = vld [vmem:[%s3 + $0x28] sm:$0xff]
      %v486 = vld [vmem:[%s3 + $0x30] sm:$0xff]
      %v487 = vld [vmem:[%s3 + $0x38] sm:$0xff]
      %v488 = vld [vmem:[%s3 + $0x40] sm:$0xff]
      %v489 = vld [vmem:[%s3 + $0x48] sm:$0xff]
      %v490 = vld [vmem:[%s3 + $0x50] sm:$0xff]
      %v491 = vld [vmem:[%s3 + $0x58] sm:$0xff]
      %v492 = vld [vmem:[%s3 + $0x60] sm:$0xff]
      %v493 = vld [vmem:[%s3 + $0x68] sm:$0xff]
      %v494 = vld [vmem:[%s3 + $0x70] sm:$0xff]
      %v495 = vld [vmem:[%s3 + $0x78] sm:$0xff]
      %vm504 = vcmask 1046528
      %v505 = vrot.slane %v468, 1
      %v506 = vrot.slane %v474, 1
      %v507 = vsel %vm504, %v505, %v506
      %v508 = vrot.slane %v469, 1
      %v509 = vrot.slane %v475, 1
      %v510 = vsel %vm504, %v508, %v509
      %v511 = vrot.slane %v470, 1
      %v512 = vrot.slane %v476, 1
      %v513 = vsel %vm504, %v511, %v512
      %v514 = vrot.slane %v471, 1
      %v515 = vrot.slane %v477, 1
      %v516 = vsel %vm504, %v514, %v515
      %s521 = scalar_lea.vmem %s3, 128
      %v522 = vld [vmem:[%s521] sm:$0xff]
      %v523 = vld [vmem:[%s521 + $0x8] sm:$0xff]
      %v524 = vld [vmem:[%s521 + $0x10] sm:$0xff]
      %v525 = vld [vmem:[%s521 + $0x18] sm:$0xff]
      %v526 = vld [vmem:[%s521 + $0x20] sm:$0xff]
      %v527 = vld [vmem:[%s521 + $0x28] sm:$0xff]
      %v528 = vld [vmem:[%s521 + $0x30] sm:$0xff]
      %v529 = vld [vmem:[%s521 + $0x38] sm:$0xff]
      %v530 = vld [vmem:[%s521 + $0x40] sm:$0xff]
      %v531 = vld [vmem:[%s521 + $0x48] sm:$0xff]
      %v532 = vld [vmem:[%s521 + $0x50] sm:$0xff]
      %v533 = vld [vmem:[%s521 + $0x58] sm:$0xff]
      %v534 = vld [vmem:[%s521 + $0x60] sm:$0xff]
      %v535 = vld [vmem:[%s521 + $0x68] sm:$0xff]
      %v536 = vld [vmem:[%s521 + $0x70] sm:$0xff]
      %v537 = vld [vmem:[%s521 + $0x78] sm:$0xff]
      %538 = vmatprep.subr.mxu0 0.0
      %539 = vmatpush1.msra.mxu0 %v537
      %540 = vmatprep.subr.mxu0 0.0
      %541 = vmatpush1.msra.mxu0 %v536
      %542 = vmatprep.subr.mxu0 0.0
      %543 = vmatpush1.msra.mxu0 %v535
      %544 = vmatprep.subr.mxu0 0.0
      %545 = vmatpush1.msra.mxu0 %v534
      %546 = vmatprep.subr.mxu0 0.0
      %547 = vmatpush1.msra.mxu0 %v533
      %548 = vmatprep.subr.mxu0 0.0
      %549 = vmatpush1.msra.mxu0 %v532
      %550 = vmatprep.subr.mxu0 0.0
      %551 = vmatpush1.msra.mxu0 %v531
      %552 = vmatprep.subr.mxu0 0.0
      %553 = vmatpush1.msra.mxu0 %v530
      %554 = vmatprep.subr.mxu0 0.0
      %555 = vmatpush1.msra.mxu0 %v529
      %556 = vmatprep.subr.mxu0 0.0
      %557 = vmatpush1.msra.mxu0 %v528
      %558 = vmatprep.subr.mxu0 0.0
      %559 = vmatpush1.msra.mxu0 %v527
      %560 = vmatprep.subr.mxu0 0.0
      %561 = vmatpush1.msra.mxu0 %v526
      %562 = vmatprep.subr.mxu0 0.0
      %563 = vmatpush1.msra.mxu0 %v525
      %564 = vmatprep.subr.mxu0 0.0
      %565 = vmatpush1.msra.mxu0 %v524
      %566 = vmatprep.subr.mxu0 0.0
      %567 = vmatpush1.msra.mxu0 %v523
      %568 = vmatprep.subr.mxu0 0.0
      %569 = vmatpush1.msra.mxu0 %v522
      %570 = vmatprep.subr.mxu0 0.0
      %571 = vmatpush2.msra.mxu0 0.0
      %572 = vmatprep.subr.mxu0 0.0
      %573 = vmatpush2.msra.mxu0 0.0
      %574 = vmatprep.subr.mxu0 0.0
      %575 = vmatpush2.msra.mxu0 0.0
      %576 = vmatprep.subr.mxu0 0.0
      %577 = vmatpush2.msra.mxu0 0.0
      %578 = vmatprep.subr.mxu0 0.0
      %579 = vmatpush2.msra.mxu0 0.0
      %580 = vmatprep.subr.mxu0 0.0
      %581 = vmatpush2.msra.mxu0 0.0
      %582 = vmatprep.subr.mxu0 0.0
      %583 = vmatpush2.msra.mxu0 0.0
      %584 = vmatprep.subr.mxu0 0.0
      %585 = vmatpush2.msra.mxu0 0.0
      %586 = vmatprep.subr.mxu0 0.0
      %587 = vmatpush2.msra.mxu0 0.0
      %588 = vmatprep.subr.mxu0 0.0
      %589 = vmatpush2.msra.mxu0 0.0
      %590 = vmatprep.subr.mxu0 0.0
      %591 = vmatpush2.msra.mxu0 0.0
      %592 = vmatprep.subr.mxu0 0.0
      %593 = vmatpush2.msra.mxu0 0.0
      %594 = vmatprep.subr.mxu0 0.0
      %595 = vmatpush2.msra.mxu0 0.0
      %596 = vmatprep.subr.mxu0 0.0
      %597 = vmatpush2.msra.mxu0 0.0
      %598 = vmatprep.subr.mxu0 0.0
      %599 = vmatpush2.msra.mxu0 0.0
      %600 = vmatprep.subr.mxu0 0.0
      %601 = vmatpush2.msra.mxu0 0.0
      %602 = vmatprep.mubr.f32.mxu0 0.0
      %603 = vmatmul.mubr.f32.gmra.mxu0 %v507
      %v604 = vpop.f32.mrf.mxu0
      %v605 = vadd.f32 0.0, %v604
      %v606 = vpop.f32.mrf.mxu0
      %607 = vmatprep.mubr.f32.mxu0 0.0
      %608 = vmatmul.mubr.f32.gmra.mxu0 %v510
      %v609 = vpop.f32.mrf.mxu0
      %v610 = vadd.f32 0.0, %v609
      %v611 = vpop.f32.mrf.mxu0
      %612 = vmatprep.mubr.f32.mxu0 0.0
      %613 = vmatmul.mubr.f32.gmra.mxu0 %v513
      %v614 = vpop.f32.mrf.mxu0
      %v615 = vadd.f32 0.0, %v614
      %v616 = vpop.f32.mrf.mxu0
      %617 = vmatprep.mubr.f32.mxu0 0.0
      %618 = vmatmul.mubr.f32.gmra.mxu0 %v516
      %v619 = vpop.f32.mrf.mxu0
      %v620 = vadd.f32 0.0, %v619
      %v621 = vpop.f32.mrf.mxu0
      %622 = vdwg.mxu0
      %623 = vmatprep.subr.mxu0 0.0
      %624 = vmatpush1.msra.mxu0 %v495
      %625 = vmatprep.subr.mxu0 0.0
      %626 = vmatpush1.msra.mxu0 %v494
      %627 = vmatprep.subr.mxu0 0.0
      %628 = vmatpush1.msra.mxu0 %v493
      %629 = vmatprep.subr.mxu0 0.0
      %630 = vmatpush1.msra.mxu0 %v492
      %631 = vmatprep.subr.mxu0 0.0
      %632 = vmatpush1.msra.mxu0 %v491
      %633 = vmatprep.subr.mxu0 0.0
      %634 = vmatpush1.msra.mxu0 %v490
      %635 = vmatprep.subr.mxu0 0.0
      %636 = vmatpush1.msra.mxu0 %v489
      %637 = vmatprep.subr.mxu0 0.0
      %638 = vmatpush1.msra.mxu0 %v488
      %639 = vmatprep.subr.mxu0 0.0
      %640 = vmatpush1.msra.mxu0 %v487
      %641 = vmatprep.subr.mxu0 0.0
      %642 = vmatpush1.msra.mxu0 %v486
      %643 = vmatprep.subr.mxu0 0.0
      %644 = vmatpush1.msra.mxu0 %v485
      %645 = vmatprep.subr.mxu0 0.0
      %646 = vmatpush1.msra.mxu0 %v484
      %647 = vmatprep.subr.mxu0 0.0
      %648 = vmatpush1.msra.mxu0 %v483
      %649 = vmatprep.subr.mxu0 0.0
      %650 = vmatpush1.msra.mxu0 %v482
      %651 = vmatprep.subr.mxu0 0.0
      %652 = vmatpush1.msra.mxu0 %v481
      %653 = vmatprep.subr.mxu0 0.0
      %654 = vmatpush1.msra.mxu0 %v480
      %655 = vmatprep.subr.mxu0 0.0
      %656 = vmatpush2.msra.mxu0 0.0
      %657 = vmatprep.subr.mxu0 0.0
      %658 = vmatpush2.msra.mxu0 0.0
      %659 = vmatprep.subr.mxu0 0.0
      %660 = vmatpush2.msra.mxu0 0.0
      %661 = vmatprep.subr.mxu0 0.0
      %662 = vmatpush2.msra.mxu0 0.0
      %663 = vmatprep.subr.mxu0 0.0
      %664 = vmatpush2.msra.mxu0 0.0
      %665 = vmatprep.subr.mxu0 0.0
      %666 = vmatpush2.msra.mxu0 0.0
      %667 = vmatprep.subr.mxu0 0.0
      %668 = vmatpush2.msra.mxu0 0.0
      %669 = vmatprep.subr.mxu0 0.0
      %670 = vmatpush2.msra.mxu0 0.0
      %671 = vmatprep.subr.mxu0 0.0
      %672 = vmatpush2.msra.mxu0 0.0
      %673 = vmatprep.subr.mxu0 0.0
      %674 = vmatpush2.msra.mxu0 0.0
      %675 = vmatprep.subr.mxu0 0.0
      %676 = vmatpush2.msra.mxu0 0.0
      %677 = vmatprep.subr.mxu0 0.0
      %678 = vmatpush2.msra.mxu0 0.0
      %679 = vmatprep.subr.mxu0 0.0
      %680 = vmatpush2.msra.mxu0 0.0
      %681 = vmatprep.subr.mxu0 0.0
      %682 = vmatpush2.msra.mxu0 0.0
      %683 = vmatprep.subr.mxu0 0.0
      %684 = vmatpush2.msra.mxu0 0.0
      %685 = vmatprep.subr.mxu0 0.0
      %686 = vmatpush2.msra.mxu0 0.0
      %687 = vmatprep.mubr.f32.mxu0 0.0
      %688 = vmatmul.mubr.f32.gmra.mxu0 %v468
      %v689 = vpop.f32.mrf.mxu0
      %v690 = vadd.f32 %v605, %v689
      %v691 = vpop.f32.mrf.mxu0
      %692 = vmatprep.mubr.f32.mxu0 0.0
      %693 = vmatmul.mubr.f32.gmra.mxu0 %v469
      %v694 = vpop.f32.mrf.mxu0
      %v695 = vadd.f32 %v610, %v694
      %v696 = vpop.f32.mrf.mxu0
      %697 = vmatprep.mubr.f32.mxu0 0.0
      %698 = vmatmul.mubr.f32.gmra.mxu0 %v470
      %v699 = vpop.f32.mrf.mxu0
      %v700 = vadd.f32 %v615, %v699
      %v701 = vpop.f32.mrf.mxu0
      %702 = vmatprep.mubr.f32.mxu0 0.0
      %703 = vmatmul.mubr.f32.gmra.mxu0 %v471
      %v704 = vpop.f32.mrf.mxu0
      %v705 = vadd.f32 %v620, %v704
      %v706 = vpop.f32.mrf.mxu0
      %707 = vdwg.mxu0
      %vm708 = vcmask 1045504
      %v709 = vrot.slane %v468, 2
      %v710 = vrot.slane %v474, 2
      %v711 = vsel %vm708, %v709, %v710
      %v712 = vrot.slane %v469, 2
      %v713 = vrot.slane %v475, 2
      %v714 = vsel %vm708, %v712, %v713
      %v715 = vrot.slane %v470, 2
      %v716 = vrot.slane %v476, 2
      %v717 = vsel %vm708, %v715, %v716
      %v718 = vrot.slane %v471, 2
      %v719 = vrot.slane %v477, 2
      %v720 = vsel %vm708, %v718, %v719
      %s725 = scalar_lea.vmem %s3, 256
      %v726 = vld [vmem:[%s725] sm:$0xff]
      %v727 = vld [vmem:[%s725 + $0x8] sm:$0xff]
      %v728 = vld [vmem:[%s725 + $0x10] sm:$0xff]
      %v729 = vld [vmem:[%s725 + $0x18] sm:$0xff]
      %v730 = vld [vmem:[%s725 + $0x20] sm:$0xff]
      %v731 = vld [vmem:[%s725 + $0x28] sm:$0xff]
      %v732 = vld [vmem:[%s725 + $0x30] sm:$0xff]
      %v733 = vld [vmem:[%s725 + $0x38] sm:$0xff]
      %v734 = vld [vmem:[%s725 + $0x40] sm:$0xff]
      %v735 = vld [vmem:[%s725 + $0x48] sm:$0xff]
      %v736 = vld [vmem:[%s725 + $0x50] sm:$0xff]
      %v737 = vld [vmem:[%s725 + $0x58] sm:$0xff]
      %v738 = vld [vmem:[%s725 + $0x60] sm:$0xff]
      %v739 = vld [vmem:[%s725 + $0x68] sm:$0xff]
      %v740 = vld [vmem:[%s725 + $0x70] sm:$0xff]
      %v741 = vld [vmem:[%s725 + $0x78] sm:$0xff]
      %742 = vmatprep.subr.mxu0 0.0
      %743 = vmatpush1.msra.mxu0 %v741
      %744 = vmatprep.subr.mxu0 0.0
      %745 = vmatpush1.msra.mxu0 %v740
      %746 = vmatprep.subr.mxu0 0.0
      %747 = vmatpush1.msra.mxu0 %v739
      %748 = vmatprep.subr.mxu0 0.0
      %749 = vmatpush1.msra.mxu0 %v738
      %750 = vmatprep.subr.mxu0 0.0
      %751 = vmatpush1.msra.mxu0 %v737
      %752 = vmatprep.subr.mxu0 0.0
      %753 = vmatpush1.msra.mxu0 %v736
      %754 = vmatprep.subr.mxu0 0.0
      %755 = vmatpush1.msra.mxu0 %v735
      %756 = vmatprep.subr.mxu0 0.0
      %757 = vmatpush1.msra.mxu0 %v734
      %758 = vmatprep.subr.mxu0 0.0
      %759 = vmatpush1.msra.mxu0 %v733
      %760 = vmatprep.subr.mxu0 0.0
      %761 = vmatpush1.msra.mxu0 %v732
      %762 = vmatprep.subr.mxu0 0.0
      %763 = vmatpush1.msra.mxu0 %v731
      %764 = vmatprep.subr.mxu0 0.0
      %765 = vmatpush1.msra.mxu0 %v730
      %766 = vmatprep.subr.mxu0 0.0
      %767 = vmatpush1.msra.mxu0 %v729
      %768 = vmatprep.subr.mxu0 0.0
      %769 = vmatpush1.msra.mxu0 %v728
      %770 = vmatprep.subr.mxu0 0.0
      %771 = vmatpush1.msra.mxu0 %v727
      %772 = vmatprep.subr.mxu0 0.0
      %773 = vmatpush1.msra.mxu0 %v726
      %774 = vmatprep.subr.mxu0 0.0
      %775 = vmatpush2.msra.mxu0 0.0
      %776 = vmatprep.subr.mxu0 0.0
      %777 = vmatpush2.msra.mxu0 0.0
      %778 = vmatprep.subr.mxu0 0.0
      %779 = vmatpush2.msra.mxu0 0.0
      %780 = vmatprep.subr.mxu0 0.0
      %781 = vmatpush2.msra.mxu0 0.0
      %782 = vmatprep.subr.mxu0 0.0
      %783 = vmatpush2.msra.mxu0 0.0
      %784 = vmatprep.subr.mxu0 0.0
      %785 = vmatpush2.msra.mxu0 0.0
      %786 = vmatprep.subr.mxu0 0.0
      %787 = vmatpush2.msra.mxu0 0.0
      %788 = vmatprep.subr.mxu0 0.0
      %789 = vmatpush2.msra.mxu0 0.0
      %790 = vmatprep.subr.mxu0 0.0
      %791 = vmatpush2.msra.mxu0 0.0
      %792 = vmatprep.subr.mxu0 0.0
      %793 = vmatpush2.msra.mxu0 0.0
      %794 = vmatprep.subr.mxu0 0.0
      %795 = vmatpush2.msra.mxu0 0.0
      %796 = vmatprep.subr.mxu0 0.0
      %797 = vmatpush2.msra.mxu0 0.0
      %798 = vmatprep.subr.mxu0 0.0
      %799 = vmatpush2.msra.mxu0 0.0
      %800 = vmatprep.subr.mxu0 0.0
      %801 = vmatpush2.msra.mxu0 0.0
      %802 = vmatprep.subr.mxu0 0.0
      %803 = vmatpush2.msra.mxu0 0.0
      %804 = vmatprep.subr.mxu0 0.0
      %805 = vmatpush2.msra.mxu0 0.0
      %806 = vmatprep.mubr.f32.mxu0 0.0
      %807 = vmatmul.mubr.f32.gmra.mxu0 %v711
      %v808 = vpop.f32.mrf.mxu0
      %v809 = vadd.f32 0.0, %v808
      %v810 = vpop.f32.mrf.mxu0
      %811 = vmatprep.mubr.f32.mxu0 0.0
      %812 = vmatmul.mubr.f32.gmra.mxu0 %v714
      %v813 = vpop.f32.mrf.mxu0
      %v814 = vadd.f32 0.0, %v813
      %v815 = vpop.f32.mrf.mxu0
      %816 = vmatprep.mubr.f32.mxu0 0.0
      %817 = vmatmul.mubr.f32.gmra.mxu0 %v717
      %v818 = vpop.f32.mrf.mxu0
      %v819 = vadd.f32 0.0, %v818
      %v820 = vpop.f32.mrf.mxu0
      %821 = vmatprep.mubr.f32.mxu0 0.0
      %822 = vmatmul.mubr.f32.gmra.mxu0 %v720
      %v823 = vpop.f32.mrf.mxu0
      %v824 = vadd.f32 0.0, %v823
      %v825 = vpop.f32.mrf.mxu0
      %826 = vdwg.mxu0
      %v827 = vadd.f32 %v690, %v809
      %v828 = vadd.f32 %v695, %v814
      %v829 = vadd.f32 %v700, %v819
      %v830 = vadd.f32 %v705, %v824
      %s831 = scalar_lea.vmem %s3, 384
      %v832 = vld [vmem:[%s831] sm:$0xff]
      %v833 = vld [vmem:[%s831 + $0x8] sm:$0xff]
      %v834 = vld [vmem:[%s831 + $0x10] sm:$0xff]
      %v835 = vld [vmem:[%s831 + $0x18] sm:$0xff]
      %v836 = vld [vmem:[%s831 + $0x20] sm:$0xff]
      %v837 = vld [vmem:[%s831 + $0x28] sm:$0xff]
      %v838 = vld [vmem:[%s831 + $0x30] sm:$0xff]
      %v839 = vld [vmem:[%s831 + $0x38] sm:$0xff]
      %v840 = vld [vmem:[%s831 + $0x40] sm:$0xff]
      %v841 = vld [vmem:[%s831 + $0x48] sm:$0xff]
      %v842 = vld [vmem:[%s831 + $0x50] sm:$0xff]
      %v843 = vld [vmem:[%s831 + $0x58] sm:$0xff]
      %v844 = vld [vmem:[%s831 + $0x60] sm:$0xff]
      %v845 = vld [vmem:[%s831 + $0x68] sm:$0xff]
      %v846 = vld [vmem:[%s831 + $0x70] sm:$0xff]
      %v847 = vld [vmem:[%s831 + $0x78] sm:$0xff]
      %848 = vmatprep.subr.mxu0 0.0
      %849 = vmatpush1.msra.mxu0 %v847
      %850 = vmatprep.subr.mxu0 0.0
      %851 = vmatpush1.msra.mxu0 %v846
      %852 = vmatprep.subr.mxu0 0.0
      %853 = vmatpush1.msra.mxu0 %v845
      %854 = vmatprep.subr.mxu0 0.0
      %855 = vmatpush1.msra.mxu0 %v844
      %856 = vmatprep.subr.mxu0 0.0
      %857 = vmatpush1.msra.mxu0 %v843
      %858 = vmatprep.subr.mxu0 0.0
      %859 = vmatpush1.msra.mxu0 %v842
      %860 = vmatprep.subr.mxu0 0.0
      %861 = vmatpush1.msra.mxu0 %v841
      %862 = vmatprep.subr.mxu0 0.0
      %863 = vmatpush1.msra.mxu0 %v840
      %864 = vmatprep.subr.mxu0 0.0
      %865 = vmatpush1.msra.mxu0 %v839
      %866 = vmatprep.subr.mxu0 0.0
      %867 = vmatpush1.msra.mxu0 %v838
      %868 = vmatprep.subr.mxu0 0.0
      %869 = vmatpush1.msra.mxu0 %v837
      %870 = vmatprep.subr.mxu0 0.0
      %871 = vmatpush1.msra.mxu0 %v836
      %872 = vmatprep.subr.mxu0 0.0
      %873 = vmatpush1.msra.mxu0 %v835
      %874 = vmatprep.subr.mxu0 0.0
      %875 = vmatpush1.msra.mxu0 %v834
      %876 = vmatprep.subr.mxu0 0.0
      %877 = vmatpush1.msra.mxu0 %v833
      %878 = vmatprep.subr.mxu0 0.0
      %879 = vmatpush1.msra.mxu0 %v832
      %880 = vmatprep.subr.mxu0 0.0
      %881 = vmatpush2.msra.mxu0 0.0
      %882 = vmatprep.subr.mxu0 0.0
      %883 = vmatpush2.msra.mxu0 0.0
      %884 = vmatprep.subr.mxu0 0.0
      %885 = vmatpush2.msra.mxu0 0.0
      %886 = vmatprep.subr.mxu0 0.0
      %887 = vmatpush2.msra.mxu0 0.0
      %888 = vmatprep.subr.mxu0 0.0
      %889 = vmatpush2.msra.mxu0 0.0
      %890 = vmatprep.subr.mxu0 0.0
      %891 = vmatpush2.msra.mxu0 0.0
      %892 = vmatprep.subr.mxu0 0.0
      %893 = vmatpush2.msra.mxu0 0.0
      %894 = vmatprep.subr.mxu0 0.0
      %895 = vmatpush2.msra.mxu0 0.0
      %896 = vmatprep.subr.mxu0 0.0
      %897 = vmatpush2.msra.mxu0 0.0
      %898 = vmatprep.subr.mxu0 0.0
      %899 = vmatpush2.msra.mxu0 0.0
      %900 = vmatprep.subr.mxu0 0.0
      %901 = vmatpush2.msra.mxu0 0.0
      %902 = vmatprep.subr.mxu0 0.0
      %903 = vmatpush2.msra.mxu0 0.0
      %904 = vmatprep.subr.mxu0 0.0
      %905 = vmatpush2.msra.mxu0 0.0
      %906 = vmatprep.subr.mxu0 0.0
      %907 = vmatpush2.msra.mxu0 0.0
      %908 = vmatprep.subr.mxu0 0.0
      %909 = vmatpush2.msra.mxu0 0.0
      %910 = vmatprep.subr.mxu0 0.0
      %911 = vmatpush2.msra.mxu0 0.0
      %912 = vmatprep.mubr.f32.mxu0 0.0
      %913 = vmatmul.mubr.f32.gmra.mxu0 %v469
      %v914 = vpop.f32.mrf.mxu0
      %v915 = vadd.f32 0.0, %v914
      %v916 = vpop.f32.mrf.mxu0
      %917 = vmatprep.mubr.f32.mxu0 0.0
      %918 = vmatmul.mubr.f32.gmra.mxu0 %v470
      %v919 = vpop.f32.mrf.mxu0
      %v920 = vadd.f32 0.0, %v919
      %v921 = vpop.f32.mrf.mxu0
      %922 = vmatprep.mubr.f32.mxu0 0.0
      %923 = vmatmul.mubr.f32.gmra.mxu0 %v471
      %v924 = vpop.f32.mrf.mxu0
      %v925 = vadd.f32 0.0, %v924
      %v926 = vpop.f32.mrf.mxu0
      %927 = vmatprep.mubr.f32.mxu0 0.0
      %928 = vmatmul.mubr.f32.gmra.mxu0 %v472
      %v929 = vpop.f32.mrf.mxu0
      %v930 = vadd.f32 0.0, %v929
      %v931 = vpop.f32.mrf.mxu0
      %932 = vdwg.mxu0
      %v933 = vadd.f32 %v827, %v915
      %v934 = vadd.f32 %v828, %v920
      %v935 = vadd.f32 %v829, %v925
      %v936 = vadd.f32 %v830, %v930
      %v939 = vrot.slane %v472, 1
      %v940 = vrot.slane %v478, 1
      %v941 = vsel %vm504, %v939, %v940
      %s943 = scalar_lea.vmem %s3, 512
      %v944 = vld [vmem:[%s943] sm:$0xff]
      %v945 = vld [vmem:[%s943 + $0x8] sm:$0xff]
      %v946 = vld [vmem:[%s943 + $0x10] sm:$0xff]
      %v947 = vld [vmem:[%s943 + $0x18] sm:$0xff]
      %v948 = vld [vmem:[%s943 + $0x20] sm:$0xff]
      %v949 = vld [vmem:[%s943 + $0x28] sm:$0xff]
      %v950 = vld [vmem:[%s943 + $0x30] sm:$0xff]
      %v951 = vld [vmem:[%s943 + $0x38] sm:$0xff]
      %v952 = vld [vmem:[%s943 + $0x40] sm:$0xff]
      %v953 = vld [vmem:[%s943 + $0x48] sm:$0xff]
      %v954 = vld [vmem:[%s943 + $0x50] sm:$0xff]
      %v955 = vld [vmem:[%s943 + $0x58] sm:$0xff]
      %v956 = vld [vmem:[%s943 + $0x60] sm:$0xff]
      %v957 = vld [vmem:[%s943 + $0x68] sm:$0xff]
      %v958 = vld [vmem:[%s943 + $0x70] sm:$0xff]
      %v959 = vld [vmem:[%s943 + $0x78] sm:$0xff]
      %960 = vmatprep.subr.mxu0 0.0
      %961 = vmatpush1.msra.mxu0 %v959
      %962 = vmatprep.subr.mxu0 0.0
      %963 = vmatpush1.msra.mxu0 %v958
      %964 = vmatprep.subr.mxu0 0.0
      %965 = vmatpush1.msra.mxu0 %v957
      %966 = vmatprep.subr.mxu0 0.0
      %967 = vmatpush1.msra.mxu0 %v956
      %968 = vmatprep.subr.mxu0 0.0
      %969 = vmatpush1.msra.mxu0 %v955
      %970 = vmatprep.subr.mxu0 0.0
      %971 = vmatpush1.msra.mxu0 %v954
      %972 = vmatprep.subr.mxu0 0.0
      %973 = vmatpush1.msra.mxu0 %v953
      %974 = vmatprep.subr.mxu0 0.0
      %975 = vmatpush1.msra.mxu0 %v952
      %976 = vmatprep.subr.mxu0 0.0
      %977 = vmatpush1.msra.mxu0 %v951
      %978 = vmatprep.subr.mxu0 0.0
      %979 = vmatpush1.msra.mxu0 %v950
      %980 = vmatprep.subr.mxu0 0.0
      %981 = vmatpush1.msra.mxu0 %v949
      %982 = vmatprep.subr.mxu0 0.0
      %983 = vmatpush1.msra.mxu0 %v948
      %984 = vmatprep.subr.mxu0 0.0
      %985 = vmatpush1.msra.mxu0 %v947
      %986 = vmatprep.subr.mxu0 0.0
      %987 = vmatpush1.msra.mxu0 %v946
      %988 = vmatprep.subr.mxu0 0.0
      %989 = vmatpush1.msra.mxu0 %v945
      %990 = vmatprep.subr.mxu0 0.0
      %991 = vmatpush1.msra.mxu0 %v944
      %992 = vmatprep.subr.mxu0 0.0
      %993 = vmatpush2.msra.mxu0 0.0
      %994 = vmatprep.subr.mxu0 0.0
      %995 = vmatpush2.msra.mxu0 0.0
      %996 = vmatprep.subr.mxu0 0.0
      %997 = vmatpush2.msra.mxu0 0.0
      %998 = vmatprep.subr.mxu0 0.0
      %999 = vmatpush2.msra.mxu0 0.0
      %1000 = vmatprep.subr.mxu0 0.0
      %1001 = vmatpush2.msra.mxu0 0.0
      %1002 = vmatprep.subr.mxu0 0.0
      %1003 = vmatpush2.msra.mxu0 0.0
      %1004 = vmatprep.subr.mxu0 0.0
      %1005 = vmatpush2.msra.mxu0 0.0
      %1006 = vmatprep.subr.mxu0 0.0
      %1007 = vmatpush2.msra.mxu0 0.0
      %1008 = vmatprep.subr.mxu0 0.0
      %1009 = vmatpush2.msra.mxu0 0.0
      %1010 = vmatprep.subr.mxu0 0.0
      %1011 = vmatpush2.msra.mxu0 0.0
      %1012 = vmatprep.subr.mxu0 0.0
      %1013 = vmatpush2.msra.mxu0 0.0
      %1014 = vmatprep.subr.mxu0 0.0
      %1015 = vmatpush2.msra.mxu0 0.0
      %1016 = vmatprep.subr.mxu0 0.0
      %1017 = vmatpush2.msra.mxu0 0.0
      %1018 = vmatprep.subr.mxu0 0.0
      %1019 = vmatpush2.msra.mxu0 0.0
      %1020 = vmatprep.subr.mxu0 0.0
      %1021 = vmatpush2.msra.mxu0 0.0
      %1022 = vmatprep.subr.mxu0 0.0
      %1023 = vmatpush2.msra.mxu0 0.0
      %1024 = vmatprep.mubr.f32.mxu0 0.0
      %1025 = vmatmul.mubr.f32.gmra.mxu0 %v510
      %v1026 = vpop.f32.mrf.mxu0
      %v1027 = vadd.f32 0.0, %v1026
      %v1028 = vpop.f32.mrf.mxu0
      %1029 = vmatprep.mubr.f32.mxu0 0.0
      %1030 = vmatmul.mubr.f32.gmra.mxu0 %v513
      %v1031 = vpop.f32.mrf.mxu0
      %v1032 = vadd.f32 0.0, %v1031
      %v1033 = vpop.f32.mrf.mxu0
      %1034 = vmatprep.mubr.f32.mxu0 0.0
      %1035 = vmatmul.mubr.f32.gmra.mxu0 %v516
      %v1036 = vpop.f32.mrf.mxu0
      %v1037 = vadd.f32 0.0, %v1036
      %v1038 = vpop.f32.mrf.mxu0
      %1039 = vmatprep.mubr.f32.mxu0 0.0
      %1040 = vmatmul.mubr.f32.gmra.mxu0 %v941
      %v1041 = vpop.f32.mrf.mxu0
      %v1042 = vadd.f32 0.0, %v1041
      %v1043 = vpop.f32.mrf.mxu0
      %1044 = vdwg.mxu0
      %v1045 = vadd.f32 %v933, %v1027
      %v1046 = vadd.f32 %v934, %v1032
      %v1047 = vadd.f32 %v935, %v1037
      %v1048 = vadd.f32 %v936, %v1042
      %v1049 = vrot.slane %v472, 2
      %v1050 = vrot.slane %v478, 2
      %v1051 = vsel %vm708, %v1049, %v1050
      %s1053 = scalar_lea.vmem %s3, 640
      %v1054 = vld [vmem:[%s1053] sm:$0xff]
      %v1055 = vld [vmem:[%s1053 + $0x8] sm:$0xff]
      %v1056 = vld [vmem:[%s1053 + $0x10] sm:$0xff]
      %v1057 = vld [vmem:[%s1053 + $0x18] sm:$0xff]
      %v1058 = vld [vmem:[%s1053 + $0x20] sm:$0xff]
      %v1059 = vld [vmem:[%s1053 + $0x28] sm:$0xff]
      %v1060 = vld [vmem:[%s1053 + $0x30] sm:$0xff]
      %v1061 = vld [vmem:[%s1053 + $0x38] sm:$0xff]
      %v1062 = vld [vmem:[%s1053 + $0x40] sm:$0xff]
      %v1063 = vld [vmem:[%s1053 + $0x48] sm:$0xff]
      %v1064 = vld [vmem:[%s1053 + $0x50] sm:$0xff]
      %v1065 = vld [vmem:[%s1053 + $0x58] sm:$0xff]
      %v1066 = vld [vmem:[%s1053 + $0x60] sm:$0xff]
      %v1067 = vld [vmem:[%s1053 + $0x68] sm:$0xff]
      %v1068 = vld [vmem:[%s1053 + $0x70] sm:$0xff]
      %v1069 = vld [vmem:[%s1053 + $0x78] sm:$0xff]
      %1070 = vmatprep.subr.mxu0 0.0
      %1071 = vmatpush1.msra.mxu0 %v1069
      %1072 = vmatprep.subr.mxu0 0.0
      %1073 = vmatpush1.msra.mxu0 %v1068
      %1074 = vmatprep.subr.mxu0 0.0
      %1075 = vmatpush1.msra.mxu0 %v1067
      %1076 = vmatprep.subr.mxu0 0.0
      %1077 = vmatpush1.msra.mxu0 %v1066
      %1078 = vmatprep.subr.mxu0 0.0
      %1079 = vmatpush1.msra.mxu0 %v1065
      %1080 = vmatprep.subr.mxu0 0.0
      %1081 = vmatpush1.msra.mxu0 %v1064
      %1082 = vmatprep.subr.mxu0 0.0
      %1083 = vmatpush1.msra.mxu0 %v1063
      %1084 = vmatprep.subr.mxu0 0.0
      %1085 = vmatpush1.msra.mxu0 %v1062
      %1086 = vmatprep.subr.mxu0 0.0
      %1087 = vmatpush1.msra.mxu0 %v1061
      %1088 = vmatprep.subr.mxu0 0.0
      %1089 = vmatpush1.msra.mxu0 %v1060
      %1090 = vmatprep.subr.mxu0 0.0
      %1091 = vmatpush1.msra.mxu0 %v1059
      %1092 = vmatprep.subr.mxu0 0.0
      %1093 = vmatpush1.msra.mxu0 %v1058
      %1094 = vmatprep.subr.mxu0 0.0
      %1095 = vmatpush1.msra.mxu0 %v1057
      %1096 = vmatprep.subr.mxu0 0.0
      %1097 = vmatpush1.msra.mxu0 %v1056
      %1098 = vmatprep.subr.mxu0 0.0
      %1099 = vmatpush1.msra.mxu0 %v1055
      %1100 = vmatprep.subr.mxu0 0.0
      %1101 = vmatpush1.msra.mxu0 %v1054
      %1102 = vmatprep.subr.mxu0 0.0
      %1103 = vmatpush2.msra.mxu0 0.0
      %1104 = vmatprep.subr.mxu0 0.0
      %1105 = vmatpush2.msra.mxu0 0.0
      %1106 = vmatprep.subr.mxu0 0.0
      %1107 = vmatpush2.msra.mxu0 0.0
      %1108 = vmatprep.subr.mxu0 0.0
      %1109 = vmatpush2.msra.mxu0 0.0
      %1110 = vmatprep.subr.mxu0 0.0
      %1111 = vmatpush2.msra.mxu0 0.0
      %1112 = vmatprep.subr.mxu0 0.0
      %1113 = vmatpush2.msra.mxu0 0.0
      %1114 = vmatprep.subr.mxu0 0.0
      %1115 = vmatpush2.msra.mxu0 0.0
      %1116 = vmatprep.subr.mxu0 0.0
      %1117 = vmatpush2.msra.mxu0 0.0
      %1118 = vmatprep.subr.mxu0 0.0
      %1119 = vmatpush2.msra.mxu0 0.0
      %1120 = vmatprep.subr.mxu0 0.0
      %1121 = vmatpush2.msra.mxu0 0.0
      %1122 = vmatprep.subr.mxu0 0.0
      %1123 = vmatpush2.msra.mxu0 0.0
      %1124 = vmatprep.subr.mxu0 0.0
      %1125 = vmatpush2.msra.mxu0 0.0
      %1126 = vmatprep.subr.mxu0 0.0
      %1127 = vmatpush2.msra.mxu0 0.0
      %1128 = vmatprep.subr.mxu0 0.0
      %1129 = vmatpush2.msra.mxu0 0.0
      %1130 = vmatprep.subr.mxu0 0.0
      %1131 = vmatpush2.msra.mxu0 0.0
      %1132 = vmatprep.subr.mxu0 0.0
      %1133 = vmatpush2.msra.mxu0 0.0
      %1134 = vmatprep.mubr.f32.mxu0 0.0
      %1135 = vmatmul.mubr.f32.gmra.mxu0 %v714
      %v1136 = vpop.f32.mrf.mxu0
      %v1137 = vadd.f32 0.0, %v1136
      %v1138 = vpop.f32.mrf.mxu0
      %1139 = vmatprep.mubr.f32.mxu0 0.0
      %1140 = vmatmul.mubr.f32.gmra.mxu0 %v717
      %v1141 = vpop.f32.mrf.mxu0
      %v1142 = vadd.f32 0.0, %v1141
      %v1143 = vpop.f32.mrf.mxu0
      %1144 = vmatprep.mubr.f32.mxu0 0.0
      %1145 = vmatmul.mubr.f32.gmra.mxu0 %v720
      %v1146 = vpop.f32.mrf.mxu0
      %v1147 = vadd.f32 0.0, %v1146
      %v1148 = vpop.f32.mrf.mxu0
      %1149 = vmatprep.mubr.f32.mxu0 0.0
      %1150 = vmatmul.mubr.f32.gmra.mxu0 %v1051
      %v1151 = vpop.f32.mrf.mxu0
      %v1152 = vadd.f32 0.0, %v1151
      %v1153 = vpop.f32.mrf.mxu0
      %1154 = vdwg.mxu0
      %v1155 = vadd.f32 %v1045, %v1137
      %v1156 = vadd.f32 %v1046, %v1142
      %v1157 = vadd.f32 %v1047, %v1147
      %v1158 = vadd.f32 %v1048, %v1152
      %s1159 = scalar_lea.vmem %s3, 768
      %v1160 = vld [vmem:[%s1159] sm:$0xff]
      %v1161 = vld [vmem:[%s1159 + $0x8] sm:$0xff]
      %v1162 = vld [vmem:[%s1159 + $0x10] sm:$0xff]
      %v1163 = vld [vmem:[%s1159 + $0x18] sm:$0xff]
      %v1164 = vld [vmem:[%s1159 + $0x20] sm:$0xff]
      %v1165 = vld [vmem:[%s1159 + $0x28] sm:$0xff]
      %v1166 = vld [vmem:[%s1159 + $0x30] sm:$0xff]
      %v1167 = vld [vmem:[%s1159 + $0x38] sm:$0xff]
      %v1168 = vld [vmem:[%s1159 + $0x40] sm:$0xff]
      %v1169 = vld [vmem:[%s1159 + $0x48] sm:$0xff]
      %v1170 = vld [vmem:[%s1159 + $0x50] sm:$0xff]
      %v1171 = vld [vmem:[%s1159 + $0x58] sm:$0xff]
      %v1172 = vld [vmem:[%s1159 + $0x60] sm:$0xff]
      %v1173 = vld [vmem:[%s1159 + $0x68] sm:$0xff]
      %v1174 = vld [vmem:[%s1159 + $0x70] sm:$0xff]
      %v1175 = vld [vmem:[%s1159 + $0x78] sm:$0xff]
      %1176 = vmatprep.subr.mxu0 0.0
      %1177 = vmatpush1.msra.mxu0 %v1175
      %1178 = vmatprep.subr.mxu0 0.0
      %1179 = vmatpush1.msra.mxu0 %v1174
      %1180 = vmatprep.subr.mxu0 0.0
      %1181 = vmatpush1.msra.mxu0 %v1173
      %1182 = vmatprep.subr.mxu0 0.0
      %1183 = vmatpush1.msra.mxu0 %v1172
      %1184 = vmatprep.subr.mxu0 0.0
      %1185 = vmatpush1.msra.mxu0 %v1171
      %1186 = vmatprep.subr.mxu0 0.0
      %1187 = vmatpush1.msra.mxu0 %v1170
      %1188 = vmatprep.subr.mxu0 0.0
      %1189 = vmatpush1.msra.mxu0 %v1169
      %1190 = vmatprep.subr.mxu0 0.0
      %1191 = vmatpush1.msra.mxu0 %v1168
      %1192 = vmatprep.subr.mxu0 0.0
      %1193 = vmatpush1.msra.mxu0 %v1167
      %1194 = vmatprep.subr.mxu0 0.0
      %1195 = vmatpush1.msra.mxu0 %v1166
      %1196 = vmatprep.subr.mxu0 0.0
      %1197 = vmatpush1.msra.mxu0 %v1165
      %1198 = vmatprep.subr.mxu0 0.0
      %1199 = vmatpush1.msra.mxu0 %v1164
      %1200 = vmatprep.subr.mxu0 0.0
      %1201 = vmatpush1.msra.mxu0 %v1163
      %1202 = vmatprep.subr.mxu0 0.0
      %1203 = vmatpush1.msra.mxu0 %v1162
      %1204 = vmatprep.subr.mxu0 0.0
      %1205 = vmatpush1.msra.mxu0 %v1161
      %1206 = vmatprep.subr.mxu0 0.0
      %1207 = vmatpush1.msra.mxu0 %v1160
      %1208 = vmatprep.subr.mxu0 0.0
      %1209 = vmatpush2.msra.mxu0 0.0
      %1210 = vmatprep.subr.mxu0 0.0
      %1211 = vmatpush2.msra.mxu0 0.0
      %1212 = vmatprep.subr.mxu0 0.0
      %1213 = vmatpush2.msra.mxu0 0.0
      %1214 = vmatprep.subr.mxu0 0.0
      %1215 = vmatpush2.msra.mxu0 0.0
      %1216 = vmatprep.subr.mxu0 0.0
      %1217 = vmatpush2.msra.mxu0 0.0
      %1218 = vmatprep.subr.mxu0 0.0
      %1219 = vmatpush2.msra.mxu0 0.0
      %1220 = vmatprep.subr.mxu0 0.0
      %1221 = vmatpush2.msra.mxu0 0.0
      %1222 = vmatprep.subr.mxu0 0.0
      %1223 = vmatpush2.msra.mxu0 0.0
      %1224 = vmatprep.subr.mxu0 0.0
      %1225 = vmatpush2.msra.mxu0 0.0
      %1226 = vmatprep.subr.mxu0 0.0
      %1227 = vmatpush2.msra.mxu0 0.0
      %1228 = vmatprep.subr.mxu0 0.0
      %1229 = vmatpush2.msra.mxu0 0.0
      %1230 = vmatprep.subr.mxu0 0.0
      %1231 = vmatpush2.msra.mxu0 0.0
      %1232 = vmatprep.subr.mxu0 0.0
      %1233 = vmatpush2.msra.mxu0 0.0
      %1234 = vmatprep.subr.mxu0 0.0
      %1235 = vmatpush2.msra.mxu0 0.0
      %1236 = vmatprep.subr.mxu0 0.0
      %1237 = vmatpush2.msra.mxu0 0.0
      %1238 = vmatprep.subr.mxu0 0.0
      %1239 = vmatpush2.msra.mxu0 0.0
      %1240 = vmatprep.mubr.f32.mxu0 0.0
      %1241 = vmatmul.mubr.f32.gmra.mxu0 %v470
      %v1242 = vpop.f32.mrf.mxu0
      %v1243 = vadd.f32 0.0, %v1242
      %v1244 = vpop.f32.mrf.mxu0
      %1245 = vmatprep.mubr.f32.mxu0 0.0
      %1246 = vmatmul.mubr.f32.gmra.mxu0 %v471
      %v1247 = vpop.f32.mrf.mxu0
      %v1248 = vadd.f32 0.0, %v1247
      %v1249 = vpop.f32.mrf.mxu0
      %1250 = vmatprep.mubr.f32.mxu0 0.0
      %1251 = vmatmul.mubr.f32.gmra.mxu0 %v472
      %v1252 = vpop.f32.mrf.mxu0
      %v1253 = vadd.f32 0.0, %v1252
      %v1254 = vpop.f32.mrf.mxu0
      %1255 = vmatprep.mubr.f32.mxu0 0.0
      %1256 = vmatmul.mubr.f32.gmra.mxu0 %v473
      %v1257 = vpop.f32.mrf.mxu0
      %v1258 = vadd.f32 0.0, %v1257
      %v1259 = vpop.f32.mrf.mxu0
      %1260 = vdwg.mxu0
      %v1261 = vadd.f32 %v1155, %v1243
      %v1262 = vadd.f32 %v1156, %v1248
      %v1263 = vadd.f32 %v1157, %v1253
      %v1264 = vadd.f32 %v1158, %v1258
      %v1267 = vrot.slane %v473, 1
      %v1268 = vrot.slane %v479, 1
      %v1269 = vsel %vm504, %v1267, %v1268
      %s1271 = scalar_lea.vmem %s3, 896
      %v1272 = vld [vmem:[%s1271] sm:$0xff]
      %v1273 = vld [vmem:[%s1271 + $0x8] sm:$0xff]
      %v1274 = vld [vmem:[%s1271 + $0x10] sm:$0xff]
      %v1275 = vld [vmem:[%s1271 + $0x18] sm:$0xff]
      %v1276 = vld [vmem:[%s1271 + $0x20] sm:$0xff]
      %v1277 = vld [vmem:[%s1271 + $0x28] sm:$0xff]
      %v1278 = vld [vmem:[%s1271 + $0x30] sm:$0xff]
      %v1279 = vld [vmem:[%s1271 + $0x38] sm:$0xff]
      %v1280 = vld [vmem:[%s1271 + $0x40] sm:$0xff]
      %v1281 = vld [vmem:[%s1271 + $0x48] sm:$0xff]
      %v1282 = vld [vmem:[%s1271 + $0x50] sm:$0xff]
      %v1283 = vld [vmem:[%s1271 + $0x58] sm:$0xff]
      %v1284 = vld [vmem:[%s1271 + $0x60] sm:$0xff]
      %v1285 = vld [vmem:[%s1271 + $0x68] sm:$0xff]
      %v1286 = vld [vmem:[%s1271 + $0x70] sm:$0xff]
      %v1287 = vld [vmem:[%s1271 + $0x78] sm:$0xff]
      %1288 = vmatprep.subr.mxu0 0.0
      %1289 = vmatpush1.msra.mxu0 %v1287
      %1290 = vmatprep.subr.mxu0 0.0
      %1291 = vmatpush1.msra.mxu0 %v1286
      %1292 = vmatprep.subr.mxu0 0.0
      %1293 = vmatpush1.msra.mxu0 %v1285
      %1294 = vmatprep.subr.mxu0 0.0
      %1295 = vmatpush1.msra.mxu0 %v1284
      %1296 = vmatprep.subr.mxu0 0.0
      %1297 = vmatpush1.msra.mxu0 %v1283
      %1298 = vmatprep.subr.mxu0 0.0
      %1299 = vmatpush1.msra.mxu0 %v1282
      %1300 = vmatprep.subr.mxu0 0.0
      %1301 = vmatpush1.msra.mxu0 %v1281
      %1302 = vmatprep.subr.mxu0 0.0
      %1303 = vmatpush1.msra.mxu0 %v1280
      %1304 = vmatprep.subr.mxu0 0.0
      %1305 = vmatpush1.msra.mxu0 %v1279
      %1306 = vmatprep.subr.mxu0 0.0
      %1307 = vmatpush1.msra.mxu0 %v1278
      %1308 = vmatprep.subr.mxu0 0.0
      %1309 = vmatpush1.msra.mxu0 %v1277
      %1310 = vmatprep.subr.mxu0 0.0
      %1311 = vmatpush1.msra.mxu0 %v1276
      %1312 = vmatprep.subr.mxu0 0.0
      %1313 = vmatpush1.msra.mxu0 %v1275
      %1314 = vmatprep.subr.mxu0 0.0
      %1315 = vmatpush1.msra.mxu0 %v1274
      %1316 = vmatprep.subr.mxu0 0.0
      %1317 = vmatpush1.msra.mxu0 %v1273
      %1318 = vmatprep.subr.mxu0 0.0
      %1319 = vmatpush1.msra.mxu0 %v1272
      %1320 = vmatprep.subr.mxu0 0.0
      %1321 = vmatpush2.msra.mxu0 0.0
      %1322 = vmatprep.subr.mxu0 0.0
      %1323 = vmatpush2.msra.mxu0 0.0
      %1324 = vmatprep.subr.mxu0 0.0
      %1325 = vmatpush2.msra.mxu0 0.0
      %1326 = vmatprep.subr.mxu0 0.0
      %1327 = vmatpush2.msra.mxu0 0.0
      %1328 = vmatprep.subr.mxu0 0.0
      %1329 = vmatpush2.msra.mxu0 0.0
      %1330 = vmatprep.subr.mxu0 0.0
      %1331 = vmatpush2.msra.mxu0 0.0
      %1332 = vmatprep.subr.mxu0 0.0
      %1333 = vmatpush2.msra.mxu0 0.0
      %1334 = vmatprep.subr.mxu0 0.0
      %1335 = vmatpush2.msra.mxu0 0.0
      %1336 = vmatprep.subr.mxu0 0.0
      %1337 = vmatpush2.msra.mxu0 0.0
      %1338 = vmatprep.subr.mxu0 0.0
      %1339 = vmatpush2.msra.mxu0 0.0
      %1340 = vmatprep.subr.mxu0 0.0
      %1341 = vmatpush2.msra.mxu0 0.0
      %1342 = vmatprep.subr.mxu0 0.0
      %1343 = vmatpush2.msra.mxu0 0.0
      %1344 = vmatprep.subr.mxu0 0.0
      %1345 = vmatpush2.msra.mxu0 0.0
      %1346 = vmatprep.subr.mxu0 0.0
      %1347 = vmatpush2.msra.mxu0 0.0
      %1348 = vmatprep.subr.mxu0 0.0
      %1349 = vmatpush2.msra.mxu0 0.0
      %1350 = vmatprep.subr.mxu0 0.0
      %1351 = vmatpush2.msra.mxu0 0.0
      %1352 = vmatprep.mubr.f32.mxu0 0.0
      %1353 = vmatmul.mubr.f32.gmra.mxu0 %v513
      %v1354 = vpop.f32.mrf.mxu0
      %v1355 = vadd.f32 0.0, %v1354
      %v1356 = vpop.f32.mrf.mxu0
      %1357 = vmatprep.mubr.f32.mxu0 0.0
      %1358 = vmatmul.mubr.f32.gmra.mxu0 %v516
      %v1359 = vpop.f32.mrf.mxu0
      %v1360 = vadd.f32 0.0, %v1359
      %v1361 = vpop.f32.mrf.mxu0
      %1362 = vmatprep.mubr.f32.mxu0 0.0
      %1363 = vmatmul.mubr.f32.gmra.mxu0 %v941
      %v1364 = vpop.f32.mrf.mxu0
      %v1365 = vadd.f32 0.0, %v1364
      %v1366 = vpop.f32.mrf.mxu0
      %1367 = vmatprep.mubr.f32.mxu0 0.0
      %1368 = vmatmul.mubr.f32.gmra.mxu0 %v1269
      %v1369 = vpop.f32.mrf.mxu0
      %v1370 = vadd.f32 0.0, %v1369
      %v1371 = vpop.f32.mrf.mxu0
      %1372 = vdwg.mxu0
      %v1373 = vadd.f32 %v1261, %v1355
      %v1374 = vadd.f32 %v1262, %v1360
      %v1375 = vadd.f32 %v1263, %v1365
      %v1376 = vadd.f32 %v1264, %v1370
      %v1377 = vrot.slane %v473, 2
      %v1378 = vrot.slane %v479, 2
      %v1379 = vsel %vm708, %v1377, %v1378
      %s1381 = scalar_lea.vmem %s3, 1024
      %v1382 = vld [vmem:[%s1381] sm:$0xff]
      %v1383 = vld [vmem:[%s1381 + $0x8] sm:$0xff]
      %v1384 = vld [vmem:[%s1381 + $0x10] sm:$0xff]
      %v1385 = vld [vmem:[%s1381 + $0x18] sm:$0xff]
      %v1386 = vld [vmem:[%s1381 + $0x20] sm:$0xff]
      %v1387 = vld [vmem:[%s1381 + $0x28] sm:$0xff]
      %v1388 = vld [vmem:[%s1381 + $0x30] sm:$0xff]
      %v1389 = vld [vmem:[%s1381 + $0x38] sm:$0xff]
      %v1390 = vld [vmem:[%s1381 + $0x40] sm:$0xff]
      %v1391 = vld [vmem:[%s1381 + $0x48] sm:$0xff]
      %v1392 = vld [vmem:[%s1381 + $0x50] sm:$0xff]
      %v1393 = vld [vmem:[%s1381 + $0x58] sm:$0xff]
      %v1394 = vld [vmem:[%s1381 + $0x60] sm:$0xff]
      %v1395 = vld [vmem:[%s1381 + $0x68] sm:$0xff]
      %v1396 = vld [vmem:[%s1381 + $0x70] sm:$0xff]
      %v1397 = vld [vmem:[%s1381 + $0x78] sm:$0xff]
      %1398 = vmatprep.subr.mxu0 0.0
      %1399 = vmatpush1.msra.mxu0 %v1397
      %1400 = vmatprep.subr.mxu0 0.0
      %1401 = vmatpush1.msra.mxu0 %v1396
      %1402 = vmatprep.subr.mxu0 0.0
      %1403 = vmatpush1.msra.mxu0 %v1395
      %1404 = vmatprep.subr.mxu0 0.0
      %1405 = vmatpush1.msra.mxu0 %v1394
      %1406 = vmatprep.subr.mxu0 0.0
      %1407 = vmatpush1.msra.mxu0 %v1393
      %1408 = vmatprep.subr.mxu0 0.0
      %1409 = vmatpush1.msra.mxu0 %v1392
      %1410 = vmatprep.subr.mxu0 0.0
      %1411 = vmatpush1.msra.mxu0 %v1391
      %1412 = vmatprep.subr.mxu0 0.0
      %1413 = vmatpush1.msra.mxu0 %v1390
      %1414 = vmatprep.subr.mxu0 0.0
      %1415 = vmatpush1.msra.mxu0 %v1389
      %1416 = vmatprep.subr.mxu0 0.0
      %1417 = vmatpush1.msra.mxu0 %v1388
      %1418 = vmatprep.subr.mxu0 0.0
      %1419 = vmatpush1.msra.mxu0 %v1387
      %1420 = vmatprep.subr.mxu0 0.0
      %1421 = vmatpush1.msra.mxu0 %v1386
      %1422 = vmatprep.subr.mxu0 0.0
      %1423 = vmatpush1.msra.mxu0 %v1385
      %1424 = vmatprep.subr.mxu0 0.0
      %1425 = vmatpush1.msra.mxu0 %v1384
      %1426 = vmatprep.subr.mxu0 0.0
      %1427 = vmatpush1.msra.mxu0 %v1383
      %1428 = vmatprep.subr.mxu0 0.0
      %1429 = vmatpush1.msra.mxu0 %v1382
      %1430 = vmatprep.subr.mxu0 0.0
      %1431 = vmatpush2.msra.mxu0 0.0
      %1432 = vmatprep.subr.mxu0 0.0
      %1433 = vmatpush2.msra.mxu0 0.0
      %1434 = vmatprep.subr.mxu0 0.0
      %1435 = vmatpush2.msra.mxu0 0.0
      %1436 = vmatprep.subr.mxu0 0.0
      %1437 = vmatpush2.msra.mxu0 0.0
      %1438 = vmatprep.subr.mxu0 0.0
      %1439 = vmatpush2.msra.mxu0 0.0
      %1440 = vmatprep.subr.mxu0 0.0
      %1441 = vmatpush2.msra.mxu0 0.0
      %1442 = vmatprep.subr.mxu0 0.0
      %1443 = vmatpush2.msra.mxu0 0.0
      %1444 = vmatprep.subr.mxu0 0.0
      %1445 = vmatpush2.msra.mxu0 0.0
      %1446 = vmatprep.subr.mxu0 0.0
      %1447 = vmatpush2.msra.mxu0 0.0
      %1448 = vmatprep.subr.mxu0 0.0
      %1449 = vmatpush2.msra.mxu0 0.0
      %1450 = vmatprep.subr.mxu0 0.0
      %1451 = vmatpush2.msra.mxu0 0.0
      %1452 = vmatprep.subr.mxu0 0.0
      %1453 = vmatpush2.msra.mxu0 0.0
      %1454 = vmatprep.subr.mxu0 0.0
      %1455 = vmatpush2.msra.mxu0 0.0
      %1456 = vmatprep.subr.mxu0 0.0
      %1457 = vmatpush2.msra.mxu0 0.0
      %1458 = vmatprep.subr.mxu0 0.0
      %1459 = vmatpush2.msra.mxu0 0.0
      %1460 = vmatprep.subr.mxu0 0.0
      %1461 = vmatpush2.msra.mxu0 0.0
      %1462 = vmatprep.mubr.f32.mxu0 0.0
      %1463 = vmatmul.mubr.f32.gmra.mxu0 %v717
      %v1464 = vpop.f32.mrf.mxu0
      %v1465 = vadd.f32 0.0, %v1464
      %v1466 = vpop.f32.mrf.mxu0
      %1467 = vmatprep.mubr.f32.mxu0 0.0
      %1468 = vmatmul.mubr.f32.gmra.mxu0 %v720
      %v1469 = vpop.f32.mrf.mxu0
      %v1470 = vadd.f32 0.0, %v1469
      %v1471 = vpop.f32.mrf.mxu0
      %1472 = vmatprep.mubr.f32.mxu0 0.0
      %1473 = vmatmul.mubr.f32.gmra.mxu0 %v1051
      %v1474 = vpop.f32.mrf.mxu0
      %v1475 = vadd.f32 0.0, %v1474
      %v1476 = vpop.f32.mrf.mxu0
      %1477 = vmatprep.mubr.f32.mxu0 0.0
      %1478 = vmatmul.mubr.f32.gmra.mxu0 %v1379
      %v1479 = vpop.f32.mrf.mxu0
      %v1480 = vadd.f32 0.0, %v1479
      %v1481 = vpop.f32.mrf.mxu0
      %1482 = vdwg.mxu0
      %v1483 = vadd.f32 %v1373, %v1465
      %v1484 = vadd.f32 %v1374, %v1470
      %v1485 = vadd.f32 %v1375, %v1475
      %v1486 = vadd.f32 %v1376, %v1480
      %v1487 = vld [vmem:[%s4] sm:$0x1]
      %v1489 = vlaneseq
      %v1490 = vshrl.u32 %v1489, 7
      %v1491 = vsub.s32 0, %v1490
      %v1492 = vrot.slane %v1487, %v1491
      %v1494 = vadd.f32 %v1483, %v1492
      %v1495 = vadd.f32 %v1484, %v1492
      %v1496 = vadd.f32 %v1485, %v1492
      %v1497 = vadd.f32 %v1486, %v1492
      %vm1498 = vcmp.ge.f32.partialorder %v1494, 0.0
      %vm1499 = vcmp.ge.f32.partialorder %v1495, 0.0
      %vm1500 = vcmp.ge.f32.partialorder %v1496, 0.0
      %vm1501 = vcmp.ge.f32.partialorder %v1497, 0.0
      %v1502 = vmul.f32 %v1494, 0.1
      %v1503 = vmul.f32 %v1495, 0.1
      %v1504 = vmul.f32 %v1496, 0.1
      %v1505 = vmul.f32 %v1497, 0.1
      %v1506 = vsel %vm1498, %v1494, %v1502
      %v1507 = vsel %vm1499, %v1495, %v1503
      %v1508 = vsel %vm1500, %v1496, %v1504
      %v1509 = vsel %vm1501, %v1497, %v1505
      %v1510 = vadd.f32 %v1506, %v251
      %v1511 = vadd.f32 %v1507, %v252
      %v1512 = vadd.f32 %v1508, %v253
      %v1513 = vadd.f32 %v1509, %v254
      %1514 = vst [vmem:[%s246] sm:$0xff] %v1510
      %1515 = vst [vmem:[%s246 + $0x8] sm:$0xff] %v1511
      %1516 = vst [vmem:[%s246 + $0x10] sm:$0xff] %v1512
      %1517 = vst [vmem:[%s246 + $0x18] sm:$0xff] %v1513
      %s1518 = smul.u32 4, %s21
      %p1519 = scmp.lt.s32.totalorder %s20, 1
      %s1520 = scalar_select %p1519, %s20, 1
      %p1521 = scmp.lt.s32.totalorder %s1518, 7
      %s1522 = scalar_select %p1521, %s1518, 7
      %s1523 = smul.addr %s1520, 8
      %s1524 = sadd.s32 %s1522, %s1523
      %s1525 = smul.addr %s1524, 8
      %s1526 = scalar_lea.vmem %s5, %s1525
      // Predicated region
      $region41: #{res_block_forward.4} parent=39 // pred_check
        %p1527 = pneg %p158
      $region42: #{res_block_forward.4} parent=39 // pred_check_branch
        %1529 = sbr.rel (%p1527) target = $region44
      $region43: #{res_block_forward.4} parent=39 // pred_region
        %s1530 = smul.u32 4, %s21
      $region44: #{res_block_forward.4} parent=39 // pred_fallthru
        _
    $region40: #{res_block_forward.4} parent=5 // pred_fallthru
      _
    %p1531 = scmp.le.s32.totalorder 2, %s11
    // Predicated region
    $region45: #{res_block_forward.4} parent=5 // pred_check
      %p1532 = pneg %p1531
    $region46: #{res_block_forward.4} parent=5 // pred_check_branch
      %1534 = sbr.rel (%p1532) target = $region48
    $region47: #{res_block_forward.4} parent=5 // pred_region
      %s1535 = ssub.s32 %s11, 2
      // Predicated region
      $region49: #{res_block_forward.4} parent=47 // pred_check
        %p1536 = pneg %p164
      $region50: #{res_block_forward.4} parent=47 // pred_check_branch
        %1538 = sbr.rel (%p1536) target = $region52
      $region51: #{res_block_forward.4} parent=47 // pred_region
        %s1539 = smul.u32 4, %s23
        %p1540 = scmp.lt.s32.totalorder %s22, 1
        %s1541 = scalar_select %p1540, %s22, 1
        %p1542 = scmp.lt.s32.totalorder %s1539, 7
        %s1543 = scalar_select %p1542, %s1539, 7
        %s1544 = smul.addr %s1541, 8
        %s1545 = sadd.s32 %s1543, %s1544
        %s1546 = smul.addr %s1545, 8
        %s1547 = scalar_lea.vmem %s5, %s1546
      $region52: #{res_block_forward.4} parent=47 // pred_fallthru
        _
    $region48: #{res_block_forward.4} parent=5 // pred_fallthru
      _
  $region6: #{res_block_forward.4} parent=0 // loop_footer
    %s15 = sadd.s32 1, %s11
  $region7: #{res_block_forward.4} parent=0 // loop_footer_branch
    %10 = sbr.rel target = $region3
  $region8: #{res_block_forward.4} parent=0 // loop_exit
    _

</llo_original>
